<compile_context>
chip_gen: v6e
topology: v6e:2x2x1
jax: 0.10.0
libtpu: 0.0.40
codegen_flags: <defaults>
</compile_context>

<pallas_src>
import jax
import jax.numpy as jnp
from jax.experimental import pallas as pl
from jax.experimental.pallas import tpu as pltpu

BN_EPS = 1e-5
LRELU_SLOPE = 0.2
KSIZE = 5
STRIDE = 2
PAD = 2

VMEM_LIMIT = 32 * 1024 * 1024  # safe on v5e/v6e (128 MiB) and v7x (64 MiB)


def _make_conv_stats_kernel(Ho, Wo, Cin, Cp):
    """Pass 1: conv as 25 accumulated tap matmuls + per-image BN partials."""
    HoWo = Ho * Wo

    def kernel(xph_ref, w_ref, y_ref, stat_ref):
        # xph_ref:  (4, Hc, Wc, Cin)   2x2 polyphase of the padded input, one image
        # w_ref:    (25, Cin, Cp)      per-tap weights, Cout zero-padded to Cp
        # y_ref:    (1, HoWo, Cp)      pre-BN conv output (lane-dense)
        # stat_ref: (1, 2, Cp)         [sum, sum-of-squares] over this image
        acc = jnp.zeros((HoWo, Cp), jnp.float32)
        # Statically unrolled taps: every window is a unit-stride, statically
        # offset slice of a phase (no strided reads, no im2col matrix).
        for t in range(KSIZE * KSIZE):
            kh, kw = t // KSIZE, t % KSIZE
            p = (kh % 2) * 2 + (kw % 2)        # which stride-2 phase
            a, b = kh // 2, kw // 2            # static window offset inside phase
            lhs = xph_ref[p, a:a + Ho, b:b + Wo, :].reshape(HoWo, Cin)
            acc = acc + jnp.dot(lhs, w_ref[t], preferred_element_type=jnp.float32)
        y_ref[0] = acc
        # Single-pass partial statistics (sum, sum of squares) per channel.
        stat_ref[0, 0:1, :] = jnp.sum(acc, axis=0, keepdims=True)
        stat_ref[0, 1:2, :] = jnp.sum(acc * acc, axis=0, keepdims=True)

    return kernel


def _bn_lrelu_kernel(y_ref, st_ref, o_ref):
    """Pass 2: z = y*scale + shift (single FMA), then LeakyReLU(0.2)."""
    # y_ref: (TM, Cp); st_ref: (2, Cp) = [scale, shift]; o_ref: (TM, Cp)
    z = y_ref[...] * st_ref[0:1, :] + st_ref[1:2, :]
    o_ref[...] = jnp.where(z >= 0, z, LRELU_SLOPE * z)


@jax.jit
def conv2d_block(x, weight, bias, gamma, beta):
    """x: (N, Cin, H, W) f32, weight: (Cout, Cin, 5, 5) -> (N, Cout, Ho, Wo)."""
    del bias  # exactly cancelled by training-mode BatchNorm mean subtraction
    N, Cin, H, W = x.shape
    Cout = weight.shape[0]
    Ho = (H + 2 * PAD - KSIZE) // STRIDE + 1
    Wo = (W + 2 * PAD - KSIZE) // STRIDE + 1
    HoWo = Ho * Wo
    M = N * HoWo
    Cp = 128 * pl.cdiv(Cout, 128)          # lane-dense channel dim (>=128)

    # ---- layout prep (no data duplication): NCHW -> padded NHWC -> polyphase
    x_nhwc = jnp.transpose(x, (0, 2, 3, 1))
    Hp = H + 2 * PAD
    Hp += Hp % 2
    Wp = W + 2 * PAD
    Wp += Wp % 2
    xp = jnp.pad(x_nhwc, ((0, 0), (PAD, Hp - H - PAD), (PAD, Wp - W - PAD), (0, 0)))
    Hc, Wc = Hp // 2, Wp // 2
    # phase[n, ph, pw, i, j, c] = xp[n, 2i+ph, 2j+pw, c]
    xph = xp.reshape(N, Hc, 2, Wc, 2, Cin).transpose(0, 2, 4, 1, 3, 5)
    xph = xph.reshape(N * 4, Hc, Wc, Cin)

    # ---- weights: (Cout, Cin, 5, 5) -> (25, Cin, Cp), tap index t = kh*5 + kw
    w_taps = jnp.transpose(weight, (2, 3, 1, 0)).reshape(KSIZE * KSIZE, Cin, Cout)
    w_taps = jnp.pad(w_taps, ((0, 0), (0, 0), (0, Cp - Cout)))

    # ---- pass 1: conv + per-image BN partials (batch-parallel grid)
    y, stats = pl.pallas_call(
        _make_conv_stats_kernel(Ho, Wo, Cin, Cp),
        out_shape=(jax.ShapeDtypeStruct((N, HoWo, Cp), jnp.float32),
                   jax.ShapeDtypeStruct((N, 2, Cp), jnp.float32)),
        grid_spec=pltpu.PrefetchScalarGridSpec(
            num_scalar_prefetch=0,
            grid=(N,),
            in_specs=[
                pl.BlockSpec((4, Hc, Wc, Cin), lambda n: (n, 0, 0, 0)),
                pl.BlockSpec((KSIZE * KSIZE, Cin, Cp), lambda n: (0, 0, 0)),
            ],
            out_specs=[
                pl.BlockSpec((1, HoWo, Cp), lambda n: (n, 0, 0)),
                pl.BlockSpec((1, 2, Cp), lambda n: (n, 0, 0)),
            ]),
        compiler_params=pltpu.CompilerParams(
            dimension_semantics=("parallel",),
            vmem_limit_bytes=VMEM_LIMIT),
    )(xph, w_taps)

    # ---- tiny per-channel math: fold BN into one (scale, shift) pair
    stats = jnp.sum(stats, axis=0)                    # (2, Cp) over the batch
    mean = stats[0] / M
    var = stats[1] / M - mean * mean                  # biased var (PyTorch train BN)
    inv_std = jax.lax.rsqrt(var + BN_EPS)
    scale = jnp.pad(gamma, (0, Cp - Cout)) * inv_std  # padded channels: scale=0
    shift = jnp.pad(beta, (0, Cp - Cout)) - mean * scale
    st = jnp.stack([scale, shift], axis=0)            # (2, Cp): one fused operand

    # ---- pass 2: M-tiled normalize + LeakyReLU with lane-dense stores
    TM = M
    for cand in (1024, 512, 256, 128, 64, 32, 16, 8):
        if M % cand == 0:
            TM = cand
            break
    z = pl.pallas_call(
        _bn_lrelu_kernel,
        out_shape=jax.ShapeDtypeStruct((M, Cp), jnp.float32),
        grid_spec=pltpu.PrefetchScalarGridSpec(
            num_scalar_prefetch=0,
            grid=(M // TM,),
            in_specs=[
                pl.BlockSpec((TM, Cp), lambda i: (i, 0)),
                pl.BlockSpec((2, Cp), lambda i: (0, 0)),
            ],
            out_specs=pl.BlockSpec((TM, Cp), lambda i: (i, 0))),
        compiler_params=pltpu.CompilerParams(
            dimension_semantics=("parallel",),
            vmem_limit_bytes=VMEM_LIMIT),
    )(y.reshape(M, Cp), st)

    # (M, Cp) -> (N, Cout, Ho, Wo).  NCHW kept to match the PyTorch module API.
    out = z[:, :Cout].reshape(N, Ho, Wo, Cout).transpose(0, 3, 1, 2)
    return out


def _reference(x, weight, bias, gamma, beta):
    # Pure-JAX reference: conv -> training-mode batchnorm -> leaky relu (NCHW).
    y = jax.lax.conv_general_dilated(
        x, weight, window_strides=(STRIDE, STRIDE),
        padding=((PAD, PAD), (PAD, PAD)),
        dimension_numbers=("NCHW", "OIHW", "NCHW"))
    y = y + bias[None, :, None, None]
    mean = jnp.mean(y, axis=(0, 2, 3), keepdims=True)
    var = jnp.mean((y - mean) ** 2, axis=(0, 2, 3), keepdims=True)
    yh = (y - mean) * jax.lax.rsqrt(var + BN_EPS)
    z = yh * gamma[None, :, None, None] + beta[None, :, None, None]
    return jnp.where(z >= 0, z, LRELU_SLOPE * z)


if __name__ == "__main__":
    N, Cin, H, W = 2, 4, 16, 16
    Cout = 8

    key = jax.random.PRNGKey(0)
    kx, kw, kb, kg, kbe = jax.random.split(key, 5)
    x = jax.random.normal(kx, (N, Cin, H, W), dtype=jnp.float32)
    weight = jax.random.normal(kw, (Cout, Cin, KSIZE, KSIZE), dtype=jnp.float32) * 0.1
    bias = jax.random.normal(kb, (Cout,), dtype=jnp.float32) * 0.1
    gamma = 1.0 + 0.1 * jax.random.normal(kg, (Cout,), dtype=jnp.float32)
    beta = 0.1 * jax.random.normal(kbe, (Cout,), dtype=jnp.float32)

    out = conv2d_block(x, weight, bias, gamma, beta)
    out = jax.block_until_ready(out)

    ref = _reference(x, weight, bias, gamma, beta)
    Ho = (H + 2 * PAD - KSIZE) // STRIDE + 1
    Wo = (W + 2 * PAD - KSIZE) // STRIDE + 1
    assert out.shape == (N, Cout, Ho, Wo)
    assert jnp.allclose(out, ref, atol=2e-4, rtol=2e-4), "mismatch vs pure-JAX reference"

    print("KERNEL_OK")
</pallas_src>

<mosaic_0001>
module attributes {stable_mosaic.version = 11 : i64} {
  func.func @kernel(%arg0: i32, %arg1: memref<4x10x10x4xf32, #tpu.memory_space<vmem>>, %arg2: memref<25x4x128xf32, #tpu.memory_space<vmem>>, %arg3: memref<1x64x128xf32, #tpu.memory_space<vmem>>, %arg4: memref<1x2x128xf32, #tpu.memory_space<vmem>>) attributes {dimension_semantics = [#tpu.dimension_semantics<parallel>], iteration_bounds = array<i64: 2>, scalar_prefetch = 0 : i64, scratch_operands = 0 : i64, tpu.core_type = #tpu.core_type<tc>, window_params = [{transform_indices = @transform_0, window_bounds = array<i64: 4, 10, 10, 4>}, {pipeline_mode = #tpu.pipeline_mode<synchronous>, transform_indices = @transform_1, window_bounds = array<i64: 25, 4, 128>}, {transform_indices = @transform_2, window_bounds = array<i64: 1, 64, 128>}, {transform_indices = @transform_3, window_bounds = array<i64: 1, 2, 128>}]} {
    %cst = arith.constant 0.000000e+00 : f32
    %0 = vector.broadcast %cst : f32 to vector<64x128xf32>
    %c0 = arith.constant 0 : index
    %c0_0 = arith.constant 0 : index
    %c0_1 = arith.constant 0 : index
    %c0_2 = arith.constant 0 : index
    %1 = vector.load %arg1[%c0, %c0_0, %c0_1, %c0_2] : memref<4x10x10x4xf32, #tpu.memory_space<vmem>>, vector<1x8x8x4xf32>
    %2 = vector.shape_cast %1 : vector<1x8x8x4xf32> to vector<8x8x4xf32>
    %3 = vector.shape_cast %2 : vector<8x8x4xf32> to vector<64x4xf32>
    %c0_3 = arith.constant 0 : index
    %c0_4 = arith.constant 0 : index
    %c0_5 = arith.constant 0 : index
    %4 = vector.load %arg2[%c0_3, %c0_4, %c0_5] : memref<25x4x128xf32, #tpu.memory_space<vmem>>, vector<1x4x128xf32>
    %5 = vector.shape_cast %4 : vector<1x4x128xf32> to vector<4x128xf32>
    %cst_6 = arith.constant dense<0.000000e+00> : vector<64x128xf32>
    %6 = tpu.matmul %3, %5, %cst_6 {dimension_numbers = #tpu.dot_dimension_numbers<[1], [0], [0], [1], [0, 0, 1, 1], [], []>} : vector<64x4xf32>, vector<4x128xf32>, vector<64x128xf32> -> vector<64x128xf32>
    %7 = arith.addf %0, %6 : vector<64x128xf32>
    %c1 = arith.constant 1 : index
    %c0_7 = arith.constant 0 : index
    %c0_8 = arith.constant 0 : index
    %c0_9 = arith.constant 0 : index
    %8 = vector.load %arg1[%c1, %c0_7, %c0_8, %c0_9] : memref<4x10x10x4xf32, #tpu.memory_space<vmem>>, vector<1x8x8x4xf32>
    %9 = vector.shape_cast %8 : vector<1x8x8x4xf32> to vector<8x8x4xf32>
    %10 = vector.shape_cast %9 : vector<8x8x4xf32> to vector<64x4xf32>
    %c1_10 = arith.constant 1 : index
    %c0_11 = arith.constant 0 : index
    %c0_12 = arith.constant 0 : index
    %11 = vector.load %arg2[%c1_10, %c0_11, %c0_12] : memref<25x4x128xf32, #tpu.memory_space<vmem>>, vector<1x4x128xf32>
    %12 = vector.shape_cast %11 : vector<1x4x128xf32> to vector<4x128xf32>
    %cst_13 = arith.constant dense<0.000000e+00> : vector<64x128xf32>
    %13 = tpu.matmul %10, %12, %cst_13 {dimension_numbers = #tpu.dot_dimension_numbers<[1], [0], [0], [1], [0, 0, 1, 1], [], []>} : vector<64x4xf32>, vector<4x128xf32>, vector<64x128xf32> -> vector<64x128xf32>
    %14 = arith.addf %7, %13 : vector<64x128xf32>
    %c0_14 = arith.constant 0 : index
    %c0_15 = arith.constant 0 : index
    %c1_16 = arith.constant 1 : index
    %c0_17 = arith.constant 0 : index
    %15 = vector.load %arg1[%c0_14, %c0_15, %c1_16, %c0_17] : memref<4x10x10x4xf32, #tpu.memory_space<vmem>>, vector<1x8x8x4xf32>
    %16 = vector.shape_cast %15 : vector<1x8x8x4xf32> to vector<8x8x4xf32>
    %17 = vector.shape_cast %16 : vector<8x8x4xf32> to vector<64x4xf32>
    %c2 = arith.constant 2 : index
    %c0_18 = arith.constant 0 : index
    %c0_19 = arith.constant 0 : index
    %18 = vector.load %arg2[%c2, %c0_18, %c0_19] : memref<25x4x128xf32, #tpu.memory_space<vmem>>, vector<1x4x128xf32>
    %19 = vector.shape_cast %18 : vector<1x4x128xf32> to vector<4x128xf32>
    %cst_20 = arith.constant dense<0.000000e+00> : vector<64x128xf32>
    %20 = tpu.matmul %17, %19, %cst_20 {dimension_numbers = #tpu.dot_dimension_numbers<[1], [0], [0], [1], [0, 0, 1, 1], [], []>} : vector<64x4xf32>, vector<4x128xf32>, vector<64x128xf32> -> vector<64x128xf32>
    %21 = arith.addf %14, %20 : vector<64x128xf32>
    %c1_21 = arith.constant 1 : index
    %c0_22 = arith.constant 0 : index
    %c1_23 = arith.constant 1 : index
    %c0_24 = arith.constant 0 : index
    %22 = vector.load %arg1[%c1_21, %c0_22, %c1_23, %c0_24] : memref<4x10x10x4xf32, #tpu.memory_space<vmem>>, vector<1x8x8x4xf32>
    %23 = vector.shape_cast %22 : vector<1x8x8x4xf32> to vector<8x8x4xf32>
    %24 = vector.shape_cast %23 : vector<8x8x4xf32> to vector<64x4xf32>
    %c3 = arith.constant 3 : index
    %c0_25 = arith.constant 0 : index
    %c0_26 = arith.constant 0 : index
    %25 = vector.load %arg2[%c3, %c0_25, %c0_26] : memref<25x4x128xf32, #tpu.memory_space<vmem>>, vector<1x4x128xf32>
    %26 = vector.shape_cast %25 : vector<1x4x128xf32> to vector<4x128xf32>
    %cst_27 = arith.constant dense<0.000000e+00> : vector<64x128xf32>
    %27 = tpu.matmul %24, %26, %cst_27 {dimension_numbers = #tpu.dot_dimension_numbers<[1], [0], [0], [1], [0, 0, 1, 1], [], []>} : vector<64x4xf32>, vector<4x128xf32>, vector<64x128xf32> -> vector<64x128xf32>
    %28 = arith.addf %21, %27 : vector<64x128xf32>
    %c0_28 = arith.constant 0 : index
    %c0_29 = arith.constant 0 : index
    %c2_30 = arith.constant 2 : index
    %c0_31 = arith.constant 0 : index
    %29 = vector.load %arg1[%c0_28, %c0_29, %c2_30, %c0_31] : memref<4x10x10x4xf32, #tpu.memory_space<vmem>>, vector<1x8x8x4xf32>
    %30 = vector.shape_cast %29 : vector<1x8x8x4xf32> to vector<8x8x4xf32>
    %31 = vector.shape_cast %30 : vector<8x8x4xf32> to vector<64x4xf32>
    %c4 = arith.constant 4 : index
    %c0_32 = arith.constant 0 : index
    %c0_33 = arith.constant 0 : index
    %32 = vector.load %arg2[%c4, %c0_32, %c0_33] : memref<25x4x128xf32, #tpu.memory_space<vmem>>, vector<1x4x128xf32>
    %33 = vector.shape_cast %32 : vector<1x4x128xf32> to vector<4x128xf32>
    %cst_34 = arith.constant dense<0.000000e+00> : vector<64x128xf32>
    %34 = tpu.matmul %31, %33, %cst_34 {dimension_numbers = #tpu.dot_dimension_numbers<[1], [0], [0], [1], [0, 0, 1, 1], [], []>} : vector<64x4xf32>, vector<4x128xf32>, vector<64x128xf32> -> vector<64x128xf32>
    %35 = arith.addf %28, %34 : vector<64x128xf32>
    %c2_35 = arith.constant 2 : index
    %c0_36 = arith.constant 0 : index
    %c0_37 = arith.constant 0 : index
    %c0_38 = arith.constant 0 : index
    %36 = vector.load %arg1[%c2_35, %c0_36, %c0_37, %c0_38] : memref<4x10x10x4xf32, #tpu.memory_space<vmem>>, vector<1x8x8x4xf32>
    %37 = vector.shape_cast %36 : vector<1x8x8x4xf32> to vector<8x8x4xf32>
    %38 = vector.shape_cast %37 : vector<8x8x4xf32> to vector<64x4xf32>
    %c5 = arith.constant 5 : index
    %c0_39 = arith.constant 0 : index
    %c0_40 = arith.constant 0 : index
    %39 = vector.load %arg2[%c5, %c0_39, %c0_40] : memref<25x4x128xf32, #tpu.memory_space<vmem>>, vector<1x4x128xf32>
    %40 = vector.shape_cast %39 : vector<1x4x128xf32> to vector<4x128xf32>
    %cst_41 = arith.constant dense<0.000000e+00> : vector<64x128xf32>
    %41 = tpu.matmul %38, %40, %cst_41 {dimension_numbers = #tpu.dot_dimension_numbers<[1], [0], [0], [1], [0, 0, 1, 1], [], []>} : vector<64x4xf32>, vector<4x128xf32>, vector<64x128xf32> -> vector<64x128xf32>
    %42 = arith.addf %35, %41 : vector<64x128xf32>
    %c3_42 = arith.constant 3 : index
    %c0_43 = arith.constant 0 : index
    %c0_44 = arith.constant 0 : index
    %c0_45 = arith.constant 0 : index
    %43 = vector.load %arg1[%c3_42, %c0_43, %c0_44, %c0_45] : memref<4x10x10x4xf32, #tpu.memory_space<vmem>>, vector<1x8x8x4xf32>
    %44 = vector.shape_cast %43 : vector<1x8x8x4xf32> to vector<8x8x4xf32>
    %45 = vector.shape_cast %44 : vector<8x8x4xf32> to vector<64x4xf32>
    %c6 = arith.constant 6 : index
    %c0_46 = arith.constant 0 : index
    %c0_47 = arith.constant 0 : index
    %46 = vector.load %arg2[%c6, %c0_46, %c0_47] : memref<25x4x128xf32, #tpu.memory_space<vmem>>, vector<1x4x128xf32>
    %47 = vector.shape_cast %46 : vector<1x4x128xf32> to vector<4x128xf32>
    %cst_48 = arith.constant dense<0.000000e+00> : vector<64x128xf32>
    %48 = tpu.matmul %45, %47, %cst_48 {dimension_numbers = #tpu.dot_dimension_numbers<[1], [0], [0], [1], [0, 0, 1, 1], [], []>} : vector<64x4xf32>, vector<4x128xf32>, vector<64x128xf32> -> vector<64x128xf32>
    %49 = arith.addf %42, %48 : vector<64x128xf32>
    %c2_49 = arith.constant 2 : index
    %c0_50 = arith.constant 0 : index
    %c1_51 = arith.constant 1 : index
    %c0_52 = arith.constant 0 : index
    %50 = vector.load %arg1[%c2_49, %c0_50, %c1_51, %c0_52] : memref<4x10x10x4xf32, #tpu.memory_space<vmem>>, vector<1x8x8x4xf32>
    %51 = vector.shape_cast %50 : vector<1x8x8x4xf32> to vector<8x8x4xf32>
    %52 = vector.shape_cast %51 : vector<8x8x4xf32> to vector<64x4xf32>
    %c7 = arith.constant 7 : index
    %c0_53 = arith.constant 0 : index
    %c0_54 = arith.constant 0 : index
    %53 = vector.load %arg2[%c7, %c0_53, %c0_54] : memref<25x4x128xf32, #tpu.memory_space<vmem>>, vector<1x4x128xf32>
    %54 = vector.shape_cast %53 : vector<1x4x128xf32> to vector<4x128xf32>
    %cst_55 = arith.constant dense<0.000000e+00> : vector<64x128xf32>
    %55 = tpu.matmul %52, %54, %cst_55 {dimension_numbers = #tpu.dot_dimension_numbers<[1], [0], [0], [1], [0, 0, 1, 1], [], []>} : vector<64x4xf32>, vector<4x128xf32>, vector<64x128xf32> -> vector<64x128xf32>
    %56 = arith.addf %49, %55 : vector<64x128xf32>
    %c3_56 = arith.constant 3 : index
    %c0_57 = arith.constant 0 : index
    %c1_58 = arith.constant 1 : index
    %c0_59 = arith.constant 0 : index
    %57 = vector.load %arg1[%c3_56, %c0_57, %c1_58, %c0_59] : memref<4x10x10x4xf32, #tpu.memory_space<vmem>>, vector<1x8x8x4xf32>
    %58 = vector.shape_cast %57 : vector<1x8x8x4xf32> to vector<8x8x4xf32>
    %59 = vector.shape_cast %58 : vector<8x8x4xf32> to vector<64x4xf32>
    %c8 = arith.constant 8 : index
    %c0_60 = arith.constant 0 : index
    %c0_61 = arith.constant 0 : index
    %60 = vector.load %arg2[%c8, %c0_60, %c0_61] : memref<25x4x128xf32, #tpu.memory_space<vmem>>, vector<1x4x128xf32>
    %61 = vector.shape_cast %60 : vector<1x4x128xf32> to vector<4x128xf32>
    %cst_62 = arith.constant dense<0.000000e+00> : vector<64x128xf32>
    %62 = tpu.matmul %59, %61, %cst_62 {dimension_numbers = #tpu.dot_dimension_numbers<[1], [0], [0], [1], [0, 0, 1, 1], [], []>} : vector<64x4xf32>, vector<4x128xf32>, vector<64x128xf32> -> vector<64x128xf32>
    %63 = arith.addf %56, %62 : vector<64x128xf32>
    %c2_63 = arith.constant 2 : index
    %c0_64 = arith.constant 0 : index
    %c2_65 = arith.constant 2 : index
    %c0_66 = arith.constant 0 : index
    %64 = vector.load %arg1[%c2_63, %c0_64, %c2_65, %c0_66] : memref<4x10x10x4xf32, #tpu.memory_space<vmem>>, vector<1x8x8x4xf32>
    %65 = vector.shape_cast %64 : vector<1x8x8x4xf32> to vector<8x8x4xf32>
    %66 = vector.shape_cast %65 : vector<8x8x4xf32> to vector<64x4xf32>
    %c9 = arith.constant 9 : index
    %c0_67 = arith.constant 0 : index
    %c0_68 = arith.constant 0 : index
    %67 = vector.load %arg2[%c9, %c0_67, %c0_68] : memref<25x4x128xf32, #tpu.memory_space<vmem>>, vector<1x4x128xf32>
    %68 = vector.shape_cast %67 : vector<1x4x128xf32> to vector<4x128xf32>
    %cst_69 = arith.constant dense<0.000000e+00> : vector<64x128xf32>
    %69 = tpu.matmul %66, %68, %cst_69 {dimension_numbers = #tpu.dot_dimension_numbers<[1], [0], [0], [1], [0, 0, 1, 1], [], []>} : vector<64x4xf32>, vector<4x128xf32>, vector<64x128xf32> -> vector<64x128xf32>
    %70 = arith.addf %63, %69 : vector<64x128xf32>
    %c0_70 = arith.constant 0 : index
    %c1_71 = arith.constant 1 : index
    %c0_72 = arith.constant 0 : index
    %c0_73 = arith.constant 0 : index
    %71 = vector.load %arg1[%c0_70, %c1_71, %c0_72, %c0_73] : memref<4x10x10x4xf32, #tpu.memory_space<vmem>>, vector<1x8x8x4xf32>
    %72 = vector.shape_cast %71 : vector<1x8x8x4xf32> to vector<8x8x4xf32>
    %73 = vector.shape_cast %72 : vector<8x8x4xf32> to vector<64x4xf32>
    %c10 = arith.constant 10 : index
    %c0_74 = arith.constant 0 : index
    %c0_75 = arith.constant 0 : index
    %74 = vector.load %arg2[%c10, %c0_74, %c0_75] : memref<25x4x128xf32, #tpu.memory_space<vmem>>, vector<1x4x128xf32>
    %75 = vector.shape_cast %74 : vector<1x4x128xf32> to vector<4x128xf32>
    %cst_76 = arith.constant dense<0.000000e+00> : vector<64x128xf32>
    %76 = tpu.matmul %73, %75, %cst_76 {dimension_numbers = #tpu.dot_dimension_numbers<[1], [0], [0], [1], [0, 0, 1, 1], [], []>} : vector<64x4xf32>, vector<4x128xf32>, vector<64x128xf32> -> vector<64x128xf32>
    %77 = arith.addf %70, %76 : vector<64x128xf32>
    %c1_77 = arith.constant 1 : index
    %c1_78 = arith.constant 1 : index
    %c0_79 = arith.constant 0 : index
    %c0_80 = arith.constant 0 : index
    %78 = vector.load %arg1[%c1_77, %c1_78, %c0_79, %c0_80] : memref<4x10x10x4xf32, #tpu.memory_space<vmem>>, vector<1x8x8x4xf32>
    %79 = vector.shape_cast %78 : vector<1x8x8x4xf32> to vector<8x8x4xf32>
    %80 = vector.shape_cast %79 : vector<8x8x4xf32> to vector<64x4xf32>
    %c11 = arith.constant 11 : index
    %c0_81 = arith.constant 0 : index
    %c0_82 = arith.constant 0 : index
    %81 = vector.load %arg2[%c11, %c0_81, %c0_82] : memref<25x4x128xf32, #tpu.memory_space<vmem>>, vector<1x4x128xf32>
    %82 = vector.shape_cast %81 : vector<1x4x128xf32> to vector<4x128xf32>
    %cst_83 = arith.constant dense<0.000000e+00> : vector<64x128xf32>
    %83 = tpu.matmul %80, %82, %cst_83 {dimension_numbers = #tpu.dot_dimension_numbers<[1], [0], [0], [1], [0, 0, 1, 1], [], []>} : vector<64x4xf32>, vector<4x128xf32>, vector<64x128xf32> -> vector<64x128xf32>
    %84 = arith.addf %77, %83 : vector<64x128xf32>
    %c0_84 = arith.constant 0 : index
    %c1_85 = arith.constant 1 : index
    %c1_86 = arith.constant 1 : index
    %c0_87 = arith.constant 0 : index
    %85 = vector.load %arg1[%c0_84, %c1_85, %c1_86, %c0_87] : memref<4x10x10x4xf32, #tpu.memory_space<vmem>>, vector<1x8x8x4xf32>
    %86 = vector.shape_cast %85 : vector<1x8x8x4xf32> to vector<8x8x4xf32>
    %87 = vector.shape_cast %86 : vector<8x8x4xf32> to vector<64x4xf32>
    %c12 = arith.constant 12 : index
    %c0_88 = arith.constant 0 : index
    %c0_89 = arith.constant 0 : index
    %88 = vector.load %arg2[%c12, %c0_88, %c0_89] : memref<25x4x128xf32, #tpu.memory_space<vmem>>, vector<1x4x128xf32>
    %89 = vector.shape_cast %88 : vector<1x4x128xf32> to vector<4x128xf32>
    %cst_90 = arith.constant dense<0.000000e+00> : vector<64x128xf32>
    %90 = tpu.matmul %87, %89, %cst_90 {dimension_numbers = #tpu.dot_dimension_numbers<[1], [0], [0], [1], [0, 0, 1, 1], [], []>} : vector<64x4xf32>, vector<4x128xf32>, vector<64x128xf32> -> vector<64x128xf32>
    %91 = arith.addf %84, %90 : vector<64x128xf32>
    %c1_91 = arith.constant 1 : index
    %c1_92 = arith.constant 1 : index
    %c1_93 = arith.constant 1 : index
    %c0_94 = arith.constant 0 : index
    %92 = vector.load %arg1[%c1_91, %c1_92, %c1_93, %c0_94] : memref<4x10x10x4xf32, #tpu.memory_space<vmem>>, vector<1x8x8x4xf32>
    %93 = vector.shape_cast %92 : vector<1x8x8x4xf32> to vector<8x8x4xf32>
    %94 = vector.shape_cast %93 : vector<8x8x4xf32> to vector<64x4xf32>
    %c13 = arith.constant 13 : index
    %c0_95 = arith.constant 0 : index
    %c0_96 = arith.constant 0 : index
    %95 = vector.load %arg2[%c13, %c0_95, %c0_96] : memref<25x4x128xf32, #tpu.memory_space<vmem>>, vector<1x4x128xf32>
    %96 = vector.shape_cast %95 : vector<1x4x128xf32> to vector<4x128xf32>
    %cst_97 = arith.constant dense<0.000000e+00> : vector<64x128xf32>
    %97 = tpu.matmul %94, %96, %cst_97 {dimension_numbers = #tpu.dot_dimension_numbers<[1], [0], [0], [1], [0, 0, 1, 1], [], []>} : vector<64x4xf32>, vector<4x128xf32>, vector<64x128xf32> -> vector<64x128xf32>
    %98 = arith.addf %91, %97 : vector<64x128xf32>
    %c0_98 = arith.constant 0 : index
    %c1_99 = arith.constant 1 : index
    %c2_100 = arith.constant 2 : index
    %c0_101 = arith.constant 0 : index
    %99 = vector.load %arg1[%c0_98, %c1_99, %c2_100, %c0_101] : memref<4x10x10x4xf32, #tpu.memory_space<vmem>>, vector<1x8x8x4xf32>
    %100 = vector.shape_cast %99 : vector<1x8x8x4xf32> to vector<8x8x4xf32>
    %101 = vector.shape_cast %100 : vector<8x8x4xf32> to vector<64x4xf32>
    %c14 = arith.constant 14 : index
    %c0_102 = arith.constant 0 : index
    %c0_103 = arith.constant 0 : index
    %102 = vector.load %arg2[%c14, %c0_102, %c0_103] : memref<25x4x128xf32, #tpu.memory_space<vmem>>, vector<1x4x128xf32>
    %103 = vector.shape_cast %102 : vector<1x4x128xf32> to vector<4x128xf32>
    %cst_104 = arith.constant dense<0.000000e+00> : vector<64x128xf32>
    %104 = tpu.matmul %101, %103, %cst_104 {dimension_numbers = #tpu.dot_dimension_numbers<[1], [0], [0], [1], [0, 0, 1, 1], [], []>} : vector<64x4xf32>, vector<4x128xf32>, vector<64x128xf32> -> vector<64x128xf32>
    %105 = arith.addf %98, %104 : vector<64x128xf32>
    %c2_105 = arith.constant 2 : index
    %c1_106 = arith.constant 1 : index
    %c0_107 = arith.constant 0 : index
    %c0_108 = arith.constant 0 : index
    %106 = vector.load %arg1[%c2_105, %c1_106, %c0_107, %c0_108] : memref<4x10x10x4xf32, #tpu.memory_space<vmem>>, vector<1x8x8x4xf32>
    %107 = vector.shape_cast %106 : vector<1x8x8x4xf32> to vector<8x8x4xf32>
    %108 = vector.shape_cast %107 : vector<8x8x4xf32> to vector<64x4xf32>
    %c15 = arith.constant 15 : index
    %c0_109 = arith.constant 0 : index
    %c0_110 = arith.constant 0 : index
    %109 = vector.load %arg2[%c15, %c0_109, %c0_110] : memref<25x4x128xf32, #tpu.memory_space<vmem>>, vector<1x4x128xf32>
    %110 = vector.shape_cast %109 : vector<1x4x128xf32> to vector<4x128xf32>
    %cst_111 = arith.constant dense<0.000000e+00> : vector<64x128xf32>
    %111 = tpu.matmul %108, %110, %cst_111 {dimension_numbers = #tpu.dot_dimension_numbers<[1], [0], [0], [1], [0, 0, 1, 1], [], []>} : vector<64x4xf32>, vector<4x128xf32>, vector<64x128xf32> -> vector<64x128xf32>
    %112 = arith.addf %105, %111 : vector<64x128xf32>
    %c3_112 = arith.constant 3 : index
    %c1_113 = arith.constant 1 : index
    %c0_114 = arith.constant 0 : index
    %c0_115 = arith.constant 0 : index
    %113 = vector.load %arg1[%c3_112, %c1_113, %c0_114, %c0_115] : memref<4x10x10x4xf32, #tpu.memory_space<vmem>>, vector<1x8x8x4xf32>
    %114 = vector.shape_cast %113 : vector<1x8x8x4xf32> to vector<8x8x4xf32>
    %115 = vector.shape_cast %114 : vector<8x8x4xf32> to vector<64x4xf32>
    %c16 = arith.constant 16 : index
    %c0_116 = arith.constant 0 : index
    %c0_117 = arith.constant 0 : index
    %116 = vector.load %arg2[%c16, %c0_116, %c0_117] : memref<25x4x128xf32, #tpu.memory_space<vmem>>, vector<1x4x128xf32>
    %117 = vector.shape_cast %116 : vector<1x4x128xf32> to vector<4x128xf32>
    %cst_118 = arith.constant dense<0.000000e+00> : vector<64x128xf32>
    %118 = tpu.matmul %115, %117, %cst_118 {dimension_numbers = #tpu.dot_dimension_numbers<[1], [0], [0], [1], [0, 0, 1, 1], [], []>} : vector<64x4xf32>, vector<4x128xf32>, vector<64x128xf32> -> vector<64x128xf32>
    %119 = arith.addf %112, %118 : vector<64x128xf32>
    %c2_119 = arith.constant 2 : index
    %c1_120 = arith.constant 1 : index
    %c1_121 = arith.constant 1 : index
    %c0_122 = arith.constant 0 : index
    %120 = vector.load %arg1[%c2_119, %c1_120, %c1_121, %c0_122] : memref<4x10x10x4xf32, #tpu.memory_space<vmem>>, vector<1x8x8x4xf32>
    %121 = vector.shape_cast %120 : vector<1x8x8x4xf32> to vector<8x8x4xf32>
    %122 = vector.shape_cast %121 : vector<8x8x4xf32> to vector<64x4xf32>
    %c17 = arith.constant 17 : index
    %c0_123 = arith.constant 0 : index
    %c0_124 = arith.constant 0 : index
    %123 = vector.load %arg2[%c17, %c0_123, %c0_124] : memref<25x4x128xf32, #tpu.memory_space<vmem>>, vector<1x4x128xf32>
    %124 = vector.shape_cast %123 : vector<1x4x128xf32> to vector<4x128xf32>
    %cst_125 = arith.constant dense<0.000000e+00> : vector<64x128xf32>
    %125 = tpu.matmul %122, %124, %cst_125 {dimension_numbers = #tpu.dot_dimension_numbers<[1], [0], [0], [1], [0, 0, 1, 1], [], []>} : vector<64x4xf32>, vector<4x128xf32>, vector<64x128xf32> -> vector<64x128xf32>
    %126 = arith.addf %119, %125 : vector<64x128xf32>
    %c3_126 = arith.constant 3 : index
    %c1_127 = arith.constant 1 : index
    %c1_128 = arith.constant 1 : index
    %c0_129 = arith.constant 0 : index
    %127 = vector.load %arg1[%c3_126, %c1_127, %c1_128, %c0_129] : memref<4x10x10x4xf32, #tpu.memory_space<vmem>>, vector<1x8x8x4xf32>
    %128 = vector.shape_cast %127 : vector<1x8x8x4xf32> to vector<8x8x4xf32>
    %129 = vector.shape_cast %128 : vector<8x8x4xf32> to vector<64x4xf32>
    %c18 = arith.constant 18 : index
    %c0_130 = arith.constant 0 : index
    %c0_131 = arith.constant 0 : index
    %130 = vector.load %arg2[%c18, %c0_130, %c0_131] : memref<25x4x128xf32, #tpu.memory_space<vmem>>, vector<1x4x128xf32>
    %131 = vector.shape_cast %130 : vector<1x4x128xf32> to vector<4x128xf32>
    %cst_132 = arith.constant dense<0.000000e+00> : vector<64x128xf32>
    %132 = tpu.matmul %129, %131, %cst_132 {dimension_numbers = #tpu.dot_dimension_numbers<[1], [0], [0], [1], [0, 0, 1, 1], [], []>} : vector<64x4xf32>, vector<4x128xf32>, vector<64x128xf32> -> vector<64x128xf32>
    %133 = arith.addf %126, %132 : vector<64x128xf32>
    %c2_133 = arith.constant 2 : index
    %c1_134 = arith.constant 1 : index
    %c2_135 = arith.constant 2 : index
    %c0_136 = arith.constant 0 : index
    %134 = vector.load %arg1[%c2_133, %c1_134, %c2_135, %c0_136] : memref<4x10x10x4xf32, #tpu.memory_space<vmem>>, vector<1x8x8x4xf32>
    %135 = vector.shape_cast %134 : vector<1x8x8x4xf32> to vector<8x8x4xf32>
    %136 = vector.shape_cast %135 : vector<8x8x4xf32> to vector<64x4xf32>
    %c19 = arith.constant 19 : index
    %c0_137 = arith.constant 0 : index
    %c0_138 = arith.constant 0 : index
    %137 = vector.load %arg2[%c19, %c0_137, %c0_138] : memref<25x4x128xf32, #tpu.memory_space<vmem>>, vector<1x4x128xf32>
    %138 = vector.shape_cast %137 : vector<1x4x128xf32> to vector<4x128xf32>
    %cst_139 = arith.constant dense<0.000000e+00> : vector<64x128xf32>
    %139 = tpu.matmul %136, %138, %cst_139 {dimension_numbers = #tpu.dot_dimension_numbers<[1], [0], [0], [1], [0, 0, 1, 1], [], []>} : vector<64x4xf32>, vector<4x128xf32>, vector<64x128xf32> -> vector<64x128xf32>
    %140 = arith.addf %133, %139 : vector<64x128xf32>
    %c0_140 = arith.constant 0 : index
    %c2_141 = arith.constant 2 : index
    %c0_142 = arith.constant 0 : index
    %c0_143 = arith.constant 0 : index
    %141 = vector.load %arg1[%c0_140, %c2_141, %c0_142, %c0_143] : memref<4x10x10x4xf32, #tpu.memory_space<vmem>>, vector<1x8x8x4xf32>
    %142 = vector.shape_cast %141 : vector<1x8x8x4xf32> to vector<8x8x4xf32>
    %143 = vector.shape_cast %142 : vector<8x8x4xf32> to vector<64x4xf32>
    %c20 = arith.constant 20 : index
    %c0_144 = arith.constant 0 : index
    %c0_145 = arith.constant 0 : index
    %144 = vector.load %arg2[%c20, %c0_144, %c0_145] : memref<25x4x128xf32, #tpu.memory_space<vmem>>, vector<1x4x128xf32>
    %145 = vector.shape_cast %144 : vector<1x4x128xf32> to vector<4x128xf32>
    %cst_146 = arith.constant dense<0.000000e+00> : vector<64x128xf32>
    %146 = tpu.matmul %143, %145, %cst_146 {dimension_numbers = #tpu.dot_dimension_numbers<[1], [0], [0], [1], [0, 0, 1, 1], [], []>} : vector<64x4xf32>, vector<4x128xf32>, vector<64x128xf32> -> vector<64x128xf32>
    %147 = arith.addf %140, %146 : vector<64x128xf32>
    %c1_147 = arith.constant 1 : index
    %c2_148 = arith.constant 2 : index
    %c0_149 = arith.constant 0 : index
    %c0_150 = arith.constant 0 : index
    %148 = vector.load %arg1[%c1_147, %c2_148, %c0_149, %c0_150] : memref<4x10x10x4xf32, #tpu.memory_space<vmem>>, vector<1x8x8x4xf32>
    %149 = vector.shape_cast %148 : vector<1x8x8x4xf32> to vector<8x8x4xf32>
    %150 = vector.shape_cast %149 : vector<8x8x4xf32> to vector<64x4xf32>
    %c21 = arith.constant 21 : index
    %c0_151 = arith.constant 0 : index
    %c0_152 = arith.constant 0 : index
    %151 = vector.load %arg2[%c21, %c0_151, %c0_152] : memref<25x4x128xf32, #tpu.memory_space<vmem>>, vector<1x4x128xf32>
    %152 = vector.shape_cast %151 : vector<1x4x128xf32> to vector<4x128xf32>
    %cst_153 = arith.constant dense<0.000000e+00> : vector<64x128xf32>
    %153 = tpu.matmul %150, %152, %cst_153 {dimension_numbers = #tpu.dot_dimension_numbers<[1], [0], [0], [1], [0, 0, 1, 1], [], []>} : vector<64x4xf32>, vector<4x128xf32>, vector<64x128xf32> -> vector<64x128xf32>
    %154 = arith.addf %147, %153 : vector<64x128xf32>
    %c0_154 = arith.constant 0 : index
    %c2_155 = arith.constant 2 : index
    %c1_156 = arith.constant 1 : index
    %c0_157 = arith.constant 0 : index
    %155 = vector.load %arg1[%c0_154, %c2_155, %c1_156, %c0_157] : memref<4x10x10x4xf32, #tpu.memory_space<vmem>>, vector<1x8x8x4xf32>
    %156 = vector.shape_cast %155 : vector<1x8x8x4xf32> to vector<8x8x4xf32>
    %157 = vector.shape_cast %156 : vector<8x8x4xf32> to vector<64x4xf32>
    %c22 = arith.constant 22 : index
    %c0_158 = arith.constant 0 : index
    %c0_159 = arith.constant 0 : index
    %158 = vector.load %arg2[%c22, %c0_158, %c0_159] : memref<25x4x128xf32, #tpu.memory_space<vmem>>, vector<1x4x128xf32>
    %159 = vector.shape_cast %158 : vector<1x4x128xf32> to vector<4x128xf32>
    %cst_160 = arith.constant dense<0.000000e+00> : vector<64x128xf32>
    %160 = tpu.matmul %157, %159, %cst_160 {dimension_numbers = #tpu.dot_dimension_numbers<[1], [0], [0], [1], [0, 0, 1, 1], [], []>} : vector<64x4xf32>, vector<4x128xf32>, vector<64x128xf32> -> vector<64x128xf32>
    %161 = arith.addf %154, %160 : vector<64x128xf32>
    %c1_161 = arith.constant 1 : index
    %c2_162 = arith.constant 2 : index
    %c1_163 = arith.constant 1 : index
    %c0_164 = arith.constant 0 : index
    %162 = vector.load %arg1[%c1_161, %c2_162, %c1_163, %c0_164] : memref<4x10x10x4xf32, #tpu.memory_space<vmem>>, vector<1x8x8x4xf32>
    %163 = vector.shape_cast %162 : vector<1x8x8x4xf32> to vector<8x8x4xf32>
    %164 = vector.shape_cast %163 : vector<8x8x4xf32> to vector<64x4xf32>
    %c23 = arith.constant 23 : index
    %c0_165 = arith.constant 0 : index
    %c0_166 = arith.constant 0 : index
    %165 = vector.load %arg2[%c23, %c0_165, %c0_166] : memref<25x4x128xf32, #tpu.memory_space<vmem>>, vector<1x4x128xf32>
    %166 = vector.shape_cast %165 : vector<1x4x128xf32> to vector<4x128xf32>
    %cst_167 = arith.constant dense<0.000000e+00> : vector<64x128xf32>
    %167 = tpu.matmul %164, %166, %cst_167 {dimension_numbers = #tpu.dot_dimension_numbers<[1], [0], [0], [1], [0, 0, 1, 1], [], []>} : vector<64x4xf32>, vector<4x128xf32>, vector<64x128xf32> -> vector<64x128xf32>
    %168 = arith.addf %161, %167 : vector<64x128xf32>
    %c0_168 = arith.constant 0 : index
    %c2_169 = arith.constant 2 : index
    %c2_170 = arith.constant 2 : index
    %c0_171 = arith.constant 0 : index
    %169 = vector.load %arg1[%c0_168, %c2_169, %c2_170, %c0_171] : memref<4x10x10x4xf32, #tpu.memory_space<vmem>>, vector<1x8x8x4xf32>
    %170 = vector.shape_cast %169 : vector<1x8x8x4xf32> to vector<8x8x4xf32>
    %171 = vector.shape_cast %170 : vector<8x8x4xf32> to vector<64x4xf32>
    %c24 = arith.constant 24 : index
    %c0_172 = arith.constant 0 : index
    %c0_173 = arith.constant 0 : index
    %172 = vector.load %arg2[%c24, %c0_172, %c0_173] : memref<25x4x128xf32, #tpu.memory_space<vmem>>, vector<1x4x128xf32>
    %173 = vector.shape_cast %172 : vector<1x4x128xf32> to vector<4x128xf32>
    %cst_174 = arith.constant dense<0.000000e+00> : vector<64x128xf32>
    %174 = tpu.matmul %171, %173, %cst_174 {dimension_numbers = #tpu.dot_dimension_numbers<[1], [0], [0], [1], [0, 0, 1, 1], [], []>} : vector<64x4xf32>, vector<4x128xf32>, vector<64x128xf32> -> vector<64x128xf32>
    %175 = arith.addf %168, %174 : vector<64x128xf32>
    %c0_175 = arith.constant 0 : index
    %c0_176 = arith.constant 0 : index
    %c0_177 = arith.constant 0 : index
    %176 = vector.load %arg3[%c0_175, %c0_176, %c0_177] : memref<1x64x128xf32, #tpu.memory_space<vmem>>, vector<1x64x128xf32>
    %177 = vector.shape_cast %176 : vector<1x64x128xf32> to vector<64x128xf32>
    %178 = vector.shape_cast %175 : vector<64x128xf32> to vector<1x64x128xf32>
    tpu.vector_store %arg3[%c0_175, %c0_176, %c0_177], %178 {strides = array<i32>} : memref<1x64x128xf32, #tpu.memory_space<vmem>>, vector<1x64x128xf32>,
    %cst_178 = arith.constant dense<0.000000e+00> : vector<128xf32>
    %179 = vector.multi_reduction <add>, %175, %cst_178 [0] : vector<64x128xf32> to vector<128xf32>
    %180 = vector.shape_cast %179 : vector<128xf32> to vector<1x128xf32>
    %c0_179 = arith.constant 0 : index
    %c0_180 = arith.constant 0 : index
    %c0_181 = arith.constant 0 : index
    %181 = vector.load %arg4[%c0_179, %c0_180, %c0_181] : memref<1x2x128xf32, #tpu.memory_space<vmem>>, vector<1x1x128xf32>
    %182 = vector.shape_cast %181 : vector<1x1x128xf32> to vector<1x128xf32>
    %183 = vector.shape_cast %180 : vector<1x128xf32> to vector<1x1x128xf32>
    tpu.vector_store %arg4[%c0_179, %c0_180, %c0_181], %183 {strides = array<i32>} : memref<1x2x128xf32, #tpu.memory_space<vmem>>, vector<1x1x128xf32>,
    %184 = arith.mulf %175, %175 : vector<64x128xf32>
    %cst_182 = arith.constant dense<0.000000e+00> : vector<128xf32>
    %185 = vector.multi_reduction <add>, %184, %cst_182 [0] : vector<64x128xf32> to vector<128xf32>
    %186 = vector.shape_cast %185 : vector<128xf32> to vector<1x128xf32>
    %c0_183 = arith.constant 0 : index
    %c1_184 = arith.constant 1 : index
    %c0_185 = arith.constant 0 : index
    %187 = vector.load %arg4[%c0_183, %c1_184, %c0_185] : memref<1x2x128xf32, #tpu.memory_space<vmem>>, vector<1x1x128xf32>
    %188 = vector.shape_cast %187 : vector<1x1x128xf32> to vector<1x128xf32>
    %189 = vector.shape_cast %186 : vector<1x128xf32> to vector<1x1x128xf32>
    tpu.vector_store %arg4[%c0_183, %c1_184, %c0_185], %189 {strides = array<i32>} : memref<1x2x128xf32, #tpu.memory_space<vmem>>, vector<1x1x128xf32>,
    return
  }
  func.func @transform_0(%arg0: i32) -> (i32, i32, i32, i32) {
    %c0_i32 = arith.constant 0 : i32
    %c0_i32_0 = arith.constant 0 : i32
    %c0_i32_1 = arith.constant 0 : i32
    %c0_i32_2 = arith.constant 0 : i32
    return %arg0, %c0_i32, %c0_i32_0, %c0_i32_1 : i32, i32, i32, i32
  }
  func.func @transform_1(%arg0: i32) -> (i32, i32, i32) {
    %c0_i32 = arith.constant 0 : i32
    %c0_i32_0 = arith.constant 0 : i32
    %c0_i32_1 = arith.constant 0 : i32
    %c0_i32_2 = arith.constant 0 : i32
    return %c0_i32, %c0_i32_0, %c0_i32_1 : i32, i32, i32
  }
  func.func @transform_2(%arg0: i32) -> (i32, i32, i32) {
    %c0_i32 = arith.constant 0 : i32
    %c0_i32_0 = arith.constant 0 : i32
    %c0_i32_1 = arith.constant 0 : i32
    return %arg0, %c0_i32, %c0_i32_0 : i32, i32, i32
  }
  func.func @transform_3(%arg0: i32) -> (i32, i32, i32) {
    %c0_i32 = arith.constant 0 : i32
    %c0_i32_0 = arith.constant 0 : i32
    %c0_i32_1 = arith.constant 0 : i32
    return %arg0, %c0_i32, %c0_i32_0 : i32, i32, i32
  }
}

module attributes {stable_mosaic.version = 11 : i64} {
  func.func @_bn_lrelu_kernel(%arg0: i32, %arg1: memref<128x128xf32, #tpu.memory_space<vmem>>, %arg2: memref<2x128xf32, #tpu.memory_space<vmem>>, %arg3: memref<128x128xf32, #tpu.memory_space<vmem>>) attributes {dimension_semantics = [#tpu.dimension_semantics<parallel>], iteration_bounds = array<i64: 1>, scalar_prefetch = 0 : i64, scratch_operands = 0 : i64, tpu.core_type = #tpu.core_type<tc>, window_params = [{transform_indices = @transform_0, window_bounds = array<i64: 128, 128>}, {pipeline_mode = #tpu.pipeline_mode<synchronous>, transform_indices = @transform_1, window_bounds = array<i64: 2, 128>}, {transform_indices = @transform_2, window_bounds = array<i64: 128, 128>}]} {
    %c0 = arith.constant 0 : index
    %c0_0 = arith.constant 0 : index
    %0 = vector.load %arg1[%c0, %c0_0] : memref<128x128xf32, #tpu.memory_space<vmem>>, vector<128x128xf32>
    %c0_1 = arith.constant 0 : index
    %c0_2 = arith.constant 0 : index
    %1 = vector.load %arg2[%c0_1, %c0_2] : memref<2x128xf32, #tpu.memory_space<vmem>>, vector<1x128xf32>
    %2 = vector.broadcast %1 : vector<1x128xf32> to vector<128x128xf32>
    %3 = arith.mulf %0, %2 : vector<128x128xf32>
    %c1 = arith.constant 1 : index
    %c0_3 = arith.constant 0 : index
    %4 = vector.load %arg2[%c1, %c0_3] : memref<2x128xf32, #tpu.memory_space<vmem>>, vector<1x128xf32>
    %5 = vector.broadcast %4 : vector<1x128xf32> to vector<128x128xf32>
    %6 = arith.addf %3, %5 : vector<128x128xf32>
    %cst = arith.constant 0.000000e+00 : f32
    %7 = vector.broadcast %cst : f32 to vector<128x128xf32>
    %8 = arith.cmpf oge, %6, %7 : vector<128x128xf32>
    %cst_4 = arith.constant 2.000000e-01 : f32
    %9 = vector.broadcast %cst_4 : f32 to vector<128x128xf32>
    %10 = arith.mulf %9, %6 : vector<128x128xf32>
    %11 = arith.select %8, %6, %10 : vector<128x128xi1>, vector<128x128xf32>
    %c0_5 = arith.constant 0 : index
    %c0_6 = arith.constant 0 : index
    %12 = vector.load %arg3[%c0_5, %c0_6] : memref<128x128xf32, #tpu.memory_space<vmem>>, vector<128x128xf32>
    tpu.vector_store %arg3[%c0_5, %c0_6], %11 {strides = array<i32>} : memref<128x128xf32, #tpu.memory_space<vmem>>, vector<128x128xf32>,
    return
  }
  func.func @transform_0(%arg0: i32) -> (i32, i32) {
    %c0_i32 = arith.constant 0 : i32
    %c0_i32_0 = arith.constant 0 : i32
    return %arg0, %c0_i32 : i32, i32
  }
  func.func @transform_1(%arg0: i32) -> (i32, i32) {
    %c0_i32 = arith.constant 0 : i32
    %c0_i32_0 = arith.constant 0 : i32
    %c0_i32_1 = arith.constant 0 : i32
    return %c0_i32, %c0_i32_0 : i32, i32
  }
  func.func @transform_2(%arg0: i32) -> (i32, i32) {
    %c0_i32 = arith.constant 0 : i32
    %c0_i32_0 = arith.constant 0 : i32
    return %arg0, %c0_i32 : i32, i32
  }
}

</mosaic_0001>

<llo_original>
// kernel: conv2d_block.3
$region0: #{conv2d_block.3}
  #allocation0 [shape = 'u32[]', space=smem, size = 0x4, offset = 0x4, fixed_abs, tag = 'smem constant byte address 0x4 - core index']
  #allocation1 [shape = 'u32[144,128]{1,0:T(1,128)}', space=vmem, size = 0x12000, scoped, tag = 'internal scratch']
  %s0 = inlined_call_operand.vmem [shape: f32[128,128], index: 0, kind: input, shape index: {}]
  %s1 = inlined_call_operand.vmem [shape: f32[2,128], index: 1, kind: input, shape index: {}]
  %s2 = inlined_call_operand.vmem [shape: f32[128,128], index: 2, kind: output, shape index: {}]
  %s3 = sld [smem:[#allocation0]]
  $region18: #{conv2d_block.3} parent=0
    _
  %s5 = ssub.s32 1, %s3
  %s6 = scalar_select 0, %s5, %s3
  // Predicated region
  $region2: #{conv2d_block.3} parent=0 // pred_check
    _
  $region3: #{conv2d_block.3} parent=0 // pred_check_branch
    %8 = sbr.rel (0) target = $region5
  $region4: #{conv2d_block.3} parent=0 // pred_region
    _
  $region5: #{conv2d_block.3} parent=0 // pred_fallthru
    _
  // Predicated region
  $region6: #{conv2d_block.3} parent=0 // pred_check
    _
  $region7: #{conv2d_block.3} parent=0 // pred_check_branch
    %10 = sbr.rel (0) target = $region9
  $region8: #{conv2d_block.3} parent=0 // pred_region
    _
  $region9: #{conv2d_block.3} parent=0 // pred_fallthru
    _
  %v11 = vld [vmem:[%s0] sm:$0xff]
  %v12 = vld [vmem:[%s0 + $0x8] sm:$0xff]
  %v13 = vld [vmem:[%s0 + $0x10] sm:$0xff]
  %v14 = vld [vmem:[%s0 + $0x18] sm:$0xff]
  %v15 = vld [vmem:[%s0 + $0x20] sm:$0xff]
  %v16 = vld [vmem:[%s0 + $0x28] sm:$0xff]
  %v17 = vld [vmem:[%s0 + $0x30] sm:$0xff]
  %v18 = vld [vmem:[%s0 + $0x38] sm:$0xff]
  %v19 = vld [vmem:[%s0 + $0x40] sm:$0xff]
  %v20 = vld [vmem:[%s0 + $0x48] sm:$0xff]
  %v21 = vld [vmem:[%s0 + $0x50] sm:$0xff]
  %v22 = vld [vmem:[%s0 + $0x58] sm:$0xff]
  %v23 = vld [vmem:[%s0 + $0x60] sm:$0xff]
  %v24 = vld [vmem:[%s0 + $0x68] sm:$0xff]
  %v25 = vld [vmem:[%s0 + $0x70] sm:$0xff]
  %v26 = vld [vmem:[%s0 + $0x78] sm:$0xff]
  %v27 = vld [vmem:[%s1] sm:$0x1]
  %v28 = vlaneseq
  %v29 = vshrl.u32 %v28, 7
  %v30 = vsub.s32 0, %v29
  %v31 = vrot.slane %v27, %v30
  %v32 = vmul.f32 %v11, %v31
  %v33 = vmul.f32 %v12, %v31
  %v34 = vmul.f32 %v13, %v31
  %v35 = vmul.f32 %v14, %v31
  %v36 = vmul.f32 %v15, %v31
  %v37 = vmul.f32 %v16, %v31
  %v38 = vmul.f32 %v17, %v31
  %v39 = vmul.f32 %v18, %v31
  %v40 = vmul.f32 %v19, %v31
  %v41 = vmul.f32 %v20, %v31
  %v42 = vmul.f32 %v21, %v31
  %v43 = vmul.f32 %v22, %v31
  %v44 = vmul.f32 %v23, %v31
  %v45 = vmul.f32 %v24, %v31
  %v46 = vmul.f32 %v25, %v31
  %v47 = vmul.f32 %v26, %v31
  %v48 = vld [vmem:[%s1 + $0x1] sm:$0x1]
  %v49 = vlaneseq
  %v50 = vshrl.u32 %v49, 7
  %v51 = vsub.s32 0, %v50
  %v52 = vrot.slane %v48, %v51
  %v53 = vadd.f32 %v32, %v52
  %v54 = vadd.f32 %v33, %v52
  %v55 = vadd.f32 %v34, %v52
  %v56 = vadd.f32 %v35, %v52
  %v57 = vadd.f32 %v36, %v52
  %v58 = vadd.f32 %v37, %v52
  %v59 = vadd.f32 %v38, %v52
  %v60 = vadd.f32 %v39, %v52
  %v61 = vadd.f32 %v40, %v52
  %v62 = vadd.f32 %v41, %v52
  %v63 = vadd.f32 %v42, %v52
  %v64 = vadd.f32 %v43, %v52
  %v65 = vadd.f32 %v44, %v52
  %v66 = vadd.f32 %v45, %v52
  %v67 = vadd.f32 %v46, %v52
  %v68 = vadd.f32 %v47, %v52
  %vm69 = vcmp.ge.f32.partialorder %v53, 0.0
  %vm70 = vcmp.ge.f32.partialorder %v54, 0.0
  %vm71 = vcmp.ge.f32.partialorder %v55, 0.0
  %vm72 = vcmp.ge.f32.partialorder %v56, 0.0
  %vm73 = vcmp.ge.f32.partialorder %v57, 0.0
  %vm74 = vcmp.ge.f32.partialorder %v58, 0.0
  %vm75 = vcmp.ge.f32.partialorder %v59, 0.0
  %vm76 = vcmp.ge.f32.partialorder %v60, 0.0
  %vm77 = vcmp.ge.f32.partialorder %v61, 0.0
  %vm78 = vcmp.ge.f32.partialorder %v62, 0.0
  %vm79 = vcmp.ge.f32.partialorder %v63, 0.0
  %vm80 = vcmp.ge.f32.partialorder %v64, 0.0
  %vm81 = vcmp.ge.f32.partialorder %v65, 0.0
  %vm82 = vcmp.ge.f32.partialorder %v66, 0.0
  %vm83 = vcmp.ge.f32.partialorder %v67, 0.0
  %vm84 = vcmp.ge.f32.partialorder %v68, 0.0
  %v85 = vmul.f32 %v53, 0.2
  %v86 = vmul.f32 %v54, 0.2
  %v87 = vmul.f32 %v55, 0.2
  %v88 = vmul.f32 %v56, 0.2
  %v89 = vmul.f32 %v57, 0.2
  %v90 = vmul.f32 %v58, 0.2
  %v91 = vmul.f32 %v59, 0.2
  %v92 = vmul.f32 %v60, 0.2
  %v93 = vmul.f32 %v61, 0.2
  %v94 = vmul.f32 %v62, 0.2
  %v95 = vmul.f32 %v63, 0.2
  %v96 = vmul.f32 %v64, 0.2
  %v97 = vmul.f32 %v65, 0.2
  %v98 = vmul.f32 %v66, 0.2
  %v99 = vmul.f32 %v67, 0.2
  %v100 = vmul.f32 %v68, 0.2
  %v101 = vsel %vm69, %v53, %v85
  %v102 = vsel %vm70, %v54, %v86
  %v103 = vsel %vm71, %v55, %v87
  %v104 = vsel %vm72, %v56, %v88
  %v105 = vsel %vm73, %v57, %v89
  %v106 = vsel %vm74, %v58, %v90
  %v107 = vsel %vm75, %v59, %v91
  %v108 = vsel %vm76, %v60, %v92
  %v109 = vsel %vm77, %v61, %v93
  %v110 = vsel %vm78, %v62, %v94
  %v111 = vsel %vm79, %v63, %v95
  %v112 = vsel %vm80, %v64, %v96
  %v113 = vsel %vm81, %v65, %v97
  %v114 = vsel %vm82, %v66, %v98
  %v115 = vsel %vm83, %v67, %v99
  %v116 = vsel %vm84, %v68, %v100
  %117 = vst [vmem:[%s2] sm:$0xff] %v101
  %118 = vst [vmem:[%s2 + $0x8] sm:$0xff] %v102
  %119 = vst [vmem:[%s2 + $0x10] sm:$0xff] %v103
  %120 = vst [vmem:[%s2 + $0x18] sm:$0xff] %v104
  %121 = vst [vmem:[%s2 + $0x20] sm:$0xff] %v105
  %122 = vst [vmem:[%s2 + $0x28] sm:$0xff] %v106
  %123 = vst [vmem:[%s2 + $0x30] sm:$0xff] %v107
  %124 = vst [vmem:[%s2 + $0x38] sm:$0xff] %v108
  %125 = vst [vmem:[%s2 + $0x40] sm:$0xff] %v109
  %126 = vst [vmem:[%s2 + $0x48] sm:$0xff] %v110
  %127 = vst [vmem:[%s2 + $0x50] sm:$0xff] %v111
  %128 = vst [vmem:[%s2 + $0x58] sm:$0xff] %v112
  %129 = vst [vmem:[%s2 + $0x60] sm:$0xff] %v113
  %130 = vst [vmem:[%s2 + $0x68] sm:$0xff] %v114
  %131 = vst [vmem:[%s2 + $0x70] sm:$0xff] %v115
  %132 = vst [vmem:[%s2 + $0x78] sm:$0xff] %v116
  // Predicated region
  $region10: #{conv2d_block.3} parent=0 // pred_check
    _
  $region11: #{conv2d_block.3} parent=0 // pred_check_branch
    %134 = sbr.rel (0) target = $region13
  $region12: #{conv2d_block.3} parent=0 // pred_region
    _
  $region13: #{conv2d_block.3} parent=0 // pred_fallthru
    _
  // Predicated region
  $region14: #{conv2d_block.3} parent=0 // pred_check
    _
  $region15: #{conv2d_block.3} parent=0 // pred_check_branch
    %136 = sbr.rel (0) target = $region17
  $region16: #{conv2d_block.3} parent=0 // pred_region
    _
  $region17: #{conv2d_block.3} parent=0 // pred_fallthru
    _

// kernel: conv2d_block.2
$region0: #{conv2d_block.2}
  #allocation0 [shape = 'u32[]', space=smem, size = 0x4, offset = 0x4, fixed_abs, tag = 'smem constant byte address 0x4 - core index']
  #allocation1 [shape = 'u32[144,128]{1,0:T(1,128)}', space=vmem, size = 0x12000, scoped, tag = 'internal scratch']
  %s0 = inlined_call_operand.vmem [shape: f32[8,10,10,4], index: 0, kind: input, shape index: {}]
  %s1 = inlined_call_operand.vmem [shape: f32[25,4,128], index: 1, kind: input, shape index: {}]
  %s2 = inlined_call_operand.vmem [shape: f32[2,64,128], index: 2, kind: output, shape index: {0}]
  %s3 = inlined_call_operand.vmem [shape: f32[2,2,128], index: 3, kind: output, shape index: {1}]
  %4 = xla_tuple %s2, %s3
  %s5 = sld [smem:[#allocation0]]
  $region49: #{conv2d_block.2} parent=0
    _
  %s7 = ssub.s32 1, %s5
  %s8 = scalar_select 0, %s7, %s5
  loop: start=0, step=1, limit=4
  $region2: #{conv2d_block.2} parent=0 // loop_pre_header
    _
  $region3: #{conv2d_block.2} parent=0 // loop_header
    %s10 = sphi 0, %s14
    %p11 = scmp.ge.s32.totalorder %s10, 4
    %s20 = sphi 0, %s22
    %s23 = sphi 0, %s20
    %s24 = sphi 0, %s23
    %s40 = sphi 0, %s24
    %s44 = sphi 0, %s44
    %s46 = sphi 0, %s44
    %s47 = sphi 0, %s46
    %s61 = sphi 0, %s47
    %s67 = sphi 0, %s69
    %s70 = sphi 0, %s67
    %s71 = sphi 0, %s70
    %s87 = sphi 0, %s71
    %s93 = sphi 0, %s95
    %s96 = sphi 0, %s93
    %s97 = sphi 0, %s96
    %s113 = sphi 0, %s97
  $region4: #{conv2d_block.2} parent=0 // loop_header_branch
    %13 = sbr.rel (%p11) target = $region8
  $region5: #{conv2d_block.2} parent=0 // loop_body
    %s15 = ssub.s32 %s10, 1
    %s16 = ssub.s32 %s10, 2
    %s17 = sadd.s32 %s10, 1
    %s18 = ssub.s32 %s10, %s17
    %p19 = scmp.eq.s32.totalorder %s18, 0
    %s21 = sadd.s32 %s20, 1
    %s22 = scalar_select %p19, %s20, %s21
    %p25 = pneg %p19
    %p26 = scmp.eq.s32.totalorder %s10, 1
    %p27 = por %p25, %p26
    %p28 = scmp.ne.s32.totalorder %s20, %s23
    %p29 = scmp.eq.s32.totalorder %s10, 0
    %p30 = por %p28, %p29
    %p31 = scmp.ne.s32.totalorder %s20, %s23
    %p32 = scmp.eq.s32.totalorder %s15, 1
    %p33 = por %p31, %p32
    %p34 = scmp.ne.s32.totalorder %s23, %s24
    %p35 = scmp.eq.s32.totalorder %s15, 0
    %p36 = por %p34, %p35
    %p37 = scmp.ne.s32.totalorder %s23, %s24
    %p38 = scmp.eq.s32.totalorder %s16, 1
    %p39 = por %p37, %p38
    %p41 = scmp.ne.s32.totalorder %s24, %s40
    %p42 = scmp.eq.s32.totalorder %s16, 0
    %p43 = por %p41, %p42
    %s45 = sadd.s32 %s44, 1
    %p48 = scmp.eq.s32.totalorder %s10, 1
    %p49 = scmp.ne.s32.totalorder %s44, %s46
    %p50 = scmp.eq.s32.totalorder %s10, 0
    %p51 = por %p49, %p50
    %p52 = scmp.ne.s32.totalorder %s44, %s46
    %p53 = scmp.eq.s32.totalorder %s15, 1
    %p54 = por %p52, %p53
    %p55 = scmp.ne.s32.totalorder %s46, %s47
    %p56 = scmp.eq.s32.totalorder %s15, 0
    %p57 = por %p55, %p56
    %p58 = scmp.ne.s32.totalorder %s46, %s47
    %p59 = scmp.eq.s32.totalorder %s16, 1
    %p60 = por %p58, %p59
    %p62 = scmp.ne.s32.totalorder %s47, %s61
    %p63 = scmp.eq.s32.totalorder %s16, 0
    %p64 = por %p62, %p63
    %s65 = ssub.s32 %s10, %s17
    %p66 = scmp.eq.s32.totalorder %s65, 0
    %s68 = sadd.s32 %s67, 1
    %s69 = scalar_select %p66, %s67, %s68
    %p72 = pneg %p66
    %p73 = scmp.eq.s32.totalorder %s10, 1
    %p74 = por %p72, %p73
    %p75 = scmp.ne.s32.totalorder %s67, %s70
    %p76 = scmp.eq.s32.totalorder %s10, 0
    %p77 = por %p75, %p76
    %p78 = scmp.ne.s32.totalorder %s67, %s70
    %p79 = scmp.eq.s32.totalorder %s15, 1
    %p80 = por %p78, %p79
    %p81 = scmp.ne.s32.totalorder %s70, %s71
    %p82 = scmp.eq.s32.totalorder %s15, 0
    %p83 = por %p81, %p82
    %p84 = scmp.ne.s32.totalorder %s70, %s71
    %p85 = scmp.eq.s32.totalorder %s16, 1
    %p86 = por %p84, %p85
    %p88 = scmp.ne.s32.totalorder %s71, %s87
    %p89 = scmp.eq.s32.totalorder %s16, 0
    %p90 = por %p88, %p89
    %s91 = ssub.s32 %s10, %s17
    %p92 = scmp.eq.s32.totalorder %s91, 0
    %s94 = sadd.s32 %s93, 1
    %s95 = scalar_select %p92, %s93, %s94
    %p98 = pneg %p92
    %p99 = scmp.eq.s32.totalorder %s10, 1
    %p100 = por %p98, %p99
    %p101 = scmp.ne.s32.totalorder %s93, %s96
    %p102 = scmp.eq.s32.totalorder %s10, 0
    %p103 = por %p101, %p102
    %p104 = scmp.ne.s32.totalorder %s93, %s96
    %p105 = scmp.eq.s32.totalorder %s15, 1
    %p106 = por %p104, %p105
    %p107 = scmp.ne.s32.totalorder %s96, %s97
    %p108 = scmp.eq.s32.totalorder %s15, 0
    %p109 = por %p107, %p108
    %p110 = scmp.ne.s32.totalorder %s96, %s97
    %p111 = scmp.eq.s32.totalorder %s16, 1
    %p112 = por %p110, %p111
    %p114 = scmp.ne.s32.totalorder %s97, %s113
    %p115 = scmp.eq.s32.totalorder %s16, 0
    %p116 = por %p114, %p115
    %p117 = scmp.le.s32.totalorder 1, %s10
    %p118 = scmp.lt.s32.totalorder %s10, 3
    %p119 = pnand %p117, %p118
    %p120 = pneg %p119
    // Predicated region
    $region9: #{conv2d_block.2} parent=5 // pred_check
      _
    $region10: #{conv2d_block.2} parent=5 // pred_check_branch
      %122 = sbr.rel (%p119) target = $region12
    $region11: #{conv2d_block.2} parent=5 // pred_region
      %s123 = ssub.s32 %s10, 1
      // Predicated region
      $region13: #{conv2d_block.2} parent=11 // pred_check
        %p124 = pneg %p57
      $region14: #{conv2d_block.2} parent=11 // pred_check_branch
        %126 = sbr.rel (%p124) target = $region16
      $region15: #{conv2d_block.2} parent=11 // pred_region
        _
      $region16: #{conv2d_block.2} parent=11 // pred_fallthru
        _
    $region12: #{conv2d_block.2} parent=5 // pred_fallthru
      _
    %p127 = scmp.lt.s32.totalorder %s10, 2
    // Predicated region
    $region17: #{conv2d_block.2} parent=5 // pred_check
      %p128 = pneg %p127
    $region18: #{conv2d_block.2} parent=5 // pred_check_branch
      %130 = sbr.rel (%p128) target = $region20
    $region19: #{conv2d_block.2} parent=5 // pred_region
      // Predicated region
      $region21: #{conv2d_block.2} parent=19 // pred_check
        %p131 = pneg %p30
      $region22: #{conv2d_block.2} parent=19 // pred_check_branch
        %133 = sbr.rel (%p131) target = $region24
      $region23: #{conv2d_block.2} parent=19 // pred_region
        %s134 = smul.u32 4, %s10
        %p135 = scmp.lt.s32.totalorder %s134, 7
        %s136 = scalar_select %p135, %s134, 7
        %s137 = smul.addr %s136, 20
        %s138 = smul.addr %s137, 8
        %s139 = scalar_lea.vmem %s0, %s138
        %s140 = smul.u32 4, %s10
      $region24: #{conv2d_block.2} parent=19 // pred_fallthru
        _
    $region20: #{conv2d_block.2} parent=5 // pred_fallthru
      _
    %p141 = scmp.le.s32.totalorder 1, %s10
    %p142 = scmp.lt.s32.totalorder %s10, 3
    %p143 = pnand %p141, %p142
    %p144 = pneg %p143
    // Predicated region
    $region25: #{conv2d_block.2} parent=5 // pred_check
      _
    $region26: #{conv2d_block.2} parent=5 // pred_check_branch
      %146 = sbr.rel (%p143) target = $region28
    $region27: #{conv2d_block.2} parent=5 // pred_region
      %s147 = ssub.s32 %s10, 1
      %s148 = smul.u32 4, %s15
      %p149 = scmp.lt.s32.totalorder %s148, 7
      %s150 = scalar_select %p149, %s148, 7
      %s151 = smul.addr %s150, 20
      %s152 = smul.addr %s151, 8
      %s153 = scalar_lea.vmem %s0, %s152
      %p154 = pneg %p36
      %p155 = pneg %p33
      %p156 = pneg %p57
      %p157 = pneg %p54
      %p158 = pneg %p83
      %p159 = pneg %p80
      %p160 = scmp.lt.s32.totalorder %s15, 1
      %s161 = scalar_select %p160, %s15, 1
      %s162 = smul.addr %s161, 8
      %s163 = smul.addr %s162, 8
      %s164 = scalar_lea.vmem %s2, %s163
      %p165 = pneg %p109
      %p166 = pneg %p106
      %p167 = scmp.lt.s32.totalorder %s15, 1
      %s168 = scalar_select %p167, %s15, 1
      %s169 = smul.addr %s168, 2
      %s170 = scalar_lea.vmem %s3, %s169
      %s171 = smul.u32 4, %s15
      %p172 = scmp.lt.s32.totalorder %s171, 7
      %s173 = scalar_select %p172, %s171, 7
      %s174 = smul.addr %s173, 20
      %s175 = smul.addr %s174, 8
      %s176 = scalar_lea.vmem %s0, %s175
      %s177 = smul.u32 4, %s15
      %p178 = scmp.lt.s32.totalorder %s15, 1
      %s179 = scalar_select %p178, %s15, 1
      %s180 = smul.addr %s179, 8
      %s181 = smul.addr %s180, 8
      %s182 = scalar_lea.vmem %s2, %s181
      %p183 = scmp.lt.s32.totalorder %s15, 1
      %s184 = scalar_select %p183, %s15, 1
      %s185 = smul.addr %s184, 2
      %s186 = scalar_lea.vmem %s3, %s185
      %v187 = vld [vmem:[%s176] sm:$0xff]
      %v188 = vld [vmem:[%s176 + $0x10] sm:$0xff]
      %v189 = vld [vmem:[%s176 + $0x20] sm:$0xff]
      %v190 = vld [vmem:[%s176 + $0x30] sm:$0xff]
      %v191 = vld [vmem:[%s176 + $0x40] sm:$0xff]
      %v192 = vld [vmem:[%s176 + $0x50] sm:$0xff]
      %v193 = vld [vmem:[%s176 + $0x60] sm:$0xff]
      %v194 = vld [vmem:[%s176 + $0x70] sm:$0xff]
      %v195 = vld [vmem:[%s1] sm:$0xf]
      %s196 = scalar_lea.vmem %s176, 160
      %v197 = vld [vmem:[%s196] sm:$0xff]
      %v198 = vld [vmem:[%s196 + $0x10] sm:$0xff]
      %v199 = vld [vmem:[%s196 + $0x20] sm:$0xff]
      %v200 = vld [vmem:[%s196 + $0x30] sm:$0xff]
      %v201 = vld [vmem:[%s196 + $0x40] sm:$0xff]
      %v202 = vld [vmem:[%s196 + $0x50] sm:$0xff]
      %v203 = vld [vmem:[%s196 + $0x60] sm:$0xff]
      %v204 = vld [vmem:[%s196 + $0x70] sm:$0xff]
      %s205 = scalar_lea.vmem %s1, 4
      %v206 = vld [vmem:[%s205] sm:$0xf]
      %vm207 = vcmask 31744
      %v209 = vsel %vm207, %v197, 0
      %v212 = vsel %vm207, %v198, 0
      %v215 = vsel %vm207, %v199, 0
      %v218 = vsel %vm207, %v200, 0
      %v221 = vsel %vm207, %v201, 0
      %v224 = vsel %vm207, %v202, 0
      %v227 = vsel %vm207, %v203, 0
      %v230 = vsel %vm207, %v204, 0
      %vm232 = vcmask 1043456
      %v234 = vsel %vm232, %v206, 0
      %236 = vmatprep.subr.mxu0 0.0
      %237 = vmatpush1.msra.mxu0 0.0
      %238 = vmatprep.subr.mxu0 0.0
      %239 = vmatpush1.msra.mxu0 0.0
      %240 = vmatprep.subr.mxu0 0.0
      %241 = vmatpush1.msra.mxu0 0.0
      %242 = vmatprep.subr.mxu0 0.0
      %243 = vmatpush1.msra.mxu0 0.0
      %244 = vmatprep.subr.mxu0 0.0
      %245 = vmatpush1.msra.mxu0 0.0
      %246 = vmatprep.subr.mxu0 0.0
      %247 = vmatpush1.msra.mxu0 0.0
      %248 = vmatprep.subr.mxu0 0.0
      %249 = vmatpush1.msra.mxu0 0.0
      %250 = vmatprep.subr.mxu0 0.0
      %251 = vmatpush1.msra.mxu0 0.0
      %252 = vmatprep.subr.mxu0 0.0
      %253 = vmatpush1.msra.mxu0 0.0
      %254 = vmatprep.subr.mxu0 0.0
      %255 = vmatpush1.msra.mxu0 0.0
      %256 = vmatprep.subr.mxu0 0.0
      %257 = vmatpush1.msra.mxu0 0.0
      %258 = vmatprep.subr.mxu0 0.0
      %259 = vmatpush1.msra.mxu0 0.0
      %260 = vmatprep.subr.mxu0 0.0
      %261 = vmatpush1.msra.mxu0 0.0
      %262 = vmatprep.subr.mxu0 0.0
      %263 = vmatpush1.msra.mxu0 0.0
      %264 = vmatprep.subr.mxu0 0.0
      %265 = vmatpush1.msra.mxu0 0.0
      %266 = vmatprep.subr.mxu0 0.0
      %267 = vmatpush1.msra.mxu0 %v234
      %268 = vmatprep.subr.mxu0 0.0
      %269 = vmatpush2.msra.mxu0 0.0
      %270 = vmatprep.subr.mxu0 0.0
      %271 = vmatpush2.msra.mxu0 0.0
      %272 = vmatprep.subr.mxu0 0.0
      %273 = vmatpush2.msra.mxu0 0.0
      %274 = vmatprep.subr.mxu0 0.0
      %275 = vmatpush2.msra.mxu0 0.0
      %276 = vmatprep.subr.mxu0 0.0
      %277 = vmatpush2.msra.mxu0 0.0
      %278 = vmatprep.subr.mxu0 0.0
      %279 = vmatpush2.msra.mxu0 0.0
      %280 = vmatprep.subr.mxu0 0.0
      %281 = vmatpush2.msra.mxu0 0.0
      %282 = vmatprep.subr.mxu0 0.0
      %283 = vmatpush2.msra.mxu0 0.0
      %284 = vmatprep.subr.mxu0 0.0
      %285 = vmatpush2.msra.mxu0 0.0
      %286 = vmatprep.subr.mxu0 0.0
      %287 = vmatpush2.msra.mxu0 0.0
      %288 = vmatprep.subr.mxu0 0.0
      %289 = vmatpush2.msra.mxu0 0.0
      %290 = vmatprep.subr.mxu0 0.0
      %291 = vmatpush2.msra.mxu0 0.0
      %292 = vmatprep.subr.mxu0 0.0
      %293 = vmatpush2.msra.mxu0 0.0
      %294 = vmatprep.subr.mxu0 0.0
      %295 = vmatpush2.msra.mxu0 0.0
      %296 = vmatprep.subr.mxu0 0.0
      %297 = vmatpush2.msra.mxu0 0.0
      %298 = vmatprep.subr.mxu0 0.0
      %299 = vmatpush2.msra.mxu0 0.0
      %300 = vmatprep.mubr.f32.mxu0 0.0
      %301 = vmatmul.mubr.f32.gmra.mxu0 %v209
      %v302 = vpop.f32.mrf.mxu0
      %v303 = vadd.f32 0.0, %v302
      %v304 = vpop.f32.mrf.mxu0
      %305 = vmatprep.mubr.f32.mxu0 0.0
      %306 = vmatmul.mubr.f32.gmra.mxu0 %v212
      %v307 = vpop.f32.mrf.mxu0
      %v308 = vadd.f32 0.0, %v307
      %v309 = vpop.f32.mrf.mxu0
      %310 = vmatprep.mubr.f32.mxu0 0.0
      %311 = vmatmul.mubr.f32.gmra.mxu0 %v215
      %v312 = vpop.f32.mrf.mxu0
      %v313 = vadd.f32 0.0, %v312
      %v314 = vpop.f32.mrf.mxu0
      %315 = vmatprep.mubr.f32.mxu0 0.0
      %316 = vmatmul.mubr.f32.gmra.mxu0 %v218
      %v317 = vpop.f32.mrf.mxu0
      %v318 = vadd.f32 0.0, %v317
      %v319 = vpop.f32.mrf.mxu0
      %320 = vmatprep.mubr.f32.mxu0 0.0
      %321 = vmatmul.mubr.f32.gmra.mxu0 %v221
      %v322 = vpop.f32.mrf.mxu0
      %v323 = vadd.f32 0.0, %v322
      %v324 = vpop.f32.mrf.mxu0
      %325 = vmatprep.mubr.f32.mxu0 0.0
      %326 = vmatmul.mubr.f32.gmra.mxu0 %v224
      %v327 = vpop.f32.mrf.mxu0
      %v328 = vadd.f32 0.0, %v327
      %v329 = vpop.f32.mrf.mxu0
      %330 = vmatprep.mubr.f32.mxu0 0.0
      %331 = vmatmul.mubr.f32.gmra.mxu0 %v227
      %v332 = vpop.f32.mrf.mxu0
      %v333 = vadd.f32 0.0, %v332
      %v334 = vpop.f32.mrf.mxu0
      %335 = vmatprep.mubr.f32.mxu0 0.0
      %336 = vmatmul.mubr.f32.gmra.mxu0 %v230
      %v337 = vpop.f32.mrf.mxu0
      %v338 = vadd.f32 0.0, %v337
      %v339 = vpop.f32.mrf.mxu0
      %340 = vdwg.mxu0
      %v342 = vsel %vm207, %v187, 0
      %v345 = vsel %vm207, %v188, 0
      %v348 = vsel %vm207, %v189, 0
      %v351 = vsel %vm207, %v190, 0
      %v354 = vsel %vm207, %v191, 0
      %v357 = vsel %vm207, %v192, 0
      %v360 = vsel %vm207, %v193, 0
      %v363 = vsel %vm207, %v194, 0
      %v366 = vsel %vm232, %v195, 0
      %368 = vmatprep.subr.mxu0 0.0
      %369 = vmatpush1.msra.mxu0 0.0
      %370 = vmatprep.subr.mxu0 0.0
      %371 = vmatpush1.msra.mxu0 0.0
      %372 = vmatprep.subr.mxu0 0.0
      %373 = vmatpush1.msra.mxu0 0.0
      %374 = vmatprep.subr.mxu0 0.0
      %375 = vmatpush1.msra.mxu0 0.0
      %376 = vmatprep.subr.mxu0 0.0
      %377 = vmatpush1.msra.mxu0 0.0
      %378 = vmatprep.subr.mxu0 0.0
      %379 = vmatpush1.msra.mxu0 0.0
      %380 = vmatprep.subr.mxu0 0.0
      %381 = vmatpush1.msra.mxu0 0.0
      %382 = vmatprep.subr.mxu0 0.0
      %383 = vmatpush1.msra.mxu0 0.0
      %384 = vmatprep.subr.mxu0 0.0
      %385 = vmatpush1.msra.mxu0 0.0
      %386 = vmatprep.subr.mxu0 0.0
      %387 = vmatpush1.msra.mxu0 0.0
      %388 = vmatprep.subr.mxu0 0.0
      %389 = vmatpush1.msra.mxu0 0.0
      %390 = vmatprep.subr.mxu0 0.0
      %391 = vmatpush1.msra.mxu0 0.0
      %392 = vmatprep.subr.mxu0 0.0
      %393 = vmatpush1.msra.mxu0 0.0
      %394 = vmatprep.subr.mxu0 0.0
      %395 = vmatpush1.msra.mxu0 0.0
      %396 = vmatprep.subr.mxu0 0.0
      %397 = vmatpush1.msra.mxu0 0.0
      %398 = vmatprep.subr.mxu0 0.0
      %399 = vmatpush1.msra.mxu0 %v366
      %400 = vmatprep.subr.mxu0 0.0
      %401 = vmatpush2.msra.mxu0 0.0
      %402 = vmatprep.subr.mxu0 0.0
      %403 = vmatpush2.msra.mxu0 0.0
      %404 = vmatprep.subr.mxu0 0.0
      %405 = vmatpush2.msra.mxu0 0.0
      %406 = vmatprep.subr.mxu0 0.0
      %407 = vmatpush2.msra.mxu0 0.0
      %408 = vmatprep.subr.mxu0 0.0
      %409 = vmatpush2.msra.mxu0 0.0
      %410 = vmatprep.subr.mxu0 0.0
      %411 = vmatpush2.msra.mxu0 0.0
      %412 = vmatprep.subr.mxu0 0.0
      %413 = vmatpush2.msra.mxu0 0.0
      %414 = vmatprep.subr.mxu0 0.0
      %415 = vmatpush2.msra.mxu0 0.0
      %416 = vmatprep.subr.mxu0 0.0
      %417 = vmatpush2.msra.mxu0 0.0
      %418 = vmatprep.subr.mxu0 0.0
      %419 = vmatpush2.msra.mxu0 0.0
      %420 = vmatprep.subr.mxu0 0.0
      %421 = vmatpush2.msra.mxu0 0.0
      %422 = vmatprep.subr.mxu0 0.0
      %423 = vmatpush2.msra.mxu0 0.0
      %424 = vmatprep.subr.mxu0 0.0
      %425 = vmatpush2.msra.mxu0 0.0
      %426 = vmatprep.subr.mxu0 0.0
      %427 = vmatpush2.msra.mxu0 0.0
      %428 = vmatprep.subr.mxu0 0.0
      %429 = vmatpush2.msra.mxu0 0.0
      %430 = vmatprep.subr.mxu0 0.0
      %431 = vmatpush2.msra.mxu0 0.0
      %432 = vmatprep.mubr.f32.mxu0 0.0
      %433 = vmatmul.mubr.f32.gmra.mxu0 %v342
      %v434 = vpop.f32.mrf.mxu0
      %v435 = vadd.f32 %v303, %v434
      %v436 = vpop.f32.mrf.mxu0
      %437 = vmatprep.mubr.f32.mxu0 0.0
      %438 = vmatmul.mubr.f32.gmra.mxu0 %v345
      %v439 = vpop.f32.mrf.mxu0
      %v440 = vadd.f32 %v308, %v439
      %v441 = vpop.f32.mrf.mxu0
      %442 = vmatprep.mubr.f32.mxu0 0.0
      %443 = vmatmul.mubr.f32.gmra.mxu0 %v348
      %v444 = vpop.f32.mrf.mxu0
      %v445 = vadd.f32 %v313, %v444
      %v446 = vpop.f32.mrf.mxu0
      %447 = vmatprep.mubr.f32.mxu0 0.0
      %448 = vmatmul.mubr.f32.gmra.mxu0 %v351
      %v449 = vpop.f32.mrf.mxu0
      %v450 = vadd.f32 %v318, %v449
      %v451 = vpop.f32.mrf.mxu0
      %452 = vmatprep.mubr.f32.mxu0 0.0
      %453 = vmatmul.mubr.f32.gmra.mxu0 %v354
      %v454 = vpop.f32.mrf.mxu0
      %v455 = vadd.f32 %v323, %v454
      %v456 = vpop.f32.mrf.mxu0
      %457 = vmatprep.mubr.f32.mxu0 0.0
      %458 = vmatmul.mubr.f32.gmra.mxu0 %v357
      %v459 = vpop.f32.mrf.mxu0
      %v460 = vadd.f32 %v328, %v459
      %v461 = vpop.f32.mrf.mxu0
      %462 = vmatprep.mubr.f32.mxu0 0.0
      %463 = vmatmul.mubr.f32.gmra.mxu0 %v360
      %v464 = vpop.f32.mrf.mxu0
      %v465 = vadd.f32 %v333, %v464
      %v466 = vpop.f32.mrf.mxu0
      %467 = vmatprep.mubr.f32.mxu0 0.0
      %468 = vmatmul.mubr.f32.gmra.mxu0 %v363
      %v469 = vpop.f32.mrf.mxu0
      %v470 = vadd.f32 %v338, %v469
      %v471 = vpop.f32.mrf.mxu0
      %472 = vdwg.mxu0
      %v473 = vld [vmem:[%s176 + $0x1] sm:$0xff]
      %v474 = vld [vmem:[%s176 + $0x11] sm:$0xff]
      %v475 = vld [vmem:[%s176 + $0x21] sm:$0xff]
      %v476 = vld [vmem:[%s176 + $0x31] sm:$0xff]
      %v477 = vld [vmem:[%s176 + $0x41] sm:$0xff]
      %v478 = vld [vmem:[%s176 + $0x51] sm:$0xff]
      %v479 = vld [vmem:[%s176 + $0x61] sm:$0xff]
      %v480 = vld [vmem:[%s176 + $0x71] sm:$0xff]
      %s481 = scalar_lea.vmem %s1, 8
      %v482 = vld [vmem:[%s481] sm:$0xf]
      %v484 = vsel %vm207, %v473, 0
      %v487 = vsel %vm207, %v474, 0
      %v490 = vsel %vm207, %v475, 0
      %v493 = vsel %vm207, %v476, 0
      %v496 = vsel %vm207, %v477, 0
      %v499 = vsel %vm207, %v478, 0
      %v502 = vsel %vm207, %v479, 0
      %v505 = vsel %vm207, %v480, 0
      %v508 = vsel %vm232, %v482, 0
      %510 = vmatprep.subr.mxu0 0.0
      %511 = vmatpush1.msra.mxu0 0.0
      %512 = vmatprep.subr.mxu0 0.0
      %513 = vmatpush1.msra.mxu0 0.0
      %514 = vmatprep.subr.mxu0 0.0
      %515 = vmatpush1.msra.mxu0 0.0
      %516 = vmatprep.subr.mxu0 0.0
      %517 = vmatpush1.msra.mxu0 0.0
      %518 = vmatprep.subr.mxu0 0.0
      %519 = vmatpush1.msra.mxu0 0.0
      %520 = vmatprep.subr.mxu0 0.0
      %521 = vmatpush1.msra.mxu0 0.0
      %522 = vmatprep.subr.mxu0 0.0
      %523 = vmatpush1.msra.mxu0 0.0
      %524 = vmatprep.subr.mxu0 0.0
      %525 = vmatpush1.msra.mxu0 0.0
      %526 = vmatprep.subr.mxu0 0.0
      %527 = vmatpush1.msra.mxu0 0.0
      %528 = vmatprep.subr.mxu0 0.0
      %529 = vmatpush1.msra.mxu0 0.0
      %530 = vmatprep.subr.mxu0 0.0
      %531 = vmatpush1.msra.mxu0 0.0
      %532 = vmatprep.subr.mxu0 0.0
      %533 = vmatpush1.msra.mxu0 0.0
      %534 = vmatprep.subr.mxu0 0.0
      %535 = vmatpush1.msra.mxu0 0.0
      %536 = vmatprep.subr.mxu0 0.0
      %537 = vmatpush1.msra.mxu0 0.0
      %538 = vmatprep.subr.mxu0 0.0
      %539 = vmatpush1.msra.mxu0 0.0
      %540 = vmatprep.subr.mxu0 0.0
      %541 = vmatpush1.msra.mxu0 %v508
      %542 = vmatprep.subr.mxu0 0.0
      %543 = vmatpush2.msra.mxu0 0.0
      %544 = vmatprep.subr.mxu0 0.0
      %545 = vmatpush2.msra.mxu0 0.0
      %546 = vmatprep.subr.mxu0 0.0
      %547 = vmatpush2.msra.mxu0 0.0
      %548 = vmatprep.subr.mxu0 0.0
      %549 = vmatpush2.msra.mxu0 0.0
      %550 = vmatprep.subr.mxu0 0.0
      %551 = vmatpush2.msra.mxu0 0.0
      %552 = vmatprep.subr.mxu0 0.0
      %553 = vmatpush2.msra.mxu0 0.0
      %554 = vmatprep.subr.mxu0 0.0
      %555 = vmatpush2.msra.mxu0 0.0
      %556 = vmatprep.subr.mxu0 0.0
      %557 = vmatpush2.msra.mxu0 0.0
      %558 = vmatprep.subr.mxu0 0.0
      %559 = vmatpush2.msra.mxu0 0.0
      %560 = vmatprep.subr.mxu0 0.0
      %561 = vmatpush2.msra.mxu0 0.0
      %562 = vmatprep.subr.mxu0 0.0
      %563 = vmatpush2.msra.mxu0 0.0
      %564 = vmatprep.subr.mxu0 0.0
      %565 = vmatpush2.msra.mxu0 0.0
      %566 = vmatprep.subr.mxu0 0.0
      %567 = vmatpush2.msra.mxu0 0.0
      %568 = vmatprep.subr.mxu0 0.0
      %569 = vmatpush2.msra.mxu0 0.0
      %570 = vmatprep.subr.mxu0 0.0
      %571 = vmatpush2.msra.mxu0 0.0
      %572 = vmatprep.subr.mxu0 0.0
      %573 = vmatpush2.msra.mxu0 0.0
      %574 = vmatprep.mubr.f32.mxu0 0.0
      %575 = vmatmul.mubr.f32.gmra.mxu0 %v484
      %v576 = vpop.f32.mrf.mxu0
      %v577 = vadd.f32 0.0, %v576
      %v578 = vpop.f32.mrf.mxu0
      %579 = vmatprep.mubr.f32.mxu0 0.0
      %580 = vmatmul.mubr.f32.gmra.mxu0 %v487
      %v581 = vpop.f32.mrf.mxu0
      %v582 = vadd.f32 0.0, %v581
      %v583 = vpop.f32.mrf.mxu0
      %584 = vmatprep.mubr.f32.mxu0 0.0
      %585 = vmatmul.mubr.f32.gmra.mxu0 %v490
      %v586 = vpop.f32.mrf.mxu0
      %v587 = vadd.f32 0.0, %v586
      %v588 = vpop.f32.mrf.mxu0
      %589 = vmatprep.mubr.f32.mxu0 0.0
      %590 = vmatmul.mubr.f32.gmra.mxu0 %v493
      %v591 = vpop.f32.mrf.mxu0
      %v592 = vadd.f32 0.0, %v591
      %v593 = vpop.f32.mrf.mxu0
      %594 = vmatprep.mubr.f32.mxu0 0.0
      %595 = vmatmul.mubr.f32.gmra.mxu0 %v496
      %v596 = vpop.f32.mrf.mxu0
      %v597 = vadd.f32 0.0, %v596
      %v598 = vpop.f32.mrf.mxu0
      %599 = vmatprep.mubr.f32.mxu0 0.0
      %600 = vmatmul.mubr.f32.gmra.mxu0 %v499
      %v601 = vpop.f32.mrf.mxu0
      %v602 = vadd.f32 0.0, %v601
      %v603 = vpop.f32.mrf.mxu0
      %604 = vmatprep.mubr.f32.mxu0 0.0
      %605 = vmatmul.mubr.f32.gmra.mxu0 %v502
      %v606 = vpop.f32.mrf.mxu0
      %v607 = vadd.f32 0.0, %v606
      %v608 = vpop.f32.mrf.mxu0
      %609 = vmatprep.mubr.f32.mxu0 0.0
      %610 = vmatmul.mubr.f32.gmra.mxu0 %v505
      %v611 = vpop.f32.mrf.mxu0
      %v612 = vadd.f32 0.0, %v611
      %v613 = vpop.f32.mrf.mxu0
      %614 = vdwg.mxu0
      %v615 = vadd.f32 %v435, %v577
      %v616 = vadd.f32 %v440, %v582
      %v617 = vadd.f32 %v445, %v587
      %v618 = vadd.f32 %v450, %v592
      %v619 = vadd.f32 %v455, %v597
      %v620 = vadd.f32 %v460, %v602
      %v621 = vadd.f32 %v465, %v607
      %v622 = vadd.f32 %v470, %v612
      %v623 = vld [vmem:[%s196 + $0x1] sm:$0xff]
      %v624 = vld [vmem:[%s196 + $0x11] sm:$0xff]
      %v625 = vld [vmem:[%s196 + $0x21] sm:$0xff]
      %v626 = vld [vmem:[%s196 + $0x31] sm:$0xff]
      %v627 = vld [vmem:[%s196 + $0x41] sm:$0xff]
      %v628 = vld [vmem:[%s196 + $0x51] sm:$0xff]
      %v629 = vld [vmem:[%s196 + $0x61] sm:$0xff]
      %v630 = vld [vmem:[%s196 + $0x71] sm:$0xff]
      %s631 = scalar_lea.vmem %s1, 12
      %v632 = vld [vmem:[%s631] sm:$0xf]
      %v634 = vsel %vm207, %v623, 0
      %v637 = vsel %vm207, %v624, 0
      %v640 = vsel %vm207, %v625, 0
      %v643 = vsel %vm207, %v626, 0
      %v646 = vsel %vm207, %v627, 0
      %v649 = vsel %vm207, %v628, 0
      %v652 = vsel %vm207, %v629, 0
      %v655 = vsel %vm207, %v630, 0
      %v658 = vsel %vm232, %v632, 0
      %660 = vmatprep.subr.mxu0 0.0
      %661 = vmatpush1.msra.mxu0 0.0
      %662 = vmatprep.subr.mxu0 0.0
      %663 = vmatpush1.msra.mxu0 0.0
      %664 = vmatprep.subr.mxu0 0.0
      %665 = vmatpush1.msra.mxu0 0.0
      %666 = vmatprep.subr.mxu0 0.0
      %667 = vmatpush1.msra.mxu0 0.0
      %668 = vmatprep.subr.mxu0 0.0
      %669 = vmatpush1.msra.mxu0 0.0
      %670 = vmatprep.subr.mxu0 0.0
      %671 = vmatpush1.msra.mxu0 0.0
      %672 = vmatprep.subr.mxu0 0.0
      %673 = vmatpush1.msra.mxu0 0.0
      %674 = vmatprep.subr.mxu0 0.0
      %675 = vmatpush1.msra.mxu0 0.0
      %676 = vmatprep.subr.mxu0 0.0
      %677 = vmatpush1.msra.mxu0 0.0
      %678 = vmatprep.subr.mxu0 0.0
      %679 = vmatpush1.msra.mxu0 0.0
      %680 = vmatprep.subr.mxu0 0.0
      %681 = vmatpush1.msra.mxu0 0.0
      %682 = vmatprep.subr.mxu0 0.0
      %683 = vmatpush1.msra.mxu0 0.0
      %684 = vmatprep.subr.mxu0 0.0
      %685 = vmatpush1.msra.mxu0 0.0
      %686 = vmatprep.subr.mxu0 0.0
      %687 = vmatpush1.msra.mxu0 0.0
      %688 = vmatprep.subr.mxu0 0.0
      %689 = vmatpush1.msra.mxu0 0.0
      %690 = vmatprep.subr.mxu0 0.0
      %691 = vmatpush1.msra.mxu0 %v658
      %692 = vmatprep.subr.mxu0 0.0
      %693 = vmatpush2.msra.mxu0 0.0
      %694 = vmatprep.subr.mxu0 0.0
      %695 = vmatpush2.msra.mxu0 0.0
      %696 = vmatprep.subr.mxu0 0.0
      %697 = vmatpush2.msra.mxu0 0.0
      %698 = vmatprep.subr.mxu0 0.0
      %699 = vmatpush2.msra.mxu0 0.0
      %700 = vmatprep.subr.mxu0 0.0
      %701 = vmatpush2.msra.mxu0 0.0
      %702 = vmatprep.subr.mxu0 0.0
      %703 = vmatpush2.msra.mxu0 0.0
      %704 = vmatprep.subr.mxu0 0.0
      %705 = vmatpush2.msra.mxu0 0.0
      %706 = vmatprep.subr.mxu0 0.0
      %707 = vmatpush2.msra.mxu0 0.0
      %708 = vmatprep.subr.mxu0 0.0
      %709 = vmatpush2.msra.mxu0 0.0
      %710 = vmatprep.subr.mxu0 0.0
      %711 = vmatpush2.msra.mxu0 0.0
      %712 = vmatprep.subr.mxu0 0.0
      %713 = vmatpush2.msra.mxu0 0.0
      %714 = vmatprep.subr.mxu0 0.0
      %715 = vmatpush2.msra.mxu0 0.0
      %716 = vmatprep.subr.mxu0 0.0
      %717 = vmatpush2.msra.mxu0 0.0
      %718 = vmatprep.subr.mxu0 0.0
      %719 = vmatpush2.msra.mxu0 0.0
      %720 = vmatprep.subr.mxu0 0.0
      %721 = vmatpush2.msra.mxu0 0.0
      %722 = vmatprep.subr.mxu0 0.0
      %723 = vmatpush2.msra.mxu0 0.0
      %724 = vmatprep.mubr.f32.mxu0 0.0
      %725 = vmatmul.mubr.f32.gmra.mxu0 %v634
      %v726 = vpop.f32.mrf.mxu0
      %v727 = vadd.f32 0.0, %v726
      %v728 = vpop.f32.mrf.mxu0
      %729 = vmatprep.mubr.f32.mxu0 0.0
      %730 = vmatmul.mubr.f32.gmra.mxu0 %v637
      %v731 = vpop.f32.mrf.mxu0
      %v732 = vadd.f32 0.0, %v731
      %v733 = vpop.f32.mrf.mxu0
      %734 = vmatprep.mubr.f32.mxu0 0.0
      %735 = vmatmul.mubr.f32.gmra.mxu0 %v640
      %v736 = vpop.f32.mrf.mxu0
      %v737 = vadd.f32 0.0, %v736
      %v738 = vpop.f32.mrf.mxu0
      %739 = vmatprep.mubr.f32.mxu0 0.0
      %740 = vmatmul.mubr.f32.gmra.mxu0 %v643
      %v741 = vpop.f32.mrf.mxu0
      %v742 = vadd.f32 0.0, %v741
      %v743 = vpop.f32.mrf.mxu0
      %744 = vmatprep.mubr.f32.mxu0 0.0
      %745 = vmatmul.mubr.f32.gmra.mxu0 %v646
      %v746 = vpop.f32.mrf.mxu0
      %v747 = vadd.f32 0.0, %v746
      %v748 = vpop.f32.mrf.mxu0
      %749 = vmatprep.mubr.f32.mxu0 0.0
      %750 = vmatmul.mubr.f32.gmra.mxu0 %v649
      %v751 = vpop.f32.mrf.mxu0
      %v752 = vadd.f32 0.0, %v751
      %v753 = vpop.f32.mrf.mxu0
      %754 = vmatprep.mubr.f32.mxu0 0.0
      %755 = vmatmul.mubr.f32.gmra.mxu0 %v652
      %v756 = vpop.f32.mrf.mxu0
      %v757 = vadd.f32 0.0, %v756
      %v758 = vpop.f32.mrf.mxu0
      %759 = vmatprep.mubr.f32.mxu0 0.0
      %760 = vmatmul.mubr.f32.gmra.mxu0 %v655
      %v761 = vpop.f32.mrf.mxu0
      %v762 = vadd.f32 0.0, %v761
      %v763 = vpop.f32.mrf.mxu0
      %764 = vdwg.mxu0
      %v765 = vadd.f32 %v615, %v727
      %v766 = vadd.f32 %v616, %v732
      %v767 = vadd.f32 %v617, %v737
      %v768 = vadd.f32 %v618, %v742
      %v769 = vadd.f32 %v619, %v747
      %v770 = vadd.f32 %v620, %v752
      %v771 = vadd.f32 %v621, %v757
      %v772 = vadd.f32 %v622, %v762
      %v773 = vld [vmem:[%s176 + $0x2] sm:$0xff]
      %v774 = vld [vmem:[%s176 + $0x12] sm:$0xff]
      %v775 = vld [vmem:[%s176 + $0x22] sm:$0xff]
      %v776 = vld [vmem:[%s176 + $0x32] sm:$0xff]
      %v777 = vld [vmem:[%s176 + $0x42] sm:$0xff]
      %v778 = vld [vmem:[%s176 + $0x52] sm:$0xff]
      %v779 = vld [vmem:[%s176 + $0x62] sm:$0xff]
      %v780 = vld [vmem:[%s176 + $0x72] sm:$0xff]
      %s781 = scalar_lea.vmem %s1, 16
      %v782 = vld [vmem:[%s781] sm:$0xf]
      %v784 = vsel %vm207, %v773, 0
      %v787 = vsel %vm207, %v774, 0
      %v790 = vsel %vm207, %v775, 0
      %v793 = vsel %vm207, %v776, 0
      %v796 = vsel %vm207, %v777, 0
      %v799 = vsel %vm207, %v778, 0
      %v802 = vsel %vm207, %v779, 0
      %v805 = vsel %vm207, %v780, 0
      %v808 = vsel %vm232, %v782, 0
      %810 = vmatprep.subr.mxu0 0.0
      %811 = vmatpush1.msra.mxu0 0.0
      %812 = vmatprep.subr.mxu0 0.0
      %813 = vmatpush1.msra.mxu0 0.0
      %814 = vmatprep.subr.mxu0 0.0
      %815 = vmatpush1.msra.mxu0 0.0
      %816 = vmatprep.subr.mxu0 0.0
      %817 = vmatpush1.msra.mxu0 0.0
      %818 = vmatprep.subr.mxu0 0.0
      %819 = vmatpush1.msra.mxu0 0.0
      %820 = vmatprep.subr.mxu0 0.0
      %821 = vmatpush1.msra.mxu0 0.0
      %822 = vmatprep.subr.mxu0 0.0
      %823 = vmatpush1.msra.mxu0 0.0
      %824 = vmatprep.subr.mxu0 0.0
      %825 = vmatpush1.msra.mxu0 0.0
      %826 = vmatprep.subr.mxu0 0.0
      %827 = vmatpush1.msra.mxu0 0.0
      %828 = vmatprep.subr.mxu0 0.0
      %829 = vmatpush1.msra.mxu0 0.0
      %830 = vmatprep.subr.mxu0 0.0
      %831 = vmatpush1.msra.mxu0 0.0
      %832 = vmatprep.subr.mxu0 0.0
      %833 = vmatpush1.msra.mxu0 0.0
      %834 = vmatprep.subr.mxu0 0.0
      %835 = vmatpush1.msra.mxu0 0.0
      %836 = vmatprep.subr.mxu0 0.0
      %837 = vmatpush1.msra.mxu0 0.0
      %838 = vmatprep.subr.mxu0 0.0
      %839 = vmatpush1.msra.mxu0 0.0
      %840 = vmatprep.subr.mxu0 0.0
      %841 = vmatpush1.msra.mxu0 %v808
      %842 = vmatprep.subr.mxu0 0.0
      %843 = vmatpush2.msra.mxu0 0.0
      %844 = vmatprep.subr.mxu0 0.0
      %845 = vmatpush2.msra.mxu0 0.0
      %846 = vmatprep.subr.mxu0 0.0
      %847 = vmatpush2.msra.mxu0 0.0
      %848 = vmatprep.subr.mxu0 0.0
      %849 = vmatpush2.msra.mxu0 0.0
      %850 = vmatprep.subr.mxu0 0.0
      %851 = vmatpush2.msra.mxu0 0.0
      %852 = vmatprep.subr.mxu0 0.0
      %853 = vmatpush2.msra.mxu0 0.0
      %854 = vmatprep.subr.mxu0 0.0
      %855 = vmatpush2.msra.mxu0 0.0
      %856 = vmatprep.subr.mxu0 0.0
      %857 = vmatpush2.msra.mxu0 0.0
      %858 = vmatprep.subr.mxu0 0.0
      %859 = vmatpush2.msra.mxu0 0.0
      %860 = vmatprep.subr.mxu0 0.0
      %861 = vmatpush2.msra.mxu0 0.0
      %862 = vmatprep.subr.mxu0 0.0
      %863 = vmatpush2.msra.mxu0 0.0
      %864 = vmatprep.subr.mxu0 0.0
      %865 = vmatpush2.msra.mxu0 0.0
      %866 = vmatprep.subr.mxu0 0.0
      %867 = vmatpush2.msra.mxu0 0.0
      %868 = vmatprep.subr.mxu0 0.0
      %869 = vmatpush2.msra.mxu0 0.0
      %870 = vmatprep.subr.mxu0 0.0
      %871 = vmatpush2.msra.mxu0 0.0
      %872 = vmatprep.subr.mxu0 0.0
      %873 = vmatpush2.msra.mxu0 0.0
      %874 = vmatprep.mubr.f32.mxu0 0.0
      %875 = vmatmul.mubr.f32.gmra.mxu0 %v784
      %v876 = vpop.f32.mrf.mxu0
      %v877 = vadd.f32 0.0, %v876
      %v878 = vpop.f32.mrf.mxu0
      %879 = vmatprep.mubr.f32.mxu0 0.0
      %880 = vmatmul.mubr.f32.gmra.mxu0 %v787
      %v881 = vpop.f32.mrf.mxu0
      %v882 = vadd.f32 0.0, %v881
      %v883 = vpop.f32.mrf.mxu0
      %884 = vmatprep.mubr.f32.mxu0 0.0
      %885 = vmatmul.mubr.f32.gmra.mxu0 %v790
      %v886 = vpop.f32.mrf.mxu0
      %v887 = vadd.f32 0.0, %v886
      %v888 = vpop.f32.mrf.mxu0
      %889 = vmatprep.mubr.f32.mxu0 0.0
      %890 = vmatmul.mubr.f32.gmra.mxu0 %v793
      %v891 = vpop.f32.mrf.mxu0
      %v892 = vadd.f32 0.0, %v891
      %v893 = vpop.f32.mrf.mxu0
      %894 = vmatprep.mubr.f32.mxu0 0.0
      %895 = vmatmul.mubr.f32.gmra.mxu0 %v796
      %v896 = vpop.f32.mrf.mxu0
      %v897 = vadd.f32 0.0, %v896
      %v898 = vpop.f32.mrf.mxu0
      %899 = vmatprep.mubr.f32.mxu0 0.0
      %900 = vmatmul.mubr.f32.gmra.mxu0 %v799
      %v901 = vpop.f32.mrf.mxu0
      %v902 = vadd.f32 0.0, %v901
      %v903 = vpop.f32.mrf.mxu0
      %904 = vmatprep.mubr.f32.mxu0 0.0
      %905 = vmatmul.mubr.f32.gmra.mxu0 %v802
      %v906 = vpop.f32.mrf.mxu0
      %v907 = vadd.f32 0.0, %v906
      %v908 = vpop.f32.mrf.mxu0
      %909 = vmatprep.mubr.f32.mxu0 0.0
      %910 = vmatmul.mubr.f32.gmra.mxu0 %v805
      %v911 = vpop.f32.mrf.mxu0
      %v912 = vadd.f32 0.0, %v911
      %v913 = vpop.f32.mrf.mxu0
      %914 = vdwg.mxu0
      %v915 = vadd.f32 %v765, %v877
      %v916 = vadd.f32 %v766, %v882
      %v917 = vadd.f32 %v767, %v887
      %v918 = vadd.f32 %v768, %v892
      %v919 = vadd.f32 %v769, %v897
      %v920 = vadd.f32 %v770, %v902
      %v921 = vadd.f32 %v771, %v907
      %v922 = vadd.f32 %v772, %v912
      %s923 = scalar_lea.vmem %s176, 320
      %v924 = vld [vmem:[%s923] sm:$0xff]
      %v925 = vld [vmem:[%s923 + $0x10] sm:$0xff]
      %v926 = vld [vmem:[%s923 + $0x20] sm:$0xff]
      %v927 = vld [vmem:[%s923 + $0x30] sm:$0xff]
      %v928 = vld [vmem:[%s923 + $0x40] sm:$0xff]
      %v929 = vld [vmem:[%s923 + $0x50] sm:$0xff]
      %v930 = vld [vmem:[%s923 + $0x60] sm:$0xff]
      %v931 = vld [vmem:[%s923 + $0x70] sm:$0xff]
      %s932 = scalar_lea.vmem %s1, 20
      %v933 = vld [vmem:[%s932] sm:$0xf]
      %v935 = vsel %vm207, %v924, 0
      %v938 = vsel %vm207, %v925, 0
      %v941 = vsel %vm207, %v926, 0
      %v944 = vsel %vm207, %v927, 0
      %v947 = vsel %vm207, %v928, 0
      %v950 = vsel %vm207, %v929, 0
      %v953 = vsel %vm207, %v930, 0
      %v956 = vsel %vm207, %v931, 0
      %v959 = vsel %vm232, %v933, 0
      %961 = vmatprep.subr.mxu0 0.0
      %962 = vmatpush1.msra.mxu0 0.0
      %963 = vmatprep.subr.mxu0 0.0
      %964 = vmatpush1.msra.mxu0 0.0
      %965 = vmatprep.subr.mxu0 0.0
      %966 = vmatpush1.msra.mxu0 0.0
      %967 = vmatprep.subr.mxu0 0.0
      %968 = vmatpush1.msra.mxu0 0.0
      %969 = vmatprep.subr.mxu0 0.0
      %970 = vmatpush1.msra.mxu0 0.0
      %971 = vmatprep.subr.mxu0 0.0
      %972 = vmatpush1.msra.mxu0 0.0
      %973 = vmatprep.subr.mxu0 0.0
      %974 = vmatpush1.msra.mxu0 0.0
      %975 = vmatprep.subr.mxu0 0.0
      %976 = vmatpush1.msra.mxu0 0.0
      %977 = vmatprep.subr.mxu0 0.0
      %978 = vmatpush1.msra.mxu0 0.0
      %979 = vmatprep.subr.mxu0 0.0
      %980 = vmatpush1.msra.mxu0 0.0
      %981 = vmatprep.subr.mxu0 0.0
      %982 = vmatpush1.msra.mxu0 0.0
      %983 = vmatprep.subr.mxu0 0.0
      %984 = vmatpush1.msra.mxu0 0.0
      %985 = vmatprep.subr.mxu0 0.0
      %986 = vmatpush1.msra.mxu0 0.0
      %987 = vmatprep.subr.mxu0 0.0
      %988 = vmatpush1.msra.mxu0 0.0
      %989 = vmatprep.subr.mxu0 0.0
      %990 = vmatpush1.msra.mxu0 0.0
      %991 = vmatprep.subr.mxu0 0.0
      %992 = vmatpush1.msra.mxu0 %v959
      %993 = vmatprep.subr.mxu0 0.0
      %994 = vmatpush2.msra.mxu0 0.0
      %995 = vmatprep.subr.mxu0 0.0
      %996 = vmatpush2.msra.mxu0 0.0
      %997 = vmatprep.subr.mxu0 0.0
      %998 = vmatpush2.msra.mxu0 0.0
      %999 = vmatprep.subr.mxu0 0.0
      %1000 = vmatpush2.msra.mxu0 0.0
      %1001 = vmatprep.subr.mxu0 0.0
      %1002 = vmatpush2.msra.mxu0 0.0
      %1003 = vmatprep.subr.mxu0 0.0
      %1004 = vmatpush2.msra.mxu0 0.0
      %1005 = vmatprep.subr.mxu0 0.0
      %1006 = vmatpush2.msra.mxu0 0.0
      %1007 = vmatprep.subr.mxu0 0.0
      %1008 = vmatpush2.msra.mxu0 0.0
      %1009 = vmatprep.subr.mxu0 0.0
      %1010 = vmatpush2.msra.mxu0 0.0
      %1011 = vmatprep.subr.mxu0 0.0
      %1012 = vmatpush2.msra.mxu0 0.0
      %1013 = vmatprep.subr.mxu0 0.0
      %1014 = vmatpush2.msra.mxu0 0.0
      %1015 = vmatprep.subr.mxu0 0.0
      %1016 = vmatpush2.msra.mxu0 0.0
      %1017 = vmatprep.subr.mxu0 0.0
      %1018 = vmatpush2.msra.mxu0 0.0
      %1019 = vmatprep.subr.mxu0 0.0
      %1020 = vmatpush2.msra.mxu0 0.0
      %1021 = vmatprep.subr.mxu0 0.0
      %1022 = vmatpush2.msra.mxu0 0.0
      %1023 = vmatprep.subr.mxu0 0.0
      %1024 = vmatpush2.msra.mxu0 0.0
      %1025 = vmatprep.mubr.f32.mxu0 0.0
      %1026 = vmatmul.mubr.f32.gmra.mxu0 %v935
      %v1027 = vpop.f32.mrf.mxu0
      %v1028 = vadd.f32 0.0, %v1027
      %v1029 = vpop.f32.mrf.mxu0
      %1030 = vmatprep.mubr.f32.mxu0 0.0
      %1031 = vmatmul.mubr.f32.gmra.mxu0 %v938
      %v1032 = vpop.f32.mrf.mxu0
      %v1033 = vadd.f32 0.0, %v1032
      %v1034 = vpop.f32.mrf.mxu0
      %1035 = vmatprep.mubr.f32.mxu0 0.0
      %1036 = vmatmul.mubr.f32.gmra.mxu0 %v941
      %v1037 = vpop.f32.mrf.mxu0
      %v1038 = vadd.f32 0.0, %v1037
      %v1039 = vpop.f32.mrf.mxu0
      %1040 = vmatprep.mubr.f32.mxu0 0.0
      %1041 = vmatmul.mubr.f32.gmra.mxu0 %v944
      %v1042 = vpop.f32.mrf.mxu0
      %v1043 = vadd.f32 0.0, %v1042
      %v1044 = vpop.f32.mrf.mxu0
      %1045 = vmatprep.mubr.f32.mxu0 0.0
      %1046 = vmatmul.mubr.f32.gmra.mxu0 %v947
      %v1047 = vpop.f32.mrf.mxu0
      %v1048 = vadd.f32 0.0, %v1047
      %v1049 = vpop.f32.mrf.mxu0
      %1050 = vmatprep.mubr.f32.mxu0 0.0
      %1051 = vmatmul.mubr.f32.gmra.mxu0 %v950
      %v1052 = vpop.f32.mrf.mxu0
      %v1053 = vadd.f32 0.0, %v1052
      %v1054 = vpop.f32.mrf.mxu0
      %1055 = vmatprep.mubr.f32.mxu0 0.0
      %1056 = vmatmul.mubr.f32.gmra.mxu0 %v953
      %v1057 = vpop.f32.mrf.mxu0
      %v1058 = vadd.f32 0.0, %v1057
      %v1059 = vpop.f32.mrf.mxu0
      %1060 = vmatprep.mubr.f32.mxu0 0.0
      %1061 = vmatmul.mubr.f32.gmra.mxu0 %v956
      %v1062 = vpop.f32.mrf.mxu0
      %v1063 = vadd.f32 0.0, %v1062
      %v1064 = vpop.f32.mrf.mxu0
      %1065 = vdwg.mxu0
      %v1066 = vadd.f32 %v915, %v1028
      %v1067 = vadd.f32 %v916, %v1033
      %v1068 = vadd.f32 %v917, %v1038
      %v1069 = vadd.f32 %v918, %v1043
      %v1070 = vadd.f32 %v919, %v1048
      %v1071 = vadd.f32 %v920, %v1053
      %v1072 = vadd.f32 %v921, %v1058
      %v1073 = vadd.f32 %v922, %v1063
      %s1074 = scalar_lea.vmem %s176, 480
      %v1075 = vld [vmem:[%s1074] sm:$0xff]
      %v1076 = vld [vmem:[%s1074 + $0x10] sm:$0xff]
      %v1077 = vld [vmem:[%s1074 + $0x20] sm:$0xff]
      %v1078 = vld [vmem:[%s1074 + $0x30] sm:$0xff]
      %v1079 = vld [vmem:[%s1074 + $0x40] sm:$0xff]
      %v1080 = vld [vmem:[%s1074 + $0x50] sm:$0xff]
      %v1081 = vld [vmem:[%s1074 + $0x60] sm:$0xff]
      %v1082 = vld [vmem:[%s1074 + $0x70] sm:$0xff]
      %s1083 = scalar_lea.vmem %s1, 24
      %v1084 = vld [vmem:[%s1083] sm:$0xf]
      %v1086 = vsel %vm207, %v1075, 0
      %v1089 = vsel %vm207, %v1076, 0
      %v1092 = vsel %vm207, %v1077, 0
      %v1095 = vsel %vm207, %v1078, 0
      %v1098 = vsel %vm207, %v1079, 0
      %v1101 = vsel %vm207, %v1080, 0
      %v1104 = vsel %vm207, %v1081, 0
      %v1107 = vsel %vm207, %v1082, 0
      %v1110 = vsel %vm232, %v1084, 0
      %1112 = vmatprep.subr.mxu0 0.0
      %1113 = vmatpush1.msra.mxu0 0.0
      %1114 = vmatprep.subr.mxu0 0.0
      %1115 = vmatpush1.msra.mxu0 0.0
      %1116 = vmatprep.subr.mxu0 0.0
      %1117 = vmatpush1.msra.mxu0 0.0
      %1118 = vmatprep.subr.mxu0 0.0
      %1119 = vmatpush1.msra.mxu0 0.0
      %1120 = vmatprep.subr.mxu0 0.0
      %1121 = vmatpush1.msra.mxu0 0.0
      %1122 = vmatprep.subr.mxu0 0.0
      %1123 = vmatpush1.msra.mxu0 0.0
      %1124 = vmatprep.subr.mxu0 0.0
      %1125 = vmatpush1.msra.mxu0 0.0
      %1126 = vmatprep.subr.mxu0 0.0
      %1127 = vmatpush1.msra.mxu0 0.0
      %1128 = vmatprep.subr.mxu0 0.0
      %1129 = vmatpush1.msra.mxu0 0.0
      %1130 = vmatprep.subr.mxu0 0.0
      %1131 = vmatpush1.msra.mxu0 0.0
      %1132 = vmatprep.subr.mxu0 0.0
      %1133 = vmatpush1.msra.mxu0 0.0
      %1134 = vmatprep.subr.mxu0 0.0
      %1135 = vmatpush1.msra.mxu0 0.0
      %1136 = vmatprep.subr.mxu0 0.0
      %1137 = vmatpush1.msra.mxu0 0.0
      %1138 = vmatprep.subr.mxu0 0.0
      %1139 = vmatpush1.msra.mxu0 0.0
      %1140 = vmatprep.subr.mxu0 0.0
      %1141 = vmatpush1.msra.mxu0 0.0
      %1142 = vmatprep.subr.mxu0 0.0
      %1143 = vmatpush1.msra.mxu0 %v1110
      %1144 = vmatprep.subr.mxu0 0.0
      %1145 = vmatpush2.msra.mxu0 0.0
      %1146 = vmatprep.subr.mxu0 0.0
      %1147 = vmatpush2.msra.mxu0 0.0
      %1148 = vmatprep.subr.mxu0 0.0
      %1149 = vmatpush2.msra.mxu0 0.0
      %1150 = vmatprep.subr.mxu0 0.0
      %1151 = vmatpush2.msra.mxu0 0.0
      %1152 = vmatprep.subr.mxu0 0.0
      %1153 = vmatpush2.msra.mxu0 0.0
      %1154 = vmatprep.subr.mxu0 0.0
      %1155 = vmatpush2.msra.mxu0 0.0
      %1156 = vmatprep.subr.mxu0 0.0
      %1157 = vmatpush2.msra.mxu0 0.0
      %1158 = vmatprep.subr.mxu0 0.0
      %1159 = vmatpush2.msra.mxu0 0.0
      %1160 = vmatprep.subr.mxu0 0.0
      %1161 = vmatpush2.msra.mxu0 0.0
      %1162 = vmatprep.subr.mxu0 0.0
      %1163 = vmatpush2.msra.mxu0 0.0
      %1164 = vmatprep.subr.mxu0 0.0
      %1165 = vmatpush2.msra.mxu0 0.0
      %1166 = vmatprep.subr.mxu0 0.0
      %1167 = vmatpush2.msra.mxu0 0.0
      %1168 = vmatprep.subr.mxu0 0.0
      %1169 = vmatpush2.msra.mxu0 0.0
      %1170 = vmatprep.subr.mxu0 0.0
      %1171 = vmatpush2.msra.mxu0 0.0
      %1172 = vmatprep.subr.mxu0 0.0
      %1173 = vmatpush2.msra.mxu0 0.0
      %1174 = vmatprep.subr.mxu0 0.0
      %1175 = vmatpush2.msra.mxu0 0.0
      %1176 = vmatprep.mubr.f32.mxu0 0.0
      %1177 = vmatmul.mubr.f32.gmra.mxu0 %v1086
      %v1178 = vpop.f32.mrf.mxu0
      %v1179 = vadd.f32 0.0, %v1178
      %v1180 = vpop.f32.mrf.mxu0
      %1181 = vmatprep.mubr.f32.mxu0 0.0
      %1182 = vmatmul.mubr.f32.gmra.mxu0 %v1089
      %v1183 = vpop.f32.mrf.mxu0
      %v1184 = vadd.f32 0.0, %v1183
      %v1185 = vpop.f32.mrf.mxu0
      %1186 = vmatprep.mubr.f32.mxu0 0.0
      %1187 = vmatmul.mubr.f32.gmra.mxu0 %v1092
      %v1188 = vpop.f32.mrf.mxu0
      %v1189 = vadd.f32 0.0, %v1188
      %v1190 = vpop.f32.mrf.mxu0
      %1191 = vmatprep.mubr.f32.mxu0 0.0
      %1192 = vmatmul.mubr.f32.gmra.mxu0 %v1095
      %v1193 = vpop.f32.mrf.mxu0
      %v1194 = vadd.f32 0.0, %v1193
      %v1195 = vpop.f32.mrf.mxu0
      %1196 = vmatprep.mubr.f32.mxu0 0.0
      %1197 = vmatmul.mubr.f32.gmra.mxu0 %v1098
      %v1198 = vpop.f32.mrf.mxu0
      %v1199 = vadd.f32 0.0, %v1198
      %v1200 = vpop.f32.mrf.mxu0
      %1201 = vmatprep.mubr.f32.mxu0 0.0
      %1202 = vmatmul.mubr.f32.gmra.mxu0 %v1101
      %v1203 = vpop.f32.mrf.mxu0
      %v1204 = vadd.f32 0.0, %v1203
      %v1205 = vpop.f32.mrf.mxu0
      %1206 = vmatprep.mubr.f32.mxu0 0.0
      %1207 = vmatmul.mubr.f32.gmra.mxu0 %v1104
      %v1208 = vpop.f32.mrf.mxu0
      %v1209 = vadd.f32 0.0, %v1208
      %v1210 = vpop.f32.mrf.mxu0
      %1211 = vmatprep.mubr.f32.mxu0 0.0
      %1212 = vmatmul.mubr.f32.gmra.mxu0 %v1107
      %v1213 = vpop.f32.mrf.mxu0
      %v1214 = vadd.f32 0.0, %v1213
      %v1215 = vpop.f32.mrf.mxu0
      %1216 = vdwg.mxu0
      %v1217 = vadd.f32 %v1066, %v1179
      %v1218 = vadd.f32 %v1067, %v1184
      %v1219 = vadd.f32 %v1068, %v1189
      %v1220 = vadd.f32 %v1069, %v1194
      %v1221 = vadd.f32 %v1070, %v1199
      %v1222 = vadd.f32 %v1071, %v1204
      %v1223 = vadd.f32 %v1072, %v1209
      %v1224 = vadd.f32 %v1073, %v1214
      %v1225 = vld [vmem:[%s923 + $0x1] sm:$0xff]
      %v1226 = vld [vmem:[%s923 + $0x11] sm:$0xff]
      %v1227 = vld [vmem:[%s923 + $0x21] sm:$0xff]
      %v1228 = vld [vmem:[%s923 + $0x31] sm:$0xff]
      %v1229 = vld [vmem:[%s923 + $0x41] sm:$0xff]
      %v1230 = vld [vmem:[%s923 + $0x51] sm:$0xff]
      %v1231 = vld [vmem:[%s923 + $0x61] sm:$0xff]
      %v1232 = vld [vmem:[%s923 + $0x71] sm:$0xff]
      %s1233 = scalar_lea.vmem %s1, 28
      %v1234 = vld [vmem:[%s1233] sm:$0xf]
      %v1236 = vsel %vm207, %v1225, 0
      %v1239 = vsel %vm207, %v1226, 0
      %v1242 = vsel %vm207, %v1227, 0
      %v1245 = vsel %vm207, %v1228, 0
      %v1248 = vsel %vm207, %v1229, 0
      %v1251 = vsel %vm207, %v1230, 0
      %v1254 = vsel %vm207, %v1231, 0
      %v1257 = vsel %vm207, %v1232, 0
      %v1260 = vsel %vm232, %v1234, 0
      %1262 = vmatprep.subr.mxu0 0.0
      %1263 = vmatpush1.msra.mxu0 0.0
      %1264 = vmatprep.subr.mxu0 0.0
      %1265 = vmatpush1.msra.mxu0 0.0
      %1266 = vmatprep.subr.mxu0 0.0
      %1267 = vmatpush1.msra.mxu0 0.0
      %1268 = vmatprep.subr.mxu0 0.0
      %1269 = vmatpush1.msra.mxu0 0.0
      %1270 = vmatprep.subr.mxu0 0.0
      %1271 = vmatpush1.msra.mxu0 0.0
      %1272 = vmatprep.subr.mxu0 0.0
      %1273 = vmatpush1.msra.mxu0 0.0
      %1274 = vmatprep.subr.mxu0 0.0
      %1275 = vmatpush1.msra.mxu0 0.0
      %1276 = vmatprep.subr.mxu0 0.0
      %1277 = vmatpush1.msra.mxu0 0.0
      %1278 = vmatprep.subr.mxu0 0.0
      %1279 = vmatpush1.msra.mxu0 0.0
      %1280 = vmatprep.subr.mxu0 0.0
      %1281 = vmatpush1.msra.mxu0 0.0
      %1282 = vmatprep.subr.mxu0 0.0
      %1283 = vmatpush1.msra.mxu0 0.0
      %1284 = vmatprep.subr.mxu0 0.0
      %1285 = vmatpush1.msra.mxu0 0.0
      %1286 = vmatprep.subr.mxu0 0.0
      %1287 = vmatpush1.msra.mxu0 0.0
      %1288 = vmatprep.subr.mxu0 0.0
      %1289 = vmatpush1.msra.mxu0 0.0
      %1290 = vmatprep.subr.mxu0 0.0
      %1291 = vmatpush1.msra.mxu0 0.0
      %1292 = vmatprep.subr.mxu0 0.0
      %1293 = vmatpush1.msra.mxu0 %v1260
      %1294 = vmatprep.subr.mxu0 0.0
      %1295 = vmatpush2.msra.mxu0 0.0
      %1296 = vmatprep.subr.mxu0 0.0
      %1297 = vmatpush2.msra.mxu0 0.0
      %1298 = vmatprep.subr.mxu0 0.0
      %1299 = vmatpush2.msra.mxu0 0.0
      %1300 = vmatprep.subr.mxu0 0.0
      %1301 = vmatpush2.msra.mxu0 0.0
      %1302 = vmatprep.subr.mxu0 0.0
      %1303 = vmatpush2.msra.mxu0 0.0
      %1304 = vmatprep.subr.mxu0 0.0
      %1305 = vmatpush2.msra.mxu0 0.0
      %1306 = vmatprep.subr.mxu0 0.0
      %1307 = vmatpush2.msra.mxu0 0.0
      %1308 = vmatprep.subr.mxu0 0.0
      %1309 = vmatpush2.msra.mxu0 0.0
      %1310 = vmatprep.subr.mxu0 0.0
      %1311 = vmatpush2.msra.mxu0 0.0
      %1312 = vmatprep.subr.mxu0 0.0
      %1313 = vmatpush2.msra.mxu0 0.0
      %1314 = vmatprep.subr.mxu0 0.0
      %1315 = vmatpush2.msra.mxu0 0.0
      %1316 = vmatprep.subr.mxu0 0.0
      %1317 = vmatpush2.msra.mxu0 0.0
      %1318 = vmatprep.subr.mxu0 0.0
      %1319 = vmatpush2.msra.mxu0 0.0
      %1320 = vmatprep.subr.mxu0 0.0
      %1321 = vmatpush2.msra.mxu0 0.0
      %1322 = vmatprep.subr.mxu0 0.0
      %1323 = vmatpush2.msra.mxu0 0.0
      %1324 = vmatprep.subr.mxu0 0.0
      %1325 = vmatpush2.msra.mxu0 0.0
      %1326 = vmatprep.mubr.f32.mxu0 0.0
      %1327 = vmatmul.mubr.f32.gmra.mxu0 %v1236
      %v1328 = vpop.f32.mrf.mxu0
      %v1329 = vadd.f32 0.0, %v1328
      %v1330 = vpop.f32.mrf.mxu0
      %1331 = vmatprep.mubr.f32.mxu0 0.0
      %1332 = vmatmul.mubr.f32.gmra.mxu0 %v1239
      %v1333 = vpop.f32.mrf.mxu0
      %v1334 = vadd.f32 0.0, %v1333
      %v1335 = vpop.f32.mrf.mxu0
      %1336 = vmatprep.mubr.f32.mxu0 0.0
      %1337 = vmatmul.mubr.f32.gmra.mxu0 %v1242
      %v1338 = vpop.f32.mrf.mxu0
      %v1339 = vadd.f32 0.0, %v1338
      %v1340 = vpop.f32.mrf.mxu0
      %1341 = vmatprep.mubr.f32.mxu0 0.0
      %1342 = vmatmul.mubr.f32.gmra.mxu0 %v1245
      %v1343 = vpop.f32.mrf.mxu0
      %v1344 = vadd.f32 0.0, %v1343
      %v1345 = vpop.f32.mrf.mxu0
      %1346 = vmatprep.mubr.f32.mxu0 0.0
      %1347 = vmatmul.mubr.f32.gmra.mxu0 %v1248
      %v1348 = vpop.f32.mrf.mxu0
      %v1349 = vadd.f32 0.0, %v1348
      %v1350 = vpop.f32.mrf.mxu0
      %1351 = vmatprep.mubr.f32.mxu0 0.0
      %1352 = vmatmul.mubr.f32.gmra.mxu0 %v1251
      %v1353 = vpop.f32.mrf.mxu0
      %v1354 = vadd.f32 0.0, %v1353
      %v1355 = vpop.f32.mrf.mxu0
      %1356 = vmatprep.mubr.f32.mxu0 0.0
      %1357 = vmatmul.mubr.f32.gmra.mxu0 %v1254
      %v1358 = vpop.f32.mrf.mxu0
      %v1359 = vadd.f32 0.0, %v1358
      %v1360 = vpop.f32.mrf.mxu0
      %1361 = vmatprep.mubr.f32.mxu0 0.0
      %1362 = vmatmul.mubr.f32.gmra.mxu0 %v1257
      %v1363 = vpop.f32.mrf.mxu0
      %v1364 = vadd.f32 0.0, %v1363
      %v1365 = vpop.f32.mrf.mxu0
      %1366 = vdwg.mxu0
      %v1367 = vadd.f32 %v1217, %v1329
      %v1368 = vadd.f32 %v1218, %v1334
      %v1369 = vadd.f32 %v1219, %v1339
      %v1370 = vadd.f32 %v1220, %v1344
      %v1371 = vadd.f32 %v1221, %v1349
      %v1372 = vadd.f32 %v1222, %v1354
      %v1373 = vadd.f32 %v1223, %v1359
      %v1374 = vadd.f32 %v1224, %v1364
      %v1375 = vld [vmem:[%s1074 + $0x1] sm:$0xff]
      %v1376 = vld [vmem:[%s1074 + $0x11] sm:$0xff]
      %v1377 = vld [vmem:[%s1074 + $0x21] sm:$0xff]
      %v1378 = vld [vmem:[%s1074 + $0x31] sm:$0xff]
      %v1379 = vld [vmem:[%s1074 + $0x41] sm:$0xff]
      %v1380 = vld [vmem:[%s1074 + $0x51] sm:$0xff]
      %v1381 = vld [vmem:[%s1074 + $0x61] sm:$0xff]
      %v1382 = vld [vmem:[%s1074 + $0x71] sm:$0xff]
      %s1383 = scalar_lea.vmem %s1, 32
      %v1384 = vld [vmem:[%s1383] sm:$0xf]
      %v1386 = vsel %vm207, %v1375, 0
      %v1389 = vsel %vm207, %v1376, 0
      %v1392 = vsel %vm207, %v1377, 0
      %v1395 = vsel %vm207, %v1378, 0
      %v1398 = vsel %vm207, %v1379, 0
      %v1401 = vsel %vm207, %v1380, 0
      %v1404 = vsel %vm207, %v1381, 0
      %v1407 = vsel %vm207, %v1382, 0
      %v1410 = vsel %vm232, %v1384, 0
      %1412 = vmatprep.subr.mxu0 0.0
      %1413 = vmatpush1.msra.mxu0 0.0
      %1414 = vmatprep.subr.mxu0 0.0
      %1415 = vmatpush1.msra.mxu0 0.0
      %1416 = vmatprep.subr.mxu0 0.0
      %1417 = vmatpush1.msra.mxu0 0.0
      %1418 = vmatprep.subr.mxu0 0.0
      %1419 = vmatpush1.msra.mxu0 0.0
      %1420 = vmatprep.subr.mxu0 0.0
      %1421 = vmatpush1.msra.mxu0 0.0
      %1422 = vmatprep.subr.mxu0 0.0
      %1423 = vmatpush1.msra.mxu0 0.0
      %1424 = vmatprep.subr.mxu0 0.0
      %1425 = vmatpush1.msra.mxu0 0.0
      %1426 = vmatprep.subr.mxu0 0.0
      %1427 = vmatpush1.msra.mxu0 0.0
      %1428 = vmatprep.subr.mxu0 0.0
      %1429 = vmatpush1.msra.mxu0 0.0
      %1430 = vmatprep.subr.mxu0 0.0
      %1431 = vmatpush1.msra.mxu0 0.0
      %1432 = vmatprep.subr.mxu0 0.0
      %1433 = vmatpush1.msra.mxu0 0.0
      %1434 = vmatprep.subr.mxu0 0.0
      %1435 = vmatpush1.msra.mxu0 0.0
      %1436 = vmatprep.subr.mxu0 0.0
      %1437 = vmatpush1.msra.mxu0 0.0
      %1438 = vmatprep.subr.mxu0 0.0
      %1439 = vmatpush1.msra.mxu0 0.0
      %1440 = vmatprep.subr.mxu0 0.0
      %1441 = vmatpush1.msra.mxu0 0.0
      %1442 = vmatprep.subr.mxu0 0.0
      %1443 = vmatpush1.msra.mxu0 %v1410
      %1444 = vmatprep.subr.mxu0 0.0
      %1445 = vmatpush2.msra.mxu0 0.0
      %1446 = vmatprep.subr.mxu0 0.0
      %1447 = vmatpush2.msra.mxu0 0.0
      %1448 = vmatprep.subr.mxu0 0.0
      %1449 = vmatpush2.msra.mxu0 0.0
      %1450 = vmatprep.subr.mxu0 0.0
      %1451 = vmatpush2.msra.mxu0 0.0
      %1452 = vmatprep.subr.mxu0 0.0
      %1453 = vmatpush2.msra.mxu0 0.0
      %1454 = vmatprep.subr.mxu0 0.0
      %1455 = vmatpush2.msra.mxu0 0.0
      %1456 = vmatprep.subr.mxu0 0.0
      %1457 = vmatpush2.msra.mxu0 0.0
      %1458 = vmatprep.subr.mxu0 0.0
      %1459 = vmatpush2.msra.mxu0 0.0
      %1460 = vmatprep.subr.mxu0 0.0
      %1461 = vmatpush2.msra.mxu0 0.0
      %1462 = vmatprep.subr.mxu0 0.0
      %1463 = vmatpush2.msra.mxu0 0.0
      %1464 = vmatprep.subr.mxu0 0.0
      %1465 = vmatpush2.msra.mxu0 0.0
      %1466 = vmatprep.subr.mxu0 0.0
      %1467 = vmatpush2.msra.mxu0 0.0
      %1468 = vmatprep.subr.mxu0 0.0
      %1469 = vmatpush2.msra.mxu0 0.0
      %1470 = vmatprep.subr.mxu0 0.0
      %1471 = vmatpush2.msra.mxu0 0.0
      %1472 = vmatprep.subr.mxu0 0.0
      %1473 = vmatpush2.msra.mxu0 0.0
      %1474 = vmatprep.subr.mxu0 0.0
      %1475 = vmatpush2.msra.mxu0 0.0
      %1476 = vmatprep.mubr.f32.mxu0 0.0
      %1477 = vmatmul.mubr.f32.gmra.mxu0 %v1386
      %v1478 = vpop.f32.mrf.mxu0
      %v1479 = vadd.f32 0.0, %v1478
      %v1480 = vpop.f32.mrf.mxu0
      %1481 = vmatprep.mubr.f32.mxu0 0.0
      %1482 = vmatmul.mubr.f32.gmra.mxu0 %v1389
      %v1483 = vpop.f32.mrf.mxu0
      %v1484 = vadd.f32 0.0, %v1483
      %v1485 = vpop.f32.mrf.mxu0
      %1486 = vmatprep.mubr.f32.mxu0 0.0
      %1487 = vmatmul.mubr.f32.gmra.mxu0 %v1392
      %v1488 = vpop.f32.mrf.mxu0
      %v1489 = vadd.f32 0.0, %v1488
      %v1490 = vpop.f32.mrf.mxu0
      %1491 = vmatprep.mubr.f32.mxu0 0.0
      %1492 = vmatmul.mubr.f32.gmra.mxu0 %v1395
      %v1493 = vpop.f32.mrf.mxu0
      %v1494 = vadd.f32 0.0, %v1493
      %v1495 = vpop.f32.mrf.mxu0
      %1496 = vmatprep.mubr.f32.mxu0 0.0
      %1497 = vmatmul.mubr.f32.gmra.mxu0 %v1398
      %v1498 = vpop.f32.mrf.mxu0
      %v1499 = vadd.f32 0.0, %v1498
      %v1500 = vpop.f32.mrf.mxu0
      %1501 = vmatprep.mubr.f32.mxu0 0.0
      %1502 = vmatmul.mubr.f32.gmra.mxu0 %v1401
      %v1503 = vpop.f32.mrf.mxu0
      %v1504 = vadd.f32 0.0, %v1503
      %v1505 = vpop.f32.mrf.mxu0
      %1506 = vmatprep.mubr.f32.mxu0 0.0
      %1507 = vmatmul.mubr.f32.gmra.mxu0 %v1404
      %v1508 = vpop.f32.mrf.mxu0
      %v1509 = vadd.f32 0.0, %v1508
      %v1510 = vpop.f32.mrf.mxu0
      %1511 = vmatprep.mubr.f32.mxu0 0.0
      %1512 = vmatmul.mubr.f32.gmra.mxu0 %v1407
      %v1513 = vpop.f32.mrf.mxu0
      %v1514 = vadd.f32 0.0, %v1513
      %v1515 = vpop.f32.mrf.mxu0
      %1516 = vdwg.mxu0
      %v1517 = vadd.f32 %v1367, %v1479
      %v1518 = vadd.f32 %v1368, %v1484
      %v1519 = vadd.f32 %v1369, %v1489
      %v1520 = vadd.f32 %v1370, %v1494
      %v1521 = vadd.f32 %v1371, %v1499
      %v1522 = vadd.f32 %v1372, %v1504
      %v1523 = vadd.f32 %v1373, %v1509
      %v1524 = vadd.f32 %v1374, %v1514
      %v1525 = vld [vmem:[%s923 + $0x2] sm:$0xff]
      %v1526 = vld [vmem:[%s923 + $0x12] sm:$0xff]
      %v1527 = vld [vmem:[%s923 + $0x22] sm:$0xff]
      %v1528 = vld [vmem:[%s923 + $0x32] sm:$0xff]
      %v1529 = vld [vmem:[%s923 + $0x42] sm:$0xff]
      %v1530 = vld [vmem:[%s923 + $0x52] sm:$0xff]
      %v1531 = vld [vmem:[%s923 + $0x62] sm:$0xff]
      %v1532 = vld [vmem:[%s923 + $0x72] sm:$0xff]
      %s1533 = scalar_lea.vmem %s1, 36
      %v1534 = vld [vmem:[%s1533] sm:$0xf]
      %v1536 = vsel %vm207, %v1525, 0
      %v1539 = vsel %vm207, %v1526, 0
      %v1542 = vsel %vm207, %v1527, 0
      %v1545 = vsel %vm207, %v1528, 0
      %v1548 = vsel %vm207, %v1529, 0
      %v1551 = vsel %vm207, %v1530, 0
      %v1554 = vsel %vm207, %v1531, 0
      %v1557 = vsel %vm207, %v1532, 0
      %v1560 = vsel %vm232, %v1534, 0
      %1562 = vmatprep.subr.mxu0 0.0
      %1563 = vmatpush1.msra.mxu0 0.0
      %1564 = vmatprep.subr.mxu0 0.0
      %1565 = vmatpush1.msra.mxu0 0.0
      %1566 = vmatprep.subr.mxu0 0.0
      %1567 = vmatpush1.msra.mxu0 0.0
      %1568 = vmatprep.subr.mxu0 0.0
      %1569 = vmatpush1.msra.mxu0 0.0
      %1570 = vmatprep.subr.mxu0 0.0
      %1571 = vmatpush1.msra.mxu0 0.0
      %1572 = vmatprep.subr.mxu0 0.0
      %1573 = vmatpush1.msra.mxu0 0.0
      %1574 = vmatprep.subr.mxu0 0.0
      %1575 = vmatpush1.msra.mxu0 0.0
      %1576 = vmatprep.subr.mxu0 0.0
      %1577 = vmatpush1.msra.mxu0 0.0
      %1578 = vmatprep.subr.mxu0 0.0
      %1579 = vmatpush1.msra.mxu0 0.0
      %1580 = vmatprep.subr.mxu0 0.0
      %1581 = vmatpush1.msra.mxu0 0.0
      %1582 = vmatprep.subr.mxu0 0.0
      %1583 = vmatpush1.msra.mxu0 0.0
      %1584 = vmatprep.subr.mxu0 0.0
      %1585 = vmatpush1.msra.mxu0 0.0
      %1586 = vmatprep.subr.mxu0 0.0
      %1587 = vmatpush1.msra.mxu0 0.0
      %1588 = vmatprep.subr.mxu0 0.0
      %1589 = vmatpush1.msra.mxu0 0.0
      %1590 = vmatprep.subr.mxu0 0.0
      %1591 = vmatpush1.msra.mxu0 0.0
      %1592 = vmatprep.subr.mxu0 0.0
      %1593 = vmatpush1.msra.mxu0 %v1560
      %1594 = vmatprep.subr.mxu0 0.0
      %1595 = vmatpush2.msra.mxu0 0.0
      %1596 = vmatprep.subr.mxu0 0.0
      %1597 = vmatpush2.msra.mxu0 0.0
      %1598 = vmatprep.subr.mxu0 0.0
      %1599 = vmatpush2.msra.mxu0 0.0
      %1600 = vmatprep.subr.mxu0 0.0
      %1601 = vmatpush2.msra.mxu0 0.0
      %1602 = vmatprep.subr.mxu0 0.0
      %1603 = vmatpush2.msra.mxu0 0.0
      %1604 = vmatprep.subr.mxu0 0.0
      %1605 = vmatpush2.msra.mxu0 0.0
      %1606 = vmatprep.subr.mxu0 0.0
      %1607 = vmatpush2.msra.mxu0 0.0
      %1608 = vmatprep.subr.mxu0 0.0
      %1609 = vmatpush2.msra.mxu0 0.0
      %1610 = vmatprep.subr.mxu0 0.0
      %1611 = vmatpush2.msra.mxu0 0.0
      %1612 = vmatprep.subr.mxu0 0.0
      %1613 = vmatpush2.msra.mxu0 0.0
      %1614 = vmatprep.subr.mxu0 0.0
      %1615 = vmatpush2.msra.mxu0 0.0
      %1616 = vmatprep.subr.mxu0 0.0
      %1617 = vmatpush2.msra.mxu0 0.0
      %1618 = vmatprep.subr.mxu0 0.0
      %1619 = vmatpush2.msra.mxu0 0.0
      %1620 = vmatprep.subr.mxu0 0.0
      %1621 = vmatpush2.msra.mxu0 0.0
      %1622 = vmatprep.subr.mxu0 0.0
      %1623 = vmatpush2.msra.mxu0 0.0
      %1624 = vmatprep.subr.mxu0 0.0
      %1625 = vmatpush2.msra.mxu0 0.0
      %1626 = vmatprep.mubr.f32.mxu0 0.0
      %1627 = vmatmul.mubr.f32.gmra.mxu0 %v1536
      %v1628 = vpop.f32.mrf.mxu0
      %v1629 = vadd.f32 0.0, %v1628
      %v1630 = vpop.f32.mrf.mxu0
      %1631 = vmatprep.mubr.f32.mxu0 0.0
      %1632 = vmatmul.mubr.f32.gmra.mxu0 %v1539
      %v1633 = vpop.f32.mrf.mxu0
      %v1634 = vadd.f32 0.0, %v1633
      %v1635 = vpop.f32.mrf.mxu0
      %1636 = vmatprep.mubr.f32.mxu0 0.0
      %1637 = vmatmul.mubr.f32.gmra.mxu0 %v1542
      %v1638 = vpop.f32.mrf.mxu0
      %v1639 = vadd.f32 0.0, %v1638
      %v1640 = vpop.f32.mrf.mxu0
      %1641 = vmatprep.mubr.f32.mxu0 0.0
      %1642 = vmatmul.mubr.f32.gmra.mxu0 %v1545
      %v1643 = vpop.f32.mrf.mxu0
      %v1644 = vadd.f32 0.0, %v1643
      %v1645 = vpop.f32.mrf.mxu0
      %1646 = vmatprep.mubr.f32.mxu0 0.0
      %1647 = vmatmul.mubr.f32.gmra.mxu0 %v1548
      %v1648 = vpop.f32.mrf.mxu0
      %v1649 = vadd.f32 0.0, %v1648
      %v1650 = vpop.f32.mrf.mxu0
      %1651 = vmatprep.mubr.f32.mxu0 0.0
      %1652 = vmatmul.mubr.f32.gmra.mxu0 %v1551
      %v1653 = vpop.f32.mrf.mxu0
      %v1654 = vadd.f32 0.0, %v1653
      %v1655 = vpop.f32.mrf.mxu0
      %1656 = vmatprep.mubr.f32.mxu0 0.0
      %1657 = vmatmul.mubr.f32.gmra.mxu0 %v1554
      %v1658 = vpop.f32.mrf.mxu0
      %v1659 = vadd.f32 0.0, %v1658
      %v1660 = vpop.f32.mrf.mxu0
      %1661 = vmatprep.mubr.f32.mxu0 0.0
      %1662 = vmatmul.mubr.f32.gmra.mxu0 %v1557
      %v1663 = vpop.f32.mrf.mxu0
      %v1664 = vadd.f32 0.0, %v1663
      %v1665 = vpop.f32.mrf.mxu0
      %1666 = vdwg.mxu0
      %v1667 = vadd.f32 %v1517, %v1629
      %v1668 = vadd.f32 %v1518, %v1634
      %v1669 = vadd.f32 %v1519, %v1639
      %v1670 = vadd.f32 %v1520, %v1644
      %v1671 = vadd.f32 %v1521, %v1649
      %v1672 = vadd.f32 %v1522, %v1654
      %v1673 = vadd.f32 %v1523, %v1659
      %v1674 = vadd.f32 %v1524, %v1664
      %s1675 = scalar_lea.vmem %s176, 16
      %v1676 = vld [vmem:[%s1675] sm:$0xff]
      %v1677 = vld [vmem:[%s1675 + $0x10] sm:$0xff]
      %v1678 = vld [vmem:[%s1675 + $0x20] sm:$0xff]
      %v1679 = vld [vmem:[%s1675 + $0x30] sm:$0xff]
      %v1680 = vld [vmem:[%s1675 + $0x40] sm:$0xff]
      %v1681 = vld [vmem:[%s1675 + $0x50] sm:$0xff]
      %v1682 = vld [vmem:[%s1675 + $0x60] sm:$0xff]
      %v1683 = vld [vmem:[%s1675 + $0x70] sm:$0xff]
      %s1684 = scalar_lea.vmem %s1, 40
      %v1685 = vld [vmem:[%s1684] sm:$0xf]
      %v1687 = vsel %vm207, %v1676, 0
      %v1690 = vsel %vm207, %v1677, 0
      %v1693 = vsel %vm207, %v1678, 0
      %v1696 = vsel %vm207, %v1679, 0
      %v1699 = vsel %vm207, %v1680, 0
      %v1702 = vsel %vm207, %v1681, 0
      %v1705 = vsel %vm207, %v1682, 0
      %v1708 = vsel %vm207, %v1683, 0
      %v1711 = vsel %vm232, %v1685, 0
      %1713 = vmatprep.subr.mxu0 0.0
      %1714 = vmatpush1.msra.mxu0 0.0
      %1715 = vmatprep.subr.mxu0 0.0
      %1716 = vmatpush1.msra.mxu0 0.0
      %1717 = vmatprep.subr.mxu0 0.0
      %1718 = vmatpush1.msra.mxu0 0.0
      %1719 = vmatprep.subr.mxu0 0.0
      %1720 = vmatpush1.msra.mxu0 0.0
      %1721 = vmatprep.subr.mxu0 0.0
      %1722 = vmatpush1.msra.mxu0 0.0
      %1723 = vmatprep.subr.mxu0 0.0
      %1724 = vmatpush1.msra.mxu0 0.0
      %1725 = vmatprep.subr.mxu0 0.0
      %1726 = vmatpush1.msra.mxu0 0.0
      %1727 = vmatprep.subr.mxu0 0.0
      %1728 = vmatpush1.msra.mxu0 0.0
      %1729 = vmatprep.subr.mxu0 0.0
      %1730 = vmatpush1.msra.mxu0 0.0
      %1731 = vmatprep.subr.mxu0 0.0
      %1732 = vmatpush1.msra.mxu0 0.0
      %1733 = vmatprep.subr.mxu0 0.0
      %1734 = vmatpush1.msra.mxu0 0.0
      %1735 = vmatprep.subr.mxu0 0.0
      %1736 = vmatpush1.msra.mxu0 0.0
      %1737 = vmatprep.subr.mxu0 0.0
      %1738 = vmatpush1.msra.mxu0 0.0
      %1739 = vmatprep.subr.mxu0 0.0
      %1740 = vmatpush1.msra.mxu0 0.0
      %1741 = vmatprep.subr.mxu0 0.0
      %1742 = vmatpush1.msra.mxu0 0.0
      %1743 = vmatprep.subr.mxu0 0.0
      %1744 = vmatpush1.msra.mxu0 %v1711
      %1745 = vmatprep.subr.mxu0 0.0
      %1746 = vmatpush2.msra.mxu0 0.0
      %1747 = vmatprep.subr.mxu0 0.0
      %1748 = vmatpush2.msra.mxu0 0.0
      %1749 = vmatprep.subr.mxu0 0.0
      %1750 = vmatpush2.msra.mxu0 0.0
      %1751 = vmatprep.subr.mxu0 0.0
      %1752 = vmatpush2.msra.mxu0 0.0
      %1753 = vmatprep.subr.mxu0 0.0
      %1754 = vmatpush2.msra.mxu0 0.0
      %1755 = vmatprep.subr.mxu0 0.0
      %1756 = vmatpush2.msra.mxu0 0.0
      %1757 = vmatprep.subr.mxu0 0.0
      %1758 = vmatpush2.msra.mxu0 0.0
      %1759 = vmatprep.subr.mxu0 0.0
      %1760 = vmatpush2.msra.mxu0 0.0
      %1761 = vmatprep.subr.mxu0 0.0
      %1762 = vmatpush2.msra.mxu0 0.0
      %1763 = vmatprep.subr.mxu0 0.0
      %1764 = vmatpush2.msra.mxu0 0.0
      %1765 = vmatprep.subr.mxu0 0.0
      %1766 = vmatpush2.msra.mxu0 0.0
      %1767 = vmatprep.subr.mxu0 0.0
      %1768 = vmatpush2.msra.mxu0 0.0
      %1769 = vmatprep.subr.mxu0 0.0
      %1770 = vmatpush2.msra.mxu0 0.0
      %1771 = vmatprep.subr.mxu0 0.0
      %1772 = vmatpush2.msra.mxu0 0.0
      %1773 = vmatprep.subr.mxu0 0.0
      %1774 = vmatpush2.msra.mxu0 0.0
      %1775 = vmatprep.subr.mxu0 0.0
      %1776 = vmatpush2.msra.mxu0 0.0
      %1777 = vmatprep.mubr.f32.mxu0 0.0
      %1778 = vmatmul.mubr.f32.gmra.mxu0 %v1687
      %v1779 = vpop.f32.mrf.mxu0
      %v1780 = vadd.f32 0.0, %v1779
      %v1781 = vpop.f32.mrf.mxu0
      %1782 = vmatprep.mubr.f32.mxu0 0.0
      %1783 = vmatmul.mubr.f32.gmra.mxu0 %v1690
      %v1784 = vpop.f32.mrf.mxu0
      %v1785 = vadd.f32 0.0, %v1784
      %v1786 = vpop.f32.mrf.mxu0
      %1787 = vmatprep.mubr.f32.mxu0 0.0
      %1788 = vmatmul.mubr.f32.gmra.mxu0 %v1693
      %v1789 = vpop.f32.mrf.mxu0
      %v1790 = vadd.f32 0.0, %v1789
      %v1791 = vpop.f32.mrf.mxu0
      %1792 = vmatprep.mubr.f32.mxu0 0.0
      %1793 = vmatmul.mubr.f32.gmra.mxu0 %v1696
      %v1794 = vpop.f32.mrf.mxu0
      %v1795 = vadd.f32 0.0, %v1794
      %v1796 = vpop.f32.mrf.mxu0
      %1797 = vmatprep.mubr.f32.mxu0 0.0
      %1798 = vmatmul.mubr.f32.gmra.mxu0 %v1699
      %v1799 = vpop.f32.mrf.mxu0
      %v1800 = vadd.f32 0.0, %v1799
      %v1801 = vpop.f32.mrf.mxu0
      %1802 = vmatprep.mubr.f32.mxu0 0.0
      %1803 = vmatmul.mubr.f32.gmra.mxu0 %v1702
      %v1804 = vpop.f32.mrf.mxu0
      %v1805 = vadd.f32 0.0, %v1804
      %v1806 = vpop.f32.mrf.mxu0
      %1807 = vmatprep.mubr.f32.mxu0 0.0
      %1808 = vmatmul.mubr.f32.gmra.mxu0 %v1705
      %v1809 = vpop.f32.mrf.mxu0
      %v1810 = vadd.f32 0.0, %v1809
      %v1811 = vpop.f32.mrf.mxu0
      %1812 = vmatprep.mubr.f32.mxu0 0.0
      %1813 = vmatmul.mubr.f32.gmra.mxu0 %v1708
      %v1814 = vpop.f32.mrf.mxu0
      %v1815 = vadd.f32 0.0, %v1814
      %v1816 = vpop.f32.mrf.mxu0
      %1817 = vdwg.mxu0
      %v1818 = vadd.f32 %v1667, %v1780
      %v1819 = vadd.f32 %v1668, %v1785
      %v1820 = vadd.f32 %v1669, %v1790
      %v1821 = vadd.f32 %v1670, %v1795
      %v1822 = vadd.f32 %v1671, %v1800
      %v1823 = vadd.f32 %v1672, %v1805
      %v1824 = vadd.f32 %v1673, %v1810
      %v1825 = vadd.f32 %v1674, %v1815
      %s1826 = scalar_lea.vmem %s176, 176
      %v1827 = vld [vmem:[%s1826] sm:$0xff]
      %v1828 = vld [vmem:[%s1826 + $0x10] sm:$0xff]
      %v1829 = vld [vmem:[%s1826 + $0x20] sm:$0xff]
      %v1830 = vld [vmem:[%s1826 + $0x30] sm:$0xff]
      %v1831 = vld [vmem:[%s1826 + $0x40] sm:$0xff]
      %v1832 = vld [vmem:[%s1826 + $0x50] sm:$0xff]
      %v1833 = vld [vmem:[%s1826 + $0x60] sm:$0xff]
      %v1834 = vld [vmem:[%s1826 + $0x70] sm:$0xff]
      %s1835 = scalar_lea.vmem %s1, 44
      %v1836 = vld [vmem:[%s1835] sm:$0xf]
      %v1838 = vsel %vm207, %v1827, 0
      %v1841 = vsel %vm207, %v1828, 0
      %v1844 = vsel %vm207, %v1829, 0
      %v1847 = vsel %vm207, %v1830, 0
      %v1850 = vsel %vm207, %v1831, 0
      %v1853 = vsel %vm207, %v1832, 0
      %v1856 = vsel %vm207, %v1833, 0
      %v1859 = vsel %vm207, %v1834, 0
      %v1862 = vsel %vm232, %v1836, 0
      %1864 = vmatprep.subr.mxu0 0.0
      %1865 = vmatpush1.msra.mxu0 0.0
      %1866 = vmatprep.subr.mxu0 0.0
      %1867 = vmatpush1.msra.mxu0 0.0
      %1868 = vmatprep.subr.mxu0 0.0
      %1869 = vmatpush1.msra.mxu0 0.0
      %1870 = vmatprep.subr.mxu0 0.0
      %1871 = vmatpush1.msra.mxu0 0.0
      %1872 = vmatprep.subr.mxu0 0.0
      %1873 = vmatpush1.msra.mxu0 0.0
      %1874 = vmatprep.subr.mxu0 0.0
      %1875 = vmatpush1.msra.mxu0 0.0
      %1876 = vmatprep.subr.mxu0 0.0
      %1877 = vmatpush1.msra.mxu0 0.0
      %1878 = vmatprep.subr.mxu0 0.0
      %1879 = vmatpush1.msra.mxu0 0.0
      %1880 = vmatprep.subr.mxu0 0.0
      %1881 = vmatpush1.msra.mxu0 0.0
      %1882 = vmatprep.subr.mxu0 0.0
      %1883 = vmatpush1.msra.mxu0 0.0
      %1884 = vmatprep.subr.mxu0 0.0
      %1885 = vmatpush1.msra.mxu0 0.0
      %1886 = vmatprep.subr.mxu0 0.0
      %1887 = vmatpush1.msra.mxu0 0.0
      %1888 = vmatprep.subr.mxu0 0.0
      %1889 = vmatpush1.msra.mxu0 0.0
      %1890 = vmatprep.subr.mxu0 0.0
      %1891 = vmatpush1.msra.mxu0 0.0
      %1892 = vmatprep.subr.mxu0 0.0
      %1893 = vmatpush1.msra.mxu0 0.0
      %1894 = vmatprep.subr.mxu0 0.0
      %1895 = vmatpush1.msra.mxu0 %v1862
      %1896 = vmatprep.subr.mxu0 0.0
      %1897 = vmatpush2.msra.mxu0 0.0
      %1898 = vmatprep.subr.mxu0 0.0
      %1899 = vmatpush2.msra.mxu0 0.0
      %1900 = vmatprep.subr.mxu0 0.0
      %1901 = vmatpush2.msra.mxu0 0.0
      %1902 = vmatprep.subr.mxu0 0.0
      %1903 = vmatpush2.msra.mxu0 0.0
      %1904 = vmatprep.subr.mxu0 0.0
      %1905 = vmatpush2.msra.mxu0 0.0
      %1906 = vmatprep.subr.mxu0 0.0
      %1907 = vmatpush2.msra.mxu0 0.0
      %1908 = vmatprep.subr.mxu0 0.0
      %1909 = vmatpush2.msra.mxu0 0.0
      %1910 = vmatprep.subr.mxu0 0.0
      %1911 = vmatpush2.msra.mxu0 0.0
      %1912 = vmatprep.subr.mxu0 0.0
      %1913 = vmatpush2.msra.mxu0 0.0
      %1914 = vmatprep.subr.mxu0 0.0
      %1915 = vmatpush2.msra.mxu0 0.0
      %1916 = vmatprep.subr.mxu0 0.0
      %1917 = vmatpush2.msra.mxu0 0.0
      %1918 = vmatprep.subr.mxu0 0.0
      %1919 = vmatpush2.msra.mxu0 0.0
      %1920 = vmatprep.subr.mxu0 0.0
      %1921 = vmatpush2.msra.mxu0 0.0
      %1922 = vmatprep.subr.mxu0 0.0
      %1923 = vmatpush2.msra.mxu0 0.0
      %1924 = vmatprep.subr.mxu0 0.0
      %1925 = vmatpush2.msra.mxu0 0.0
      %1926 = vmatprep.subr.mxu0 0.0
      %1927 = vmatpush2.msra.mxu0 0.0
      %1928 = vmatprep.mubr.f32.mxu0 0.0
      %1929 = vmatmul.mubr.f32.gmra.mxu0 %v1838
      %v1930 = vpop.f32.mrf.mxu0
      %v1931 = vadd.f32 0.0, %v1930
      %v1932 = vpop.f32.mrf.mxu0
      %1933 = vmatprep.mubr.f32.mxu0 0.0
      %1934 = vmatmul.mubr.f32.gmra.mxu0 %v1841
      %v1935 = vpop.f32.mrf.mxu0
      %v1936 = vadd.f32 0.0, %v1935
      %v1937 = vpop.f32.mrf.mxu0
      %1938 = vmatprep.mubr.f32.mxu0 0.0
      %1939 = vmatmul.mubr.f32.gmra.mxu0 %v1844
      %v1940 = vpop.f32.mrf.mxu0
      %v1941 = vadd.f32 0.0, %v1940
      %v1942 = vpop.f32.mrf.mxu0
      %1943 = vmatprep.mubr.f32.mxu0 0.0
      %1944 = vmatmul.mubr.f32.gmra.mxu0 %v1847
      %v1945 = vpop.f32.mrf.mxu0
      %v1946 = vadd.f32 0.0, %v1945
      %v1947 = vpop.f32.mrf.mxu0
      %1948 = vmatprep.mubr.f32.mxu0 0.0
      %1949 = vmatmul.mubr.f32.gmra.mxu0 %v1850
      %v1950 = vpop.f32.mrf.mxu0
      %v1951 = vadd.f32 0.0, %v1950
      %v1952 = vpop.f32.mrf.mxu0
      %1953 = vmatprep.mubr.f32.mxu0 0.0
      %1954 = vmatmul.mubr.f32.gmra.mxu0 %v1853
      %v1955 = vpop.f32.mrf.mxu0
      %v1956 = vadd.f32 0.0, %v1955
      %v1957 = vpop.f32.mrf.mxu0
      %1958 = vmatprep.mubr.f32.mxu0 0.0
      %1959 = vmatmul.mubr.f32.gmra.mxu0 %v1856
      %v1960 = vpop.f32.mrf.mxu0
      %v1961 = vadd.f32 0.0, %v1960
      %v1962 = vpop.f32.mrf.mxu0
      %1963 = vmatprep.mubr.f32.mxu0 0.0
      %1964 = vmatmul.mubr.f32.gmra.mxu0 %v1859
      %v1965 = vpop.f32.mrf.mxu0
      %v1966 = vadd.f32 0.0, %v1965
      %v1967 = vpop.f32.mrf.mxu0
      %1968 = vdwg.mxu0
      %v1969 = vadd.f32 %v1818, %v1931
      %v1970 = vadd.f32 %v1819, %v1936
      %v1971 = vadd.f32 %v1820, %v1941
      %v1972 = vadd.f32 %v1821, %v1946
      %v1973 = vadd.f32 %v1822, %v1951
      %v1974 = vadd.f32 %v1823, %v1956
      %v1975 = vadd.f32 %v1824, %v1961
      %v1976 = vadd.f32 %v1825, %v1966
      %v1977 = vld [vmem:[%s1675 + $0x1] sm:$0xff]
      %v1978 = vld [vmem:[%s1675 + $0x11] sm:$0xff]
      %v1979 = vld [vmem:[%s1675 + $0x21] sm:$0xff]
      %v1980 = vld [vmem:[%s1675 + $0x31] sm:$0xff]
      %v1981 = vld [vmem:[%s1675 + $0x41] sm:$0xff]
      %v1982 = vld [vmem:[%s1675 + $0x51] sm:$0xff]
      %v1983 = vld [vmem:[%s1675 + $0x61] sm:$0xff]
      %v1984 = vld [vmem:[%s1675 + $0x71] sm:$0xff]
      %s1985 = scalar_lea.vmem %s1, 48
      %v1986 = vld [vmem:[%s1985] sm:$0xf]
      %v1988 = vsel %vm207, %v1977, 0
      %v1991 = vsel %vm207, %v1978, 0
      %v1994 = vsel %vm207, %v1979, 0
      %v1997 = vsel %vm207, %v1980, 0
      %v2000 = vsel %vm207, %v1981, 0
      %v2003 = vsel %vm207, %v1982, 0
      %v2006 = vsel %vm207, %v1983, 0
      %v2009 = vsel %vm207, %v1984, 0
      %v2012 = vsel %vm232, %v1986, 0
      %2014 = vmatprep.subr.mxu0 0.0
      %2015 = vmatpush1.msra.mxu0 0.0
      %2016 = vmatprep.subr.mxu0 0.0
      %2017 = vmatpush1.msra.mxu0 0.0
      %2018 = vmatprep.subr.mxu0 0.0
      %2019 = vmatpush1.msra.mxu0 0.0
      %2020 = vmatprep.subr.mxu0 0.0
      %2021 = vmatpush1.msra.mxu0 0.0
      %2022 = vmatprep.subr.mxu0 0.0
      %2023 = vmatpush1.msra.mxu0 0.0
      %2024 = vmatprep.subr.mxu0 0.0
      %2025 = vmatpush1.msra.mxu0 0.0
      %2026 = vmatprep.subr.mxu0 0.0
      %2027 = vmatpush1.msra.mxu0 0.0
      %2028 = vmatprep.subr.mxu0 0.0
      %2029 = vmatpush1.msra.mxu0 0.0
      %2030 = vmatprep.subr.mxu0 0.0
      %2031 = vmatpush1.msra.mxu0 0.0
      %2032 = vmatprep.subr.mxu0 0.0
      %2033 = vmatpush1.msra.mxu0 0.0
      %2034 = vmatprep.subr.mxu0 0.0
      %2035 = vmatpush1.msra.mxu0 0.0
      %2036 = vmatprep.subr.mxu0 0.0
      %2037 = vmatpush1.msra.mxu0 0.0
      %2038 = vmatprep.subr.mxu0 0.0
      %2039 = vmatpush1.msra.mxu0 0.0
      %2040 = vmatprep.subr.mxu0 0.0
      %2041 = vmatpush1.msra.mxu0 0.0
      %2042 = vmatprep.subr.mxu0 0.0
      %2043 = vmatpush1.msra.mxu0 0.0
      %2044 = vmatprep.subr.mxu0 0.0
      %2045 = vmatpush1.msra.mxu0 %v2012
      %2046 = vmatprep.subr.mxu0 0.0
      %2047 = vmatpush2.msra.mxu0 0.0
      %2048 = vmatprep.subr.mxu0 0.0
      %2049 = vmatpush2.msra.mxu0 0.0
      %2050 = vmatprep.subr.mxu0 0.0
      %2051 = vmatpush2.msra.mxu0 0.0
      %2052 = vmatprep.subr.mxu0 0.0
      %2053 = vmatpush2.msra.mxu0 0.0
      %2054 = vmatprep.subr.mxu0 0.0
      %2055 = vmatpush2.msra.mxu0 0.0
      %2056 = vmatprep.subr.mxu0 0.0
      %2057 = vmatpush2.msra.mxu0 0.0
      %2058 = vmatprep.subr.mxu0 0.0
      %2059 = vmatpush2.msra.mxu0 0.0
      %2060 = vmatprep.subr.mxu0 0.0
      %2061 = vmatpush2.msra.mxu0 0.0
      %2062 = vmatprep.subr.mxu0 0.0
      %2063 = vmatpush2.msra.mxu0 0.0
      %2064 = vmatprep.subr.mxu0 0.0
      %2065 = vmatpush2.msra.mxu0 0.0
      %2066 = vmatprep.subr.mxu0 0.0
      %2067 = vmatpush2.msra.mxu0 0.0
      %2068 = vmatprep.subr.mxu0 0.0
      %2069 = vmatpush2.msra.mxu0 0.0
      %2070 = vmatprep.subr.mxu0 0.0
      %2071 = vmatpush2.msra.mxu0 0.0
      %2072 = vmatprep.subr.mxu0 0.0
      %2073 = vmatpush2.msra.mxu0 0.0
      %2074 = vmatprep.subr.mxu0 0.0
      %2075 = vmatpush2.msra.mxu0 0.0
      %2076 = vmatprep.subr.mxu0 0.0
      %2077 = vmatpush2.msra.mxu0 0.0
      %2078 = vmatprep.mubr.f32.mxu0 0.0
      %2079 = vmatmul.mubr.f32.gmra.mxu0 %v1988
      %v2080 = vpop.f32.mrf.mxu0
      %v2081 = vadd.f32 0.0, %v2080
      %v2082 = vpop.f32.mrf.mxu0
      %2083 = vmatprep.mubr.f32.mxu0 0.0
      %2084 = vmatmul.mubr.f32.gmra.mxu0 %v1991
      %v2085 = vpop.f32.mrf.mxu0
      %v2086 = vadd.f32 0.0, %v2085
      %v2087 = vpop.f32.mrf.mxu0
      %2088 = vmatprep.mubr.f32.mxu0 0.0
      %2089 = vmatmul.mubr.f32.gmra.mxu0 %v1994
      %v2090 = vpop.f32.mrf.mxu0
      %v2091 = vadd.f32 0.0, %v2090
      %v2092 = vpop.f32.mrf.mxu0
      %2093 = vmatprep.mubr.f32.mxu0 0.0
      %2094 = vmatmul.mubr.f32.gmra.mxu0 %v1997
      %v2095 = vpop.f32.mrf.mxu0
      %v2096 = vadd.f32 0.0, %v2095
      %v2097 = vpop.f32.mrf.mxu0
      %2098 = vmatprep.mubr.f32.mxu0 0.0
      %2099 = vmatmul.mubr.f32.gmra.mxu0 %v2000
      %v2100 = vpop.f32.mrf.mxu0
      %v2101 = vadd.f32 0.0, %v2100
      %v2102 = vpop.f32.mrf.mxu0
      %2103 = vmatprep.mubr.f32.mxu0 0.0
      %2104 = vmatmul.mubr.f32.gmra.mxu0 %v2003
      %v2105 = vpop.f32.mrf.mxu0
      %v2106 = vadd.f32 0.0, %v2105
      %v2107 = vpop.f32.mrf.mxu0
      %2108 = vmatprep.mubr.f32.mxu0 0.0
      %2109 = vmatmul.mubr.f32.gmra.mxu0 %v2006
      %v2110 = vpop.f32.mrf.mxu0
      %v2111 = vadd.f32 0.0, %v2110
      %v2112 = vpop.f32.mrf.mxu0
      %2113 = vmatprep.mubr.f32.mxu0 0.0
      %2114 = vmatmul.mubr.f32.gmra.mxu0 %v2009
      %v2115 = vpop.f32.mrf.mxu0
      %v2116 = vadd.f32 0.0, %v2115
      %v2117 = vpop.f32.mrf.mxu0
      %2118 = vdwg.mxu0
      %v2119 = vadd.f32 %v1969, %v2081
      %v2120 = vadd.f32 %v1970, %v2086
      %v2121 = vadd.f32 %v1971, %v2091
      %v2122 = vadd.f32 %v1972, %v2096
      %v2123 = vadd.f32 %v1973, %v2101
      %v2124 = vadd.f32 %v1974, %v2106
      %v2125 = vadd.f32 %v1975, %v2111
      %v2126 = vadd.f32 %v1976, %v2116
      %v2127 = vld [vmem:[%s1826 + $0x1] sm:$0xff]
      %v2128 = vld [vmem:[%s1826 + $0x11] sm:$0xff]
      %v2129 = vld [vmem:[%s1826 + $0x21] sm:$0xff]
      %v2130 = vld [vmem:[%s1826 + $0x31] sm:$0xff]
      %v2131 = vld [vmem:[%s1826 + $0x41] sm:$0xff]
      %v2132 = vld [vmem:[%s1826 + $0x51] sm:$0xff]
      %v2133 = vld [vmem:[%s1826 + $0x61] sm:$0xff]
      %v2134 = vld [vmem:[%s1826 + $0x71] sm:$0xff]
      %s2135 = scalar_lea.vmem %s1, 52
      %v2136 = vld [vmem:[%s2135] sm:$0xf]
      %v2138 = vsel %vm207, %v2127, 0
      %v2141 = vsel %vm207, %v2128, 0
      %v2144 = vsel %vm207, %v2129, 0
      %v2147 = vsel %vm207, %v2130, 0
      %v2150 = vsel %vm207, %v2131, 0
      %v2153 = vsel %vm207, %v2132, 0
      %v2156 = vsel %vm207, %v2133, 0
      %v2159 = vsel %vm207, %v2134, 0
      %v2162 = vsel %vm232, %v2136, 0
      %2164 = vmatprep.subr.mxu0 0.0
      %2165 = vmatpush1.msra.mxu0 0.0
      %2166 = vmatprep.subr.mxu0 0.0
      %2167 = vmatpush1.msra.mxu0 0.0
      %2168 = vmatprep.subr.mxu0 0.0
      %2169 = vmatpush1.msra.mxu0 0.0
      %2170 = vmatprep.subr.mxu0 0.0
      %2171 = vmatpush1.msra.mxu0 0.0
      %2172 = vmatprep.subr.mxu0 0.0
      %2173 = vmatpush1.msra.mxu0 0.0
      %2174 = vmatprep.subr.mxu0 0.0
      %2175 = vmatpush1.msra.mxu0 0.0
      %2176 = vmatprep.subr.mxu0 0.0
      %2177 = vmatpush1.msra.mxu0 0.0
      %2178 = vmatprep.subr.mxu0 0.0
      %2179 = vmatpush1.msra.mxu0 0.0
      %2180 = vmatprep.subr.mxu0 0.0
      %2181 = vmatpush1.msra.mxu0 0.0
      %2182 = vmatprep.subr.mxu0 0.0
      %2183 = vmatpush1.msra.mxu0 0.0
      %2184 = vmatprep.subr.mxu0 0.0
      %2185 = vmatpush1.msra.mxu0 0.0
      %2186 = vmatprep.subr.mxu0 0.0
      %2187 = vmatpush1.msra.mxu0 0.0
      %2188 = vmatprep.subr.mxu0 0.0
      %2189 = vmatpush1.msra.mxu0 0.0
      %2190 = vmatprep.subr.mxu0 0.0
      %2191 = vmatpush1.msra.mxu0 0.0
      %2192 = vmatprep.subr.mxu0 0.0
      %2193 = vmatpush1.msra.mxu0 0.0
      %2194 = vmatprep.subr.mxu0 0.0
      %2195 = vmatpush1.msra.mxu0 %v2162
      %2196 = vmatprep.subr.mxu0 0.0
      %2197 = vmatpush2.msra.mxu0 0.0
      %2198 = vmatprep.subr.mxu0 0.0
      %2199 = vmatpush2.msra.mxu0 0.0
      %2200 = vmatprep.subr.mxu0 0.0
      %2201 = vmatpush2.msra.mxu0 0.0
      %2202 = vmatprep.subr.mxu0 0.0
      %2203 = vmatpush2.msra.mxu0 0.0
      %2204 = vmatprep.subr.mxu0 0.0
      %2205 = vmatpush2.msra.mxu0 0.0
      %2206 = vmatprep.subr.mxu0 0.0
      %2207 = vmatpush2.msra.mxu0 0.0
      %2208 = vmatprep.subr.mxu0 0.0
      %2209 = vmatpush2.msra.mxu0 0.0
      %2210 = vmatprep.subr.mxu0 0.0
      %2211 = vmatpush2.msra.mxu0 0.0
      %2212 = vmatprep.subr.mxu0 0.0
      %2213 = vmatpush2.msra.mxu0 0.0
      %2214 = vmatprep.subr.mxu0 0.0
      %2215 = vmatpush2.msra.mxu0 0.0
      %2216 = vmatprep.subr.mxu0 0.0
      %2217 = vmatpush2.msra.mxu0 0.0
      %2218 = vmatprep.subr.mxu0 0.0
      %2219 = vmatpush2.msra.mxu0 0.0
      %2220 = vmatprep.subr.mxu0 0.0
      %2221 = vmatpush2.msra.mxu0 0.0
      %2222 = vmatprep.subr.mxu0 0.0
      %2223 = vmatpush2.msra.mxu0 0.0
      %2224 = vmatprep.subr.mxu0 0.0
      %2225 = vmatpush2.msra.mxu0 0.0
      %2226 = vmatprep.subr.mxu0 0.0
      %2227 = vmatpush2.msra.mxu0 0.0
      %2228 = vmatprep.mubr.f32.mxu0 0.0
      %2229 = vmatmul.mubr.f32.gmra.mxu0 %v2138
      %v2230 = vpop.f32.mrf.mxu0
      %v2231 = vadd.f32 0.0, %v2230
      %v2232 = vpop.f32.mrf.mxu0
      %2233 = vmatprep.mubr.f32.mxu0 0.0
      %2234 = vmatmul.mubr.f32.gmra.mxu0 %v2141
      %v2235 = vpop.f32.mrf.mxu0
      %v2236 = vadd.f32 0.0, %v2235
      %v2237 = vpop.f32.mrf.mxu0
      %2238 = vmatprep.mubr.f32.mxu0 0.0
      %2239 = vmatmul.mubr.f32.gmra.mxu0 %v2144
      %v2240 = vpop.f32.mrf.mxu0
      %v2241 = vadd.f32 0.0, %v2240
      %v2242 = vpop.f32.mrf.mxu0
      %2243 = vmatprep.mubr.f32.mxu0 0.0
      %2244 = vmatmul.mubr.f32.gmra.mxu0 %v2147
      %v2245 = vpop.f32.mrf.mxu0
      %v2246 = vadd.f32 0.0, %v2245
      %v2247 = vpop.f32.mrf.mxu0
      %2248 = vmatprep.mubr.f32.mxu0 0.0
      %2249 = vmatmul.mubr.f32.gmra.mxu0 %v2150
      %v2250 = vpop.f32.mrf.mxu0
      %v2251 = vadd.f32 0.0, %v2250
      %v2252 = vpop.f32.mrf.mxu0
      %2253 = vmatprep.mubr.f32.mxu0 0.0
      %2254 = vmatmul.mubr.f32.gmra.mxu0 %v2153
      %v2255 = vpop.f32.mrf.mxu0
      %v2256 = vadd.f32 0.0, %v2255
      %v2257 = vpop.f32.mrf.mxu0
      %2258 = vmatprep.mubr.f32.mxu0 0.0
      %2259 = vmatmul.mubr.f32.gmra.mxu0 %v2156
      %v2260 = vpop.f32.mrf.mxu0
      %v2261 = vadd.f32 0.0, %v2260
      %v2262 = vpop.f32.mrf.mxu0
      %2263 = vmatprep.mubr.f32.mxu0 0.0
      %2264 = vmatmul.mubr.f32.gmra.mxu0 %v2159
      %v2265 = vpop.f32.mrf.mxu0
      %v2266 = vadd.f32 0.0, %v2265
      %v2267 = vpop.f32.mrf.mxu0
      %2268 = vdwg.mxu0
      %v2269 = vadd.f32 %v2119, %v2231
      %v2270 = vadd.f32 %v2120, %v2236
      %v2271 = vadd.f32 %v2121, %v2241
      %v2272 = vadd.f32 %v2122, %v2246
      %v2273 = vadd.f32 %v2123, %v2251
      %v2274 = vadd.f32 %v2124, %v2256
      %v2275 = vadd.f32 %v2125, %v2261
      %v2276 = vadd.f32 %v2126, %v2266
      %v2277 = vld [vmem:[%s1675 + $0x2] sm:$0xff]
      %v2278 = vld [vmem:[%s1675 + $0x12] sm:$0xff]
      %v2279 = vld [vmem:[%s1675 + $0x22] sm:$0xff]
      %v2280 = vld [vmem:[%s1675 + $0x32] sm:$0xff]
      %v2281 = vld [vmem:[%s1675 + $0x42] sm:$0xff]
      %v2282 = vld [vmem:[%s1675 + $0x52] sm:$0xff]
      %v2283 = vld [vmem:[%s1675 + $0x62] sm:$0xff]
      %v2284 = vld [vmem:[%s1675 + $0x72] sm:$0xff]
      %s2285 = scalar_lea.vmem %s1, 56
      %v2286 = vld [vmem:[%s2285] sm:$0xf]
      %v2288 = vsel %vm207, %v2277, 0
      %v2291 = vsel %vm207, %v2278, 0
      %v2294 = vsel %vm207, %v2279, 0
      %v2297 = vsel %vm207, %v2280, 0
      %v2300 = vsel %vm207, %v2281, 0
      %v2303 = vsel %vm207, %v2282, 0
      %v2306 = vsel %vm207, %v2283, 0
      %v2309 = vsel %vm207, %v2284, 0
      %v2312 = vsel %vm232, %v2286, 0
      %2314 = vmatprep.subr.mxu0 0.0
      %2315 = vmatpush1.msra.mxu0 0.0
      %2316 = vmatprep.subr.mxu0 0.0
      %2317 = vmatpush1.msra.mxu0 0.0
      %2318 = vmatprep.subr.mxu0 0.0
      %2319 = vmatpush1.msra.mxu0 0.0
      %2320 = vmatprep.subr.mxu0 0.0
      %2321 = vmatpush1.msra.mxu0 0.0
      %2322 = vmatprep.subr.mxu0 0.0
      %2323 = vmatpush1.msra.mxu0 0.0
      %2324 = vmatprep.subr.mxu0 0.0
      %2325 = vmatpush1.msra.mxu0 0.0
      %2326 = vmatprep.subr.mxu0 0.0
      %2327 = vmatpush1.msra.mxu0 0.0
      %2328 = vmatprep.subr.mxu0 0.0
      %2329 = vmatpush1.msra.mxu0 0.0
      %2330 = vmatprep.subr.mxu0 0.0
      %2331 = vmatpush1.msra.mxu0 0.0
      %2332 = vmatprep.subr.mxu0 0.0
      %2333 = vmatpush1.msra.mxu0 0.0
      %2334 = vmatprep.subr.mxu0 0.0
      %2335 = vmatpush1.msra.mxu0 0.0
      %2336 = vmatprep.subr.mxu0 0.0
      %2337 = vmatpush1.msra.mxu0 0.0
      %2338 = vmatprep.subr.mxu0 0.0
      %2339 = vmatpush1.msra.mxu0 0.0
      %2340 = vmatprep.subr.mxu0 0.0
      %2341 = vmatpush1.msra.mxu0 0.0
      %2342 = vmatprep.subr.mxu0 0.0
      %2343 = vmatpush1.msra.mxu0 0.0
      %2344 = vmatprep.subr.mxu0 0.0
      %2345 = vmatpush1.msra.mxu0 %v2312
      %2346 = vmatprep.subr.mxu0 0.0
      %2347 = vmatpush2.msra.mxu0 0.0
      %2348 = vmatprep.subr.mxu0 0.0
      %2349 = vmatpush2.msra.mxu0 0.0
      %2350 = vmatprep.subr.mxu0 0.0
      %2351 = vmatpush2.msra.mxu0 0.0
      %2352 = vmatprep.subr.mxu0 0.0
      %2353 = vmatpush2.msra.mxu0 0.0
      %2354 = vmatprep.subr.mxu0 0.0
      %2355 = vmatpush2.msra.mxu0 0.0
      %2356 = vmatprep.subr.mxu0 0.0
      %2357 = vmatpush2.msra.mxu0 0.0
      %2358 = vmatprep.subr.mxu0 0.0
      %2359 = vmatpush2.msra.mxu0 0.0
      %2360 = vmatprep.subr.mxu0 0.0
      %2361 = vmatpush2.msra.mxu0 0.0
      %2362 = vmatprep.subr.mxu0 0.0
      %2363 = vmatpush2.msra.mxu0 0.0
      %2364 = vmatprep.subr.mxu0 0.0
      %2365 = vmatpush2.msra.mxu0 0.0
      %2366 = vmatprep.subr.mxu0 0.0
      %2367 = vmatpush2.msra.mxu0 0.0
      %2368 = vmatprep.subr.mxu0 0.0
      %2369 = vmatpush2.msra.mxu0 0.0
      %2370 = vmatprep.subr.mxu0 0.0
      %2371 = vmatpush2.msra.mxu0 0.0
      %2372 = vmatprep.subr.mxu0 0.0
      %2373 = vmatpush2.msra.mxu0 0.0
      %2374 = vmatprep.subr.mxu0 0.0
      %2375 = vmatpush2.msra.mxu0 0.0
      %2376 = vmatprep.subr.mxu0 0.0
      %2377 = vmatpush2.msra.mxu0 0.0
      %2378 = vmatprep.mubr.f32.mxu0 0.0
      %2379 = vmatmul.mubr.f32.gmra.mxu0 %v2288
      %v2380 = vpop.f32.mrf.mxu0
      %v2381 = vadd.f32 0.0, %v2380
      %v2382 = vpop.f32.mrf.mxu0
      %2383 = vmatprep.mubr.f32.mxu0 0.0
      %2384 = vmatmul.mubr.f32.gmra.mxu0 %v2291
      %v2385 = vpop.f32.mrf.mxu0
      %v2386 = vadd.f32 0.0, %v2385
      %v2387 = vpop.f32.mrf.mxu0
      %2388 = vmatprep.mubr.f32.mxu0 0.0
      %2389 = vmatmul.mubr.f32.gmra.mxu0 %v2294
      %v2390 = vpop.f32.mrf.mxu0
      %v2391 = vadd.f32 0.0, %v2390
      %v2392 = vpop.f32.mrf.mxu0
      %2393 = vmatprep.mubr.f32.mxu0 0.0
      %2394 = vmatmul.mubr.f32.gmra.mxu0 %v2297
      %v2395 = vpop.f32.mrf.mxu0
      %v2396 = vadd.f32 0.0, %v2395
      %v2397 = vpop.f32.mrf.mxu0
      %2398 = vmatprep.mubr.f32.mxu0 0.0
      %2399 = vmatmul.mubr.f32.gmra.mxu0 %v2300
      %v2400 = vpop.f32.mrf.mxu0
      %v2401 = vadd.f32 0.0, %v2400
      %v2402 = vpop.f32.mrf.mxu0
      %2403 = vmatprep.mubr.f32.mxu0 0.0
      %2404 = vmatmul.mubr.f32.gmra.mxu0 %v2303
      %v2405 = vpop.f32.mrf.mxu0
      %v2406 = vadd.f32 0.0, %v2405
      %v2407 = vpop.f32.mrf.mxu0
      %2408 = vmatprep.mubr.f32.mxu0 0.0
      %2409 = vmatmul.mubr.f32.gmra.mxu0 %v2306
      %v2410 = vpop.f32.mrf.mxu0
      %v2411 = vadd.f32 0.0, %v2410
      %v2412 = vpop.f32.mrf.mxu0
      %2413 = vmatprep.mubr.f32.mxu0 0.0
      %2414 = vmatmul.mubr.f32.gmra.mxu0 %v2309
      %v2415 = vpop.f32.mrf.mxu0
      %v2416 = vadd.f32 0.0, %v2415
      %v2417 = vpop.f32.mrf.mxu0
      %2418 = vdwg.mxu0
      %v2419 = vadd.f32 %v2269, %v2381
      %v2420 = vadd.f32 %v2270, %v2386
      %v2421 = vadd.f32 %v2271, %v2391
      %v2422 = vadd.f32 %v2272, %v2396
      %v2423 = vadd.f32 %v2273, %v2401
      %v2424 = vadd.f32 %v2274, %v2406
      %v2425 = vadd.f32 %v2275, %v2411
      %v2426 = vadd.f32 %v2276, %v2416
      %s2427 = scalar_lea.vmem %s176, 336
      %v2428 = vld [vmem:[%s2427] sm:$0xff]
      %v2429 = vld [vmem:[%s2427 + $0x10] sm:$0xff]
      %v2430 = vld [vmem:[%s2427 + $0x20] sm:$0xff]
      %v2431 = vld [vmem:[%s2427 + $0x30] sm:$0xff]
      %v2432 = vld [vmem:[%s2427 + $0x40] sm:$0xff]
      %v2433 = vld [vmem:[%s2427 + $0x50] sm:$0xff]
      %v2434 = vld [vmem:[%s2427 + $0x60] sm:$0xff]
      %v2435 = vld [vmem:[%s2427 + $0x70] sm:$0xff]
      %s2436 = scalar_lea.vmem %s1, 60
      %v2437 = vld [vmem:[%s2436] sm:$0xf]
      %v2439 = vsel %vm207, %v2428, 0
      %v2442 = vsel %vm207, %v2429, 0
      %v2445 = vsel %vm207, %v2430, 0
      %v2448 = vsel %vm207, %v2431, 0
      %v2451 = vsel %vm207, %v2432, 0
      %v2454 = vsel %vm207, %v2433, 0
      %v2457 = vsel %vm207, %v2434, 0
      %v2460 = vsel %vm207, %v2435, 0
      %v2463 = vsel %vm232, %v2437, 0
      %2465 = vmatprep.subr.mxu0 0.0
      %2466 = vmatpush1.msra.mxu0 0.0
      %2467 = vmatprep.subr.mxu0 0.0
      %2468 = vmatpush1.msra.mxu0 0.0
      %2469 = vmatprep.subr.mxu0 0.0
      %2470 = vmatpush1.msra.mxu0 0.0
      %2471 = vmatprep.subr.mxu0 0.0
      %2472 = vmatpush1.msra.mxu0 0.0
      %2473 = vmatprep.subr.mxu0 0.0
      %2474 = vmatpush1.msra.mxu0 0.0
      %2475 = vmatprep.subr.mxu0 0.0
      %2476 = vmatpush1.msra.mxu0 0.0
      %2477 = vmatprep.subr.mxu0 0.0
      %2478 = vmatpush1.msra.mxu0 0.0
      %2479 = vmatprep.subr.mxu0 0.0
      %2480 = vmatpush1.msra.mxu0 0.0
      %2481 = vmatprep.subr.mxu0 0.0
      %2482 = vmatpush1.msra.mxu0 0.0
      %2483 = vmatprep.subr.mxu0 0.0
      %2484 = vmatpush1.msra.mxu0 0.0
      %2485 = vmatprep.subr.mxu0 0.0
      %2486 = vmatpush1.msra.mxu0 0.0
      %2487 = vmatprep.subr.mxu0 0.0
      %2488 = vmatpush1.msra.mxu0 0.0
      %2489 = vmatprep.subr.mxu0 0.0
      %2490 = vmatpush1.msra.mxu0 0.0
      %2491 = vmatprep.subr.mxu0 0.0
      %2492 = vmatpush1.msra.mxu0 0.0
      %2493 = vmatprep.subr.mxu0 0.0
      %2494 = vmatpush1.msra.mxu0 0.0
      %2495 = vmatprep.subr.mxu0 0.0
      %2496 = vmatpush1.msra.mxu0 %v2463
      %2497 = vmatprep.subr.mxu0 0.0
      %2498 = vmatpush2.msra.mxu0 0.0
      %2499 = vmatprep.subr.mxu0 0.0
      %2500 = vmatpush2.msra.mxu0 0.0
      %2501 = vmatprep.subr.mxu0 0.0
      %2502 = vmatpush2.msra.mxu0 0.0
      %2503 = vmatprep.subr.mxu0 0.0
      %2504 = vmatpush2.msra.mxu0 0.0
      %2505 = vmatprep.subr.mxu0 0.0
      %2506 = vmatpush2.msra.mxu0 0.0
      %2507 = vmatprep.subr.mxu0 0.0
      %2508 = vmatpush2.msra.mxu0 0.0
      %2509 = vmatprep.subr.mxu0 0.0
      %2510 = vmatpush2.msra.mxu0 0.0
      %2511 = vmatprep.subr.mxu0 0.0
      %2512 = vmatpush2.msra.mxu0 0.0
      %2513 = vmatprep.subr.mxu0 0.0
      %2514 = vmatpush2.msra.mxu0 0.0
      %2515 = vmatprep.subr.mxu0 0.0
      %2516 = vmatpush2.msra.mxu0 0.0
      %2517 = vmatprep.subr.mxu0 0.0
      %2518 = vmatpush2.msra.mxu0 0.0
      %2519 = vmatprep.subr.mxu0 0.0
      %2520 = vmatpush2.msra.mxu0 0.0
      %2521 = vmatprep.subr.mxu0 0.0
      %2522 = vmatpush2.msra.mxu0 0.0
      %2523 = vmatprep.subr.mxu0 0.0
      %2524 = vmatpush2.msra.mxu0 0.0
      %2525 = vmatprep.subr.mxu0 0.0
      %2526 = vmatpush2.msra.mxu0 0.0
      %2527 = vmatprep.subr.mxu0 0.0
      %2528 = vmatpush2.msra.mxu0 0.0
      %2529 = vmatprep.mubr.f32.mxu0 0.0
      %2530 = vmatmul.mubr.f32.gmra.mxu0 %v2439
      %v2531 = vpop.f32.mrf.mxu0
      %v2532 = vadd.f32 0.0, %v2531
      %v2533 = vpop.f32.mrf.mxu0
      %2534 = vmatprep.mubr.f32.mxu0 0.0
      %2535 = vmatmul.mubr.f32.gmra.mxu0 %v2442
      %v2536 = vpop.f32.mrf.mxu0
      %v2537 = vadd.f32 0.0, %v2536
      %v2538 = vpop.f32.mrf.mxu0
      %2539 = vmatprep.mubr.f32.mxu0 0.0
      %2540 = vmatmul.mubr.f32.gmra.mxu0 %v2445
      %v2541 = vpop.f32.mrf.mxu0
      %v2542 = vadd.f32 0.0, %v2541
      %v2543 = vpop.f32.mrf.mxu0
      %2544 = vmatprep.mubr.f32.mxu0 0.0
      %2545 = vmatmul.mubr.f32.gmra.mxu0 %v2448
      %v2546 = vpop.f32.mrf.mxu0
      %v2547 = vadd.f32 0.0, %v2546
      %v2548 = vpop.f32.mrf.mxu0
      %2549 = vmatprep.mubr.f32.mxu0 0.0
      %2550 = vmatmul.mubr.f32.gmra.mxu0 %v2451
      %v2551 = vpop.f32.mrf.mxu0
      %v2552 = vadd.f32 0.0, %v2551
      %v2553 = vpop.f32.mrf.mxu0
      %2554 = vmatprep.mubr.f32.mxu0 0.0
      %2555 = vmatmul.mubr.f32.gmra.mxu0 %v2454
      %v2556 = vpop.f32.mrf.mxu0
      %v2557 = vadd.f32 0.0, %v2556
      %v2558 = vpop.f32.mrf.mxu0
      %2559 = vmatprep.mubr.f32.mxu0 0.0
      %2560 = vmatmul.mubr.f32.gmra.mxu0 %v2457
      %v2561 = vpop.f32.mrf.mxu0
      %v2562 = vadd.f32 0.0, %v2561
      %v2563 = vpop.f32.mrf.mxu0
      %2564 = vmatprep.mubr.f32.mxu0 0.0
      %2565 = vmatmul.mubr.f32.gmra.mxu0 %v2460
      %v2566 = vpop.f32.mrf.mxu0
      %v2567 = vadd.f32 0.0, %v2566
      %v2568 = vpop.f32.mrf.mxu0
      %2569 = vdwg.mxu0
      %v2570 = vadd.f32 %v2419, %v2532
      %v2571 = vadd.f32 %v2420, %v2537
      %v2572 = vadd.f32 %v2421, %v2542
      %v2573 = vadd.f32 %v2422, %v2547
      %v2574 = vadd.f32 %v2423, %v2552
      %v2575 = vadd.f32 %v2424, %v2557
      %v2576 = vadd.f32 %v2425, %v2562
      %v2577 = vadd.f32 %v2426, %v2567
      %s2578 = scalar_lea.vmem %s176, 496
      %v2579 = vld [vmem:[%s2578] sm:$0xff]
      %v2580 = vld [vmem:[%s2578 + $0x10] sm:$0xff]
      %v2581 = vld [vmem:[%s2578 + $0x20] sm:$0xff]
      %v2582 = vld [vmem:[%s2578 + $0x30] sm:$0xff]
      %v2583 = vld [vmem:[%s2578 + $0x40] sm:$0xff]
      %v2584 = vld [vmem:[%s2578 + $0x50] sm:$0xff]
      %v2585 = vld [vmem:[%s2578 + $0x60] sm:$0xff]
      %v2586 = vld [vmem:[%s2578 + $0x70] sm:$0xff]
      %s2587 = scalar_lea.vmem %s1, 64
      %v2588 = vld [vmem:[%s2587] sm:$0xf]
      %v2590 = vsel %vm207, %v2579, 0
      %v2593 = vsel %vm207, %v2580, 0
      %v2596 = vsel %vm207, %v2581, 0
      %v2599 = vsel %vm207, %v2582, 0
      %v2602 = vsel %vm207, %v2583, 0
      %v2605 = vsel %vm207, %v2584, 0
      %v2608 = vsel %vm207, %v2585, 0
      %v2611 = vsel %vm207, %v2586, 0
      %v2614 = vsel %vm232, %v2588, 0
      %2616 = vmatprep.subr.mxu0 0.0
      %2617 = vmatpush1.msra.mxu0 0.0
      %2618 = vmatprep.subr.mxu0 0.0
      %2619 = vmatpush1.msra.mxu0 0.0
      %2620 = vmatprep.subr.mxu0 0.0
      %2621 = vmatpush1.msra.mxu0 0.0
      %2622 = vmatprep.subr.mxu0 0.0
      %2623 = vmatpush1.msra.mxu0 0.0
      %2624 = vmatprep.subr.mxu0 0.0
      %2625 = vmatpush1.msra.mxu0 0.0
      %2626 = vmatprep.subr.mxu0 0.0
      %2627 = vmatpush1.msra.mxu0 0.0
      %2628 = vmatprep.subr.mxu0 0.0
      %2629 = vmatpush1.msra.mxu0 0.0
      %2630 = vmatprep.subr.mxu0 0.0
      %2631 = vmatpush1.msra.mxu0 0.0
      %2632 = vmatprep.subr.mxu0 0.0
      %2633 = vmatpush1.msra.mxu0 0.0
      %2634 = vmatprep.subr.mxu0 0.0
      %2635 = vmatpush1.msra.mxu0 0.0
      %2636 = vmatprep.subr.mxu0 0.0
      %2637 = vmatpush1.msra.mxu0 0.0
      %2638 = vmatprep.subr.mxu0 0.0
      %2639 = vmatpush1.msra.mxu0 0.0
      %2640 = vmatprep.subr.mxu0 0.0
      %2641 = vmatpush1.msra.mxu0 0.0
      %2642 = vmatprep.subr.mxu0 0.0
      %2643 = vmatpush1.msra.mxu0 0.0
      %2644 = vmatprep.subr.mxu0 0.0
      %2645 = vmatpush1.msra.mxu0 0.0
      %2646 = vmatprep.subr.mxu0 0.0
      %2647 = vmatpush1.msra.mxu0 %v2614
      %2648 = vmatprep.subr.mxu0 0.0
      %2649 = vmatpush2.msra.mxu0 0.0
      %2650 = vmatprep.subr.mxu0 0.0
      %2651 = vmatpush2.msra.mxu0 0.0
      %2652 = vmatprep.subr.mxu0 0.0
      %2653 = vmatpush2.msra.mxu0 0.0
      %2654 = vmatprep.subr.mxu0 0.0
      %2655 = vmatpush2.msra.mxu0 0.0
      %2656 = vmatprep.subr.mxu0 0.0
      %2657 = vmatpush2.msra.mxu0 0.0
      %2658 = vmatprep.subr.mxu0 0.0
      %2659 = vmatpush2.msra.mxu0 0.0
      %2660 = vmatprep.subr.mxu0 0.0
      %2661 = vmatpush2.msra.mxu0 0.0
      %2662 = vmatprep.subr.mxu0 0.0
      %2663 = vmatpush2.msra.mxu0 0.0
      %2664 = vmatprep.subr.mxu0 0.0
      %2665 = vmatpush2.msra.mxu0 0.0
      %2666 = vmatprep.subr.mxu0 0.0
      %2667 = vmatpush2.msra.mxu0 0.0
      %2668 = vmatprep.subr.mxu0 0.0
      %2669 = vmatpush2.msra.mxu0 0.0
      %2670 = vmatprep.subr.mxu0 0.0
      %2671 = vmatpush2.msra.mxu0 0.0
      %2672 = vmatprep.subr.mxu0 0.0
      %2673 = vmatpush2.msra.mxu0 0.0
      %2674 = vmatprep.subr.mxu0 0.0
      %2675 = vmatpush2.msra.mxu0 0.0
      %2676 = vmatprep.subr.mxu0 0.0
      %2677 = vmatpush2.msra.mxu0 0.0
      %2678 = vmatprep.subr.mxu0 0.0
      %2679 = vmatpush2.msra.mxu0 0.0
      %2680 = vmatprep.mubr.f32.mxu0 0.0
      %2681 = vmatmul.mubr.f32.gmra.mxu0 %v2590
      %v2682 = vpop.f32.mrf.mxu0
      %v2683 = vadd.f32 0.0, %v2682
      %v2684 = vpop.f32.mrf.mxu0
      %2685 = vmatprep.mubr.f32.mxu0 0.0
      %2686 = vmatmul.mubr.f32.gmra.mxu0 %v2593
      %v2687 = vpop.f32.mrf.mxu0
      %v2688 = vadd.f32 0.0, %v2687
      %v2689 = vpop.f32.mrf.mxu0
      %2690 = vmatprep.mubr.f32.mxu0 0.0
      %2691 = vmatmul.mubr.f32.gmra.mxu0 %v2596
      %v2692 = vpop.f32.mrf.mxu0
      %v2693 = vadd.f32 0.0, %v2692
      %v2694 = vpop.f32.mrf.mxu0
      %2695 = vmatprep.mubr.f32.mxu0 0.0
      %2696 = vmatmul.mubr.f32.gmra.mxu0 %v2599
      %v2697 = vpop.f32.mrf.mxu0
      %v2698 = vadd.f32 0.0, %v2697
      %v2699 = vpop.f32.mrf.mxu0
      %2700 = vmatprep.mubr.f32.mxu0 0.0
      %2701 = vmatmul.mubr.f32.gmra.mxu0 %v2602
      %v2702 = vpop.f32.mrf.mxu0
      %v2703 = vadd.f32 0.0, %v2702
      %v2704 = vpop.f32.mrf.mxu0
      %2705 = vmatprep.mubr.f32.mxu0 0.0
      %2706 = vmatmul.mubr.f32.gmra.mxu0 %v2605
      %v2707 = vpop.f32.mrf.mxu0
      %v2708 = vadd.f32 0.0, %v2707
      %v2709 = vpop.f32.mrf.mxu0
      %2710 = vmatprep.mubr.f32.mxu0 0.0
      %2711 = vmatmul.mubr.f32.gmra.mxu0 %v2608
      %v2712 = vpop.f32.mrf.mxu0
      %v2713 = vadd.f32 0.0, %v2712
      %v2714 = vpop.f32.mrf.mxu0
      %2715 = vmatprep.mubr.f32.mxu0 0.0
      %2716 = vmatmul.mubr.f32.gmra.mxu0 %v2611
      %v2717 = vpop.f32.mrf.mxu0
      %v2718 = vadd.f32 0.0, %v2717
      %v2719 = vpop.f32.mrf.mxu0
      %2720 = vdwg.mxu0
      %v2721 = vadd.f32 %v2570, %v2683
      %v2722 = vadd.f32 %v2571, %v2688
      %v2723 = vadd.f32 %v2572, %v2693
      %v2724 = vadd.f32 %v2573, %v2698
      %v2725 = vadd.f32 %v2574, %v2703
      %v2726 = vadd.f32 %v2575, %v2708
      %v2727 = vadd.f32 %v2576, %v2713
      %v2728 = vadd.f32 %v2577, %v2718
      %v2729 = vld [vmem:[%s2427 + $0x1] sm:$0xff]
      %v2730 = vld [vmem:[%s2427 + $0x11] sm:$0xff]
      %v2731 = vld [vmem:[%s2427 + $0x21] sm:$0xff]
      %v2732 = vld [vmem:[%s2427 + $0x31] sm:$0xff]
      %v2733 = vld [vmem:[%s2427 + $0x41] sm:$0xff]
      %v2734 = vld [vmem:[%s2427 + $0x51] sm:$0xff]
      %v2735 = vld [vmem:[%s2427 + $0x61] sm:$0xff]
      %v2736 = vld [vmem:[%s2427 + $0x71] sm:$0xff]
      %s2737 = scalar_lea.vmem %s1, 68
      %v2738 = vld [vmem:[%s2737] sm:$0xf]
      %v2740 = vsel %vm207, %v2729, 0
      %v2743 = vsel %vm207, %v2730, 0
      %v2746 = vsel %vm207, %v2731, 0
      %v2749 = vsel %vm207, %v2732, 0
      %v2752 = vsel %vm207, %v2733, 0
      %v2755 = vsel %vm207, %v2734, 0
      %v2758 = vsel %vm207, %v2735, 0
      %v2761 = vsel %vm207, %v2736, 0
      %v2764 = vsel %vm232, %v2738, 0
      %2766 = vmatprep.subr.mxu0 0.0
      %2767 = vmatpush1.msra.mxu0 0.0
      %2768 = vmatprep.subr.mxu0 0.0
      %2769 = vmatpush1.msra.mxu0 0.0
      %2770 = vmatprep.subr.mxu0 0.0
      %2771 = vmatpush1.msra.mxu0 0.0
      %2772 = vmatprep.subr.mxu0 0.0
      %2773 = vmatpush1.msra.mxu0 0.0
      %2774 = vmatprep.subr.mxu0 0.0
      %2775 = vmatpush1.msra.mxu0 0.0
      %2776 = vmatprep.subr.mxu0 0.0
      %2777 = vmatpush1.msra.mxu0 0.0
      %2778 = vmatprep.subr.mxu0 0.0
      %2779 = vmatpush1.msra.mxu0 0.0
      %2780 = vmatprep.subr.mxu0 0.0
      %2781 = vmatpush1.msra.mxu0 0.0
      %2782 = vmatprep.subr.mxu0 0.0
      %2783 = vmatpush1.msra.mxu0 0.0
      %2784 = vmatprep.subr.mxu0 0.0
      %2785 = vmatpush1.msra.mxu0 0.0
      %2786 = vmatprep.subr.mxu0 0.0
      %2787 = vmatpush1.msra.mxu0 0.0
      %2788 = vmatprep.subr.mxu0 0.0
      %2789 = vmatpush1.msra.mxu0 0.0
      %2790 = vmatprep.subr.mxu0 0.0
      %2791 = vmatpush1.msra.mxu0 0.0
      %2792 = vmatprep.subr.mxu0 0.0
      %2793 = vmatpush1.msra.mxu0 0.0
      %2794 = vmatprep.subr.mxu0 0.0
      %2795 = vmatpush1.msra.mxu0 0.0
      %2796 = vmatprep.subr.mxu0 0.0
      %2797 = vmatpush1.msra.mxu0 %v2764
      %2798 = vmatprep.subr.mxu0 0.0
      %2799 = vmatpush2.msra.mxu0 0.0
      %2800 = vmatprep.subr.mxu0 0.0
      %2801 = vmatpush2.msra.mxu0 0.0
      %2802 = vmatprep.subr.mxu0 0.0
      %2803 = vmatpush2.msra.mxu0 0.0
      %2804 = vmatprep.subr.mxu0 0.0
      %2805 = vmatpush2.msra.mxu0 0.0
      %2806 = vmatprep.subr.mxu0 0.0
      %2807 = vmatpush2.msra.mxu0 0.0
      %2808 = vmatprep.subr.mxu0 0.0
      %2809 = vmatpush2.msra.mxu0 0.0
      %2810 = vmatprep.subr.mxu0 0.0
      %2811 = vmatpush2.msra.mxu0 0.0
      %2812 = vmatprep.subr.mxu0 0.0
      %2813 = vmatpush2.msra.mxu0 0.0
      %2814 = vmatprep.subr.mxu0 0.0
      %2815 = vmatpush2.msra.mxu0 0.0
      %2816 = vmatprep.subr.mxu0 0.0
      %2817 = vmatpush2.msra.mxu0 0.0
      %2818 = vmatprep.subr.mxu0 0.0
      %2819 = vmatpush2.msra.mxu0 0.0
      %2820 = vmatprep.subr.mxu0 0.0
      %2821 = vmatpush2.msra.mxu0 0.0
      %2822 = vmatprep.subr.mxu0 0.0
      %2823 = vmatpush2.msra.mxu0 0.0
      %2824 = vmatprep.subr.mxu0 0.0
      %2825 = vmatpush2.msra.mxu0 0.0
      %2826 = vmatprep.subr.mxu0 0.0
      %2827 = vmatpush2.msra.mxu0 0.0
      %2828 = vmatprep.subr.mxu0 0.0
      %2829 = vmatpush2.msra.mxu0 0.0
      %2830 = vmatprep.mubr.f32.mxu0 0.0
      %2831 = vmatmul.mubr.f32.gmra.mxu0 %v2740
      %v2832 = vpop.f32.mrf.mxu0
      %v2833 = vadd.f32 0.0, %v2832
      %v2834 = vpop.f32.mrf.mxu0
      %2835 = vmatprep.mubr.f32.mxu0 0.0
      %2836 = vmatmul.mubr.f32.gmra.mxu0 %v2743
      %v2837 = vpop.f32.mrf.mxu0
      %v2838 = vadd.f32 0.0, %v2837
      %v2839 = vpop.f32.mrf.mxu0
      %2840 = vmatprep.mubr.f32.mxu0 0.0
      %2841 = vmatmul.mubr.f32.gmra.mxu0 %v2746
      %v2842 = vpop.f32.mrf.mxu0
      %v2843 = vadd.f32 0.0, %v2842
      %v2844 = vpop.f32.mrf.mxu0
      %2845 = vmatprep.mubr.f32.mxu0 0.0
      %2846 = vmatmul.mubr.f32.gmra.mxu0 %v2749
      %v2847 = vpop.f32.mrf.mxu0
      %v2848 = vadd.f32 0.0, %v2847
      %v2849 = vpop.f32.mrf.mxu0
      %2850 = vmatprep.mubr.f32.mxu0 0.0
      %2851 = vmatmul.mubr.f32.gmra.mxu0 %v2752
      %v2852 = vpop.f32.mrf.mxu0
      %v2853 = vadd.f32 0.0, %v2852
      %v2854 = vpop.f32.mrf.mxu0
      %2855 = vmatprep.mubr.f32.mxu0 0.0
      %2856 = vmatmul.mubr.f32.gmra.mxu0 %v2755
      %v2857 = vpop.f32.mrf.mxu0
      %v2858 = vadd.f32 0.0, %v2857
      %v2859 = vpop.f32.mrf.mxu0
      %2860 = vmatprep.mubr.f32.mxu0 0.0
      %2861 = vmatmul.mubr.f32.gmra.mxu0 %v2758
      %v2862 = vpop.f32.mrf.mxu0
      %v2863 = vadd.f32 0.0, %v2862
      %v2864 = vpop.f32.mrf.mxu0
      %2865 = vmatprep.mubr.f32.mxu0 0.0
      %2866 = vmatmul.mubr.f32.gmra.mxu0 %v2761
      %v2867 = vpop.f32.mrf.mxu0
      %v2868 = vadd.f32 0.0, %v2867
      %v2869 = vpop.f32.mrf.mxu0
      %2870 = vdwg.mxu0
      %v2871 = vadd.f32 %v2721, %v2833
      %v2872 = vadd.f32 %v2722, %v2838
      %v2873 = vadd.f32 %v2723, %v2843
      %v2874 = vadd.f32 %v2724, %v2848
      %v2875 = vadd.f32 %v2725, %v2853
      %v2876 = vadd.f32 %v2726, %v2858
      %v2877 = vadd.f32 %v2727, %v2863
      %v2878 = vadd.f32 %v2728, %v2868
      %v2879 = vld [vmem:[%s2578 + $0x1] sm:$0xff]
      %v2880 = vld [vmem:[%s2578 + $0x11] sm:$0xff]
      %v2881 = vld [vmem:[%s2578 + $0x21] sm:$0xff]
      %v2882 = vld [vmem:[%s2578 + $0x31] sm:$0xff]
      %v2883 = vld [vmem:[%s2578 + $0x41] sm:$0xff]
      %v2884 = vld [vmem:[%s2578 + $0x51] sm:$0xff]
      %v2885 = vld [vmem:[%s2578 + $0x61] sm:$0xff]
      %v2886 = vld [vmem:[%s2578 + $0x71] sm:$0xff]
      %s2887 = scalar_lea.vmem %s1, 72
      %v2888 = vld [vmem:[%s2887] sm:$0xf]
      %v2890 = vsel %vm207, %v2879, 0
      %v2893 = vsel %vm207, %v2880, 0
      %v2896 = vsel %vm207, %v2881, 0
      %v2899 = vsel %vm207, %v2882, 0
      %v2902 = vsel %vm207, %v2883, 0
      %v2905 = vsel %vm207, %v2884, 0
      %v2908 = vsel %vm207, %v2885, 0
      %v2911 = vsel %vm207, %v2886, 0
      %v2914 = vsel %vm232, %v2888, 0
      %2916 = vmatprep.subr.mxu0 0.0
      %2917 = vmatpush1.msra.mxu0 0.0
      %2918 = vmatprep.subr.mxu0 0.0
      %2919 = vmatpush1.msra.mxu0 0.0
      %2920 = vmatprep.subr.mxu0 0.0
      %2921 = vmatpush1.msra.mxu0 0.0
      %2922 = vmatprep.subr.mxu0 0.0
      %2923 = vmatpush1.msra.mxu0 0.0
      %2924 = vmatprep.subr.mxu0 0.0
      %2925 = vmatpush1.msra.mxu0 0.0
      %2926 = vmatprep.subr.mxu0 0.0
      %2927 = vmatpush1.msra.mxu0 0.0
      %2928 = vmatprep.subr.mxu0 0.0
      %2929 = vmatpush1.msra.mxu0 0.0
      %2930 = vmatprep.subr.mxu0 0.0
      %2931 = vmatpush1.msra.mxu0 0.0
      %2932 = vmatprep.subr.mxu0 0.0
      %2933 = vmatpush1.msra.mxu0 0.0
      %2934 = vmatprep.subr.mxu0 0.0
      %2935 = vmatpush1.msra.mxu0 0.0
      %2936 = vmatprep.subr.mxu0 0.0
      %2937 = vmatpush1.msra.mxu0 0.0
      %2938 = vmatprep.subr.mxu0 0.0
      %2939 = vmatpush1.msra.mxu0 0.0
      %2940 = vmatprep.subr.mxu0 0.0
      %2941 = vmatpush1.msra.mxu0 0.0
      %2942 = vmatprep.subr.mxu0 0.0
      %2943 = vmatpush1.msra.mxu0 0.0
      %2944 = vmatprep.subr.mxu0 0.0
      %2945 = vmatpush1.msra.mxu0 0.0
      %2946 = vmatprep.subr.mxu0 0.0
      %2947 = vmatpush1.msra.mxu0 %v2914
      %2948 = vmatprep.subr.mxu0 0.0
      %2949 = vmatpush2.msra.mxu0 0.0
      %2950 = vmatprep.subr.mxu0 0.0
      %2951 = vmatpush2.msra.mxu0 0.0
      %2952 = vmatprep.subr.mxu0 0.0
      %2953 = vmatpush2.msra.mxu0 0.0
      %2954 = vmatprep.subr.mxu0 0.0
      %2955 = vmatpush2.msra.mxu0 0.0
      %2956 = vmatprep.subr.mxu0 0.0
      %2957 = vmatpush2.msra.mxu0 0.0
      %2958 = vmatprep.subr.mxu0 0.0
      %2959 = vmatpush2.msra.mxu0 0.0
      %2960 = vmatprep.subr.mxu0 0.0
      %2961 = vmatpush2.msra.mxu0 0.0
      %2962 = vmatprep.subr.mxu0 0.0
      %2963 = vmatpush2.msra.mxu0 0.0
      %2964 = vmatprep.subr.mxu0 0.0
      %2965 = vmatpush2.msra.mxu0 0.0
      %2966 = vmatprep.subr.mxu0 0.0
      %2967 = vmatpush2.msra.mxu0 0.0
      %2968 = vmatprep.subr.mxu0 0.0
      %2969 = vmatpush2.msra.mxu0 0.0
      %2970 = vmatprep.subr.mxu0 0.0
      %2971 = vmatpush2.msra.mxu0 0.0
      %2972 = vmatprep.subr.mxu0 0.0
      %2973 = vmatpush2.msra.mxu0 0.0
      %2974 = vmatprep.subr.mxu0 0.0
      %2975 = vmatpush2.msra.mxu0 0.0
      %2976 = vmatprep.subr.mxu0 0.0
      %2977 = vmatpush2.msra.mxu0 0.0
      %2978 = vmatprep.subr.mxu0 0.0
      %2979 = vmatpush2.msra.mxu0 0.0
      %2980 = vmatprep.mubr.f32.mxu0 0.0
      %2981 = vmatmul.mubr.f32.gmra.mxu0 %v2890
      %v2982 = vpop.f32.mrf.mxu0
      %v2983 = vadd.f32 0.0, %v2982
      %v2984 = vpop.f32.mrf.mxu0
      %2985 = vmatprep.mubr.f32.mxu0 0.0
      %2986 = vmatmul.mubr.f32.gmra.mxu0 %v2893
      %v2987 = vpop.f32.mrf.mxu0
      %v2988 = vadd.f32 0.0, %v2987
      %v2989 = vpop.f32.mrf.mxu0
      %2990 = vmatprep.mubr.f32.mxu0 0.0
      %2991 = vmatmul.mubr.f32.gmra.mxu0 %v2896
      %v2992 = vpop.f32.mrf.mxu0
      %v2993 = vadd.f32 0.0, %v2992
      %v2994 = vpop.f32.mrf.mxu0
      %2995 = vmatprep.mubr.f32.mxu0 0.0
      %2996 = vmatmul.mubr.f32.gmra.mxu0 %v2899
      %v2997 = vpop.f32.mrf.mxu0
      %v2998 = vadd.f32 0.0, %v2997
      %v2999 = vpop.f32.mrf.mxu0
      %3000 = vmatprep.mubr.f32.mxu0 0.0
      %3001 = vmatmul.mubr.f32.gmra.mxu0 %v2902
      %v3002 = vpop.f32.mrf.mxu0
      %v3003 = vadd.f32 0.0, %v3002
      %v3004 = vpop.f32.mrf.mxu0
      %3005 = vmatprep.mubr.f32.mxu0 0.0
      %3006 = vmatmul.mubr.f32.gmra.mxu0 %v2905
      %v3007 = vpop.f32.mrf.mxu0
      %v3008 = vadd.f32 0.0, %v3007
      %v3009 = vpop.f32.mrf.mxu0
      %3010 = vmatprep.mubr.f32.mxu0 0.0
      %3011 = vmatmul.mubr.f32.gmra.mxu0 %v2908
      %v3012 = vpop.f32.mrf.mxu0
      %v3013 = vadd.f32 0.0, %v3012
      %v3014 = vpop.f32.mrf.mxu0
      %3015 = vmatprep.mubr.f32.mxu0 0.0
      %3016 = vmatmul.mubr.f32.gmra.mxu0 %v2911
      %v3017 = vpop.f32.mrf.mxu0
      %v3018 = vadd.f32 0.0, %v3017
      %v3019 = vpop.f32.mrf.mxu0
      %3020 = vdwg.mxu0
      %v3021 = vadd.f32 %v2871, %v2983
      %v3022 = vadd.f32 %v2872, %v2988
      %v3023 = vadd.f32 %v2873, %v2993
      %v3024 = vadd.f32 %v2874, %v2998
      %v3025 = vadd.f32 %v2875, %v3003
      %v3026 = vadd.f32 %v2876, %v3008
      %v3027 = vadd.f32 %v2877, %v3013
      %v3028 = vadd.f32 %v2878, %v3018
      %v3029 = vld [vmem:[%s2427 + $0x2] sm:$0xff]
      %v3030 = vld [vmem:[%s2427 + $0x12] sm:$0xff]
      %v3031 = vld [vmem:[%s2427 + $0x22] sm:$0xff]
      %v3032 = vld [vmem:[%s2427 + $0x32] sm:$0xff]
      %v3033 = vld [vmem:[%s2427 + $0x42] sm:$0xff]
      %v3034 = vld [vmem:[%s2427 + $0x52] sm:$0xff]
      %v3035 = vld [vmem:[%s2427 + $0x62] sm:$0xff]
      %v3036 = vld [vmem:[%s2427 + $0x72] sm:$0xff]
      %s3037 = scalar_lea.vmem %s1, 76
      %v3038 = vld [vmem:[%s3037] sm:$0xf]
      %v3040 = vsel %vm207, %v3029, 0
      %v3043 = vsel %vm207, %v3030, 0
      %v3046 = vsel %vm207, %v3031, 0
      %v3049 = vsel %vm207, %v3032, 0
      %v3052 = vsel %vm207, %v3033, 0
      %v3055 = vsel %vm207, %v3034, 0
      %v3058 = vsel %vm207, %v3035, 0
      %v3061 = vsel %vm207, %v3036, 0
      %v3064 = vsel %vm232, %v3038, 0
      %3066 = vmatprep.subr.mxu0 0.0
      %3067 = vmatpush1.msra.mxu0 0.0
      %3068 = vmatprep.subr.mxu0 0.0
      %3069 = vmatpush1.msra.mxu0 0.0
      %3070 = vmatprep.subr.mxu0 0.0
      %3071 = vmatpush1.msra.mxu0 0.0
      %3072 = vmatprep.subr.mxu0 0.0
      %3073 = vmatpush1.msra.mxu0 0.0
      %3074 = vmatprep.subr.mxu0 0.0
      %3075 = vmatpush1.msra.mxu0 0.0
      %3076 = vmatprep.subr.mxu0 0.0
      %3077 = vmatpush1.msra.mxu0 0.0
      %3078 = vmatprep.subr.mxu0 0.0
      %3079 = vmatpush1.msra.mxu0 0.0
      %3080 = vmatprep.subr.mxu0 0.0
      %3081 = vmatpush1.msra.mxu0 0.0
      %3082 = vmatprep.subr.mxu0 0.0
      %3083 = vmatpush1.msra.mxu0 0.0
      %3084 = vmatprep.subr.mxu0 0.0
      %3085 = vmatpush1.msra.mxu0 0.0
      %3086 = vmatprep.subr.mxu0 0.0
      %3087 = vmatpush1.msra.mxu0 0.0
      %3088 = vmatprep.subr.mxu0 0.0
      %3089 = vmatpush1.msra.mxu0 0.0
      %3090 = vmatprep.subr.mxu0 0.0
      %3091 = vmatpush1.msra.mxu0 0.0
      %3092 = vmatprep.subr.mxu0 0.0
      %3093 = vmatpush1.msra.mxu0 0.0
      %3094 = vmatprep.subr.mxu0 0.0
      %3095 = vmatpush1.msra.mxu0 0.0
      %3096 = vmatprep.subr.mxu0 0.0
      %3097 = vmatpush1.msra.mxu0 %v3064
      %3098 = vmatprep.subr.mxu0 0.0
      %3099 = vmatpush2.msra.mxu0 0.0
      %3100 = vmatprep.subr.mxu0 0.0
      %3101 = vmatpush2.msra.mxu0 0.0
      %3102 = vmatprep.subr.mxu0 0.0
      %3103 = vmatpush2.msra.mxu0 0.0
      %3104 = vmatprep.subr.mxu0 0.0
      %3105 = vmatpush2.msra.mxu0 0.0
      %3106 = vmatprep.subr.mxu0 0.0
      %3107 = vmatpush2.msra.mxu0 0.0
      %3108 = vmatprep.subr.mxu0 0.0
      %3109 = vmatpush2.msra.mxu0 0.0
      %3110 = vmatprep.subr.mxu0 0.0
      %3111 = vmatpush2.msra.mxu0 0.0
      %3112 = vmatprep.subr.mxu0 0.0
      %3113 = vmatpush2.msra.mxu0 0.0
      %3114 = vmatprep.subr.mxu0 0.0
      %3115 = vmatpush2.msra.mxu0 0.0
      %3116 = vmatprep.subr.mxu0 0.0
      %3117 = vmatpush2.msra.mxu0 0.0
      %3118 = vmatprep.subr.mxu0 0.0
      %3119 = vmatpush2.msra.mxu0 0.0
      %3120 = vmatprep.subr.mxu0 0.0
      %3121 = vmatpush2.msra.mxu0 0.0
      %3122 = vmatprep.subr.mxu0 0.0
      %3123 = vmatpush2.msra.mxu0 0.0
      %3124 = vmatprep.subr.mxu0 0.0
      %3125 = vmatpush2.msra.mxu0 0.0
      %3126 = vmatprep.subr.mxu0 0.0
      %3127 = vmatpush2.msra.mxu0 0.0
      %3128 = vmatprep.subr.mxu0 0.0
      %3129 = vmatpush2.msra.mxu0 0.0
      %3130 = vmatprep.mubr.f32.mxu0 0.0
      %3131 = vmatmul.mubr.f32.gmra.mxu0 %v3040
      %v3132 = vpop.f32.mrf.mxu0
      %v3133 = vadd.f32 0.0, %v3132
      %v3134 = vpop.f32.mrf.mxu0
      %3135 = vmatprep.mubr.f32.mxu0 0.0
      %3136 = vmatmul.mubr.f32.gmra.mxu0 %v3043
      %v3137 = vpop.f32.mrf.mxu0
      %v3138 = vadd.f32 0.0, %v3137
      %v3139 = vpop.f32.mrf.mxu0
      %3140 = vmatprep.mubr.f32.mxu0 0.0
      %3141 = vmatmul.mubr.f32.gmra.mxu0 %v3046
      %v3142 = vpop.f32.mrf.mxu0
      %v3143 = vadd.f32 0.0, %v3142
      %v3144 = vpop.f32.mrf.mxu0
      %3145 = vmatprep.mubr.f32.mxu0 0.0
      %3146 = vmatmul.mubr.f32.gmra.mxu0 %v3049
      %v3147 = vpop.f32.mrf.mxu0
      %v3148 = vadd.f32 0.0, %v3147
      %v3149 = vpop.f32.mrf.mxu0
      %3150 = vmatprep.mubr.f32.mxu0 0.0
      %3151 = vmatmul.mubr.f32.gmra.mxu0 %v3052
      %v3152 = vpop.f32.mrf.mxu0
      %v3153 = vadd.f32 0.0, %v3152
      %v3154 = vpop.f32.mrf.mxu0
      %3155 = vmatprep.mubr.f32.mxu0 0.0
      %3156 = vmatmul.mubr.f32.gmra.mxu0 %v3055
      %v3157 = vpop.f32.mrf.mxu0
      %v3158 = vadd.f32 0.0, %v3157
      %v3159 = vpop.f32.mrf.mxu0
      %3160 = vmatprep.mubr.f32.mxu0 0.0
      %3161 = vmatmul.mubr.f32.gmra.mxu0 %v3058
      %v3162 = vpop.f32.mrf.mxu0
      %v3163 = vadd.f32 0.0, %v3162
      %v3164 = vpop.f32.mrf.mxu0
      %3165 = vmatprep.mubr.f32.mxu0 0.0
      %3166 = vmatmul.mubr.f32.gmra.mxu0 %v3061
      %v3167 = vpop.f32.mrf.mxu0
      %v3168 = vadd.f32 0.0, %v3167
      %v3169 = vpop.f32.mrf.mxu0
      %3170 = vdwg.mxu0
      %v3171 = vadd.f32 %v3021, %v3133
      %v3172 = vadd.f32 %v3022, %v3138
      %v3173 = vadd.f32 %v3023, %v3143
      %v3174 = vadd.f32 %v3024, %v3148
      %v3175 = vadd.f32 %v3025, %v3153
      %v3176 = vadd.f32 %v3026, %v3158
      %v3177 = vadd.f32 %v3027, %v3163
      %v3178 = vadd.f32 %v3028, %v3168
      %s3179 = scalar_lea.vmem %s176, 32
      %v3180 = vld [vmem:[%s3179] sm:$0xff]
      %v3181 = vld [vmem:[%s3179 + $0x10] sm:$0xff]
      %v3182 = vld [vmem:[%s3179 + $0x20] sm:$0xff]
      %v3183 = vld [vmem:[%s3179 + $0x30] sm:$0xff]
      %v3184 = vld [vmem:[%s3179 + $0x40] sm:$0xff]
      %v3185 = vld [vmem:[%s3179 + $0x50] sm:$0xff]
      %v3186 = vld [vmem:[%s3179 + $0x60] sm:$0xff]
      %v3187 = vld [vmem:[%s3179 + $0x70] sm:$0xff]
      %s3188 = scalar_lea.vmem %s1, 80
      %v3189 = vld [vmem:[%s3188] sm:$0xf]
      %v3191 = vsel %vm207, %v3180, 0
      %v3194 = vsel %vm207, %v3181, 0
      %v3197 = vsel %vm207, %v3182, 0
      %v3200 = vsel %vm207, %v3183, 0
      %v3203 = vsel %vm207, %v3184, 0
      %v3206 = vsel %vm207, %v3185, 0
      %v3209 = vsel %vm207, %v3186, 0
      %v3212 = vsel %vm207, %v3187, 0
      %v3215 = vsel %vm232, %v3189, 0
      %3217 = vmatprep.subr.mxu0 0.0
      %3218 = vmatpush1.msra.mxu0 0.0
      %3219 = vmatprep.subr.mxu0 0.0
      %3220 = vmatpush1.msra.mxu0 0.0
      %3221 = vmatprep.subr.mxu0 0.0
      %3222 = vmatpush1.msra.mxu0 0.0
      %3223 = vmatprep.subr.mxu0 0.0
      %3224 = vmatpush1.msra.mxu0 0.0
      %3225 = vmatprep.subr.mxu0 0.0
      %3226 = vmatpush1.msra.mxu0 0.0
      %3227 = vmatprep.subr.mxu0 0.0
      %3228 = vmatpush1.msra.mxu0 0.0
      %3229 = vmatprep.subr.mxu0 0.0
      %3230 = vmatpush1.msra.mxu0 0.0
      %3231 = vmatprep.subr.mxu0 0.0
      %3232 = vmatpush1.msra.mxu0 0.0
      %3233 = vmatprep.subr.mxu0 0.0
      %3234 = vmatpush1.msra.mxu0 0.0
      %3235 = vmatprep.subr.mxu0 0.0
      %3236 = vmatpush1.msra.mxu0 0.0
      %3237 = vmatprep.subr.mxu0 0.0
      %3238 = vmatpush1.msra.mxu0 0.0
      %3239 = vmatprep.subr.mxu0 0.0
      %3240 = vmatpush1.msra.mxu0 0.0
      %3241 = vmatprep.subr.mxu0 0.0
      %3242 = vmatpush1.msra.mxu0 0.0
      %3243 = vmatprep.subr.mxu0 0.0
      %3244 = vmatpush1.msra.mxu0 0.0
      %3245 = vmatprep.subr.mxu0 0.0
      %3246 = vmatpush1.msra.mxu0 0.0
      %3247 = vmatprep.subr.mxu0 0.0
      %3248 = vmatpush1.msra.mxu0 %v3215
      %3249 = vmatprep.subr.mxu0 0.0
      %3250 = vmatpush2.msra.mxu0 0.0
      %3251 = vmatprep.subr.mxu0 0.0
      %3252 = vmatpush2.msra.mxu0 0.0
      %3253 = vmatprep.subr.mxu0 0.0
      %3254 = vmatpush2.msra.mxu0 0.0
      %3255 = vmatprep.subr.mxu0 0.0
      %3256 = vmatpush2.msra.mxu0 0.0
      %3257 = vmatprep.subr.mxu0 0.0
      %3258 = vmatpush2.msra.mxu0 0.0
      %3259 = vmatprep.subr.mxu0 0.0
      %3260 = vmatpush2.msra.mxu0 0.0
      %3261 = vmatprep.subr.mxu0 0.0
      %3262 = vmatpush2.msra.mxu0 0.0
      %3263 = vmatprep.subr.mxu0 0.0
      %3264 = vmatpush2.msra.mxu0 0.0
      %3265 = vmatprep.subr.mxu0 0.0
      %3266 = vmatpush2.msra.mxu0 0.0
      %3267 = vmatprep.subr.mxu0 0.0
      %3268 = vmatpush2.msra.mxu0 0.0
      %3269 = vmatprep.subr.mxu0 0.0
      %3270 = vmatpush2.msra.mxu0 0.0
      %3271 = vmatprep.subr.mxu0 0.0
      %3272 = vmatpush2.msra.mxu0 0.0
      %3273 = vmatprep.subr.mxu0 0.0
      %3274 = vmatpush2.msra.mxu0 0.0
      %3275 = vmatprep.subr.mxu0 0.0
      %3276 = vmatpush2.msra.mxu0 0.0
      %3277 = vmatprep.subr.mxu0 0.0
      %3278 = vmatpush2.msra.mxu0 0.0
      %3279 = vmatprep.subr.mxu0 0.0
      %3280 = vmatpush2.msra.mxu0 0.0
      %3281 = vmatprep.mubr.f32.mxu0 0.0
      %3282 = vmatmul.mubr.f32.gmra.mxu0 %v3191
      %v3283 = vpop.f32.mrf.mxu0
      %v3284 = vadd.f32 0.0, %v3283
      %v3285 = vpop.f32.mrf.mxu0
      %3286 = vmatprep.mubr.f32.mxu0 0.0
      %3287 = vmatmul.mubr.f32.gmra.mxu0 %v3194
      %v3288 = vpop.f32.mrf.mxu0
      %v3289 = vadd.f32 0.0, %v3288
      %v3290 = vpop.f32.mrf.mxu0
      %3291 = vmatprep.mubr.f32.mxu0 0.0
      %3292 = vmatmul.mubr.f32.gmra.mxu0 %v3197
      %v3293 = vpop.f32.mrf.mxu0
      %v3294 = vadd.f32 0.0, %v3293
      %v3295 = vpop.f32.mrf.mxu0
      %3296 = vmatprep.mubr.f32.mxu0 0.0
      %3297 = vmatmul.mubr.f32.gmra.mxu0 %v3200
      %v3298 = vpop.f32.mrf.mxu0
      %v3299 = vadd.f32 0.0, %v3298
      %v3300 = vpop.f32.mrf.mxu0
      %3301 = vmatprep.mubr.f32.mxu0 0.0
      %3302 = vmatmul.mubr.f32.gmra.mxu0 %v3203
      %v3303 = vpop.f32.mrf.mxu0
      %v3304 = vadd.f32 0.0, %v3303
      %v3305 = vpop.f32.mrf.mxu0
      %3306 = vmatprep.mubr.f32.mxu0 0.0
      %3307 = vmatmul.mubr.f32.gmra.mxu0 %v3206
      %v3308 = vpop.f32.mrf.mxu0
      %v3309 = vadd.f32 0.0, %v3308
      %v3310 = vpop.f32.mrf.mxu0
      %3311 = vmatprep.mubr.f32.mxu0 0.0
      %3312 = vmatmul.mubr.f32.gmra.mxu0 %v3209
      %v3313 = vpop.f32.mrf.mxu0
      %v3314 = vadd.f32 0.0, %v3313
      %v3315 = vpop.f32.mrf.mxu0
      %3316 = vmatprep.mubr.f32.mxu0 0.0
      %3317 = vmatmul.mubr.f32.gmra.mxu0 %v3212
      %v3318 = vpop.f32.mrf.mxu0
      %v3319 = vadd.f32 0.0, %v3318
      %v3320 = vpop.f32.mrf.mxu0
      %3321 = vdwg.mxu0
      %v3322 = vadd.f32 %v3171, %v3284
      %v3323 = vadd.f32 %v3172, %v3289
      %v3324 = vadd.f32 %v3173, %v3294
      %v3325 = vadd.f32 %v3174, %v3299
      %v3326 = vadd.f32 %v3175, %v3304
      %v3327 = vadd.f32 %v3176, %v3309
      %v3328 = vadd.f32 %v3177, %v3314
      %v3329 = vadd.f32 %v3178, %v3319
      %s3330 = scalar_lea.vmem %s176, 192
      %v3331 = vld [vmem:[%s3330] sm:$0xff]
      %v3332 = vld [vmem:[%s3330 + $0x10] sm:$0xff]
      %v3333 = vld [vmem:[%s3330 + $0x20] sm:$0xff]
      %v3334 = vld [vmem:[%s3330 + $0x30] sm:$0xff]
      %v3335 = vld [vmem:[%s3330 + $0x40] sm:$0xff]
      %v3336 = vld [vmem:[%s3330 + $0x50] sm:$0xff]
      %v3337 = vld [vmem:[%s3330 + $0x60] sm:$0xff]
      %v3338 = vld [vmem:[%s3330 + $0x70] sm:$0xff]
      %s3339 = scalar_lea.vmem %s1, 84
      %v3340 = vld [vmem:[%s3339] sm:$0xf]
      %v3342 = vsel %vm207, %v3331, 0
      %v3345 = vsel %vm207, %v3332, 0
      %v3348 = vsel %vm207, %v3333, 0
      %v3351 = vsel %vm207, %v3334, 0
      %v3354 = vsel %vm207, %v3335, 0
      %v3357 = vsel %vm207, %v3336, 0
      %v3360 = vsel %vm207, %v3337, 0
      %v3363 = vsel %vm207, %v3338, 0
      %v3366 = vsel %vm232, %v3340, 0
      %3368 = vmatprep.subr.mxu0 0.0
      %3369 = vmatpush1.msra.mxu0 0.0
      %3370 = vmatprep.subr.mxu0 0.0
      %3371 = vmatpush1.msra.mxu0 0.0
      %3372 = vmatprep.subr.mxu0 0.0
      %3373 = vmatpush1.msra.mxu0 0.0
      %3374 = vmatprep.subr.mxu0 0.0
      %3375 = vmatpush1.msra.mxu0 0.0
      %3376 = vmatprep.subr.mxu0 0.0
      %3377 = vmatpush1.msra.mxu0 0.0
      %3378 = vmatprep.subr.mxu0 0.0
      %3379 = vmatpush1.msra.mxu0 0.0
      %3380 = vmatprep.subr.mxu0 0.0
      %3381 = vmatpush1.msra.mxu0 0.0
      %3382 = vmatprep.subr.mxu0 0.0
      %3383 = vmatpush1.msra.mxu0 0.0
      %3384 = vmatprep.subr.mxu0 0.0
      %3385 = vmatpush1.msra.mxu0 0.0
      %3386 = vmatprep.subr.mxu0 0.0
      %3387 = vmatpush1.msra.mxu0 0.0
      %3388 = vmatprep.subr.mxu0 0.0
      %3389 = vmatpush1.msra.mxu0 0.0
      %3390 = vmatprep.subr.mxu0 0.0
      %3391 = vmatpush1.msra.mxu0 0.0
      %3392 = vmatprep.subr.mxu0 0.0
      %3393 = vmatpush1.msra.mxu0 0.0
      %3394 = vmatprep.subr.mxu0 0.0
      %3395 = vmatpush1.msra.mxu0 0.0
      %3396 = vmatprep.subr.mxu0 0.0
      %3397 = vmatpush1.msra.mxu0 0.0
      %3398 = vmatprep.subr.mxu0 0.0
      %3399 = vmatpush1.msra.mxu0 %v3366
      %3400 = vmatprep.subr.mxu0 0.0
      %3401 = vmatpush2.msra.mxu0 0.0
      %3402 = vmatprep.subr.mxu0 0.0
      %3403 = vmatpush2.msra.mxu0 0.0
      %3404 = vmatprep.subr.mxu0 0.0
      %3405 = vmatpush2.msra.mxu0 0.0
      %3406 = vmatprep.subr.mxu0 0.0
      %3407 = vmatpush2.msra.mxu0 0.0
      %3408 = vmatprep.subr.mxu0 0.0
      %3409 = vmatpush2.msra.mxu0 0.0
      %3410 = vmatprep.subr.mxu0 0.0
      %3411 = vmatpush2.msra.mxu0 0.0
      %3412 = vmatprep.subr.mxu0 0.0
      %3413 = vmatpush2.msra.mxu0 0.0
      %3414 = vmatprep.subr.mxu0 0.0
      %3415 = vmatpush2.msra.mxu0 0.0
      %3416 = vmatprep.subr.mxu0 0.0
      %3417 = vmatpush2.msra.mxu0 0.0
      %3418 = vmatprep.subr.mxu0 0.0
      %3419 = vmatpush2.msra.mxu0 0.0
      %3420 = vmatprep.subr.mxu0 0.0
      %3421 = vmatpush2.msra.mxu0 0.0
      %3422 = vmatprep.subr.mxu0 0.0
      %3423 = vmatpush2.msra.mxu0 0.0
      %3424 = vmatprep.subr.mxu0 0.0
      %3425 = vmatpush2.msra.mxu0 0.0
      %3426 = vmatprep.subr.mxu0 0.0
      %3427 = vmatpush2.msra.mxu0 0.0
      %3428 = vmatprep.subr.mxu0 0.0
      %3429 = vmatpush2.msra.mxu0 0.0
      %3430 = vmatprep.subr.mxu0 0.0
      %3431 = vmatpush2.msra.mxu0 0.0
      %3432 = vmatprep.mubr.f32.mxu0 0.0
      %3433 = vmatmul.mubr.f32.gmra.mxu0 %v3342
      %v3434 = vpop.f32.mrf.mxu0
      %v3435 = vadd.f32 0.0, %v3434
      %v3436 = vpop.f32.mrf.mxu0
      %3437 = vmatprep.mubr.f32.mxu0 0.0
      %3438 = vmatmul.mubr.f32.gmra.mxu0 %v3345
      %v3439 = vpop.f32.mrf.mxu0
      %v3440 = vadd.f32 0.0, %v3439
      %v3441 = vpop.f32.mrf.mxu0
      %3442 = vmatprep.mubr.f32.mxu0 0.0
      %3443 = vmatmul.mubr.f32.gmra.mxu0 %v3348
      %v3444 = vpop.f32.mrf.mxu0
      %v3445 = vadd.f32 0.0, %v3444
      %v3446 = vpop.f32.mrf.mxu0
      %3447 = vmatprep.mubr.f32.mxu0 0.0
      %3448 = vmatmul.mubr.f32.gmra.mxu0 %v3351
      %v3449 = vpop.f32.mrf.mxu0
      %v3450 = vadd.f32 0.0, %v3449
      %v3451 = vpop.f32.mrf.mxu0
      %3452 = vmatprep.mubr.f32.mxu0 0.0
      %3453 = vmatmul.mubr.f32.gmra.mxu0 %v3354
      %v3454 = vpop.f32.mrf.mxu0
      %v3455 = vadd.f32 0.0, %v3454
      %v3456 = vpop.f32.mrf.mxu0
      %3457 = vmatprep.mubr.f32.mxu0 0.0
      %3458 = vmatmul.mubr.f32.gmra.mxu0 %v3357
      %v3459 = vpop.f32.mrf.mxu0
      %v3460 = vadd.f32 0.0, %v3459
      %v3461 = vpop.f32.mrf.mxu0
      %3462 = vmatprep.mubr.f32.mxu0 0.0
      %3463 = vmatmul.mubr.f32.gmra.mxu0 %v3360
      %v3464 = vpop.f32.mrf.mxu0
      %v3465 = vadd.f32 0.0, %v3464
      %v3466 = vpop.f32.mrf.mxu0
      %3467 = vmatprep.mubr.f32.mxu0 0.0
      %3468 = vmatmul.mubr.f32.gmra.mxu0 %v3363
      %v3469 = vpop.f32.mrf.mxu0
      %v3470 = vadd.f32 0.0, %v3469
      %v3471 = vpop.f32.mrf.mxu0
      %3472 = vdwg.mxu0
      %v3473 = vadd.f32 %v3322, %v3435
      %v3474 = vadd.f32 %v3323, %v3440
      %v3475 = vadd.f32 %v3324, %v3445
      %v3476 = vadd.f32 %v3325, %v3450
      %v3477 = vadd.f32 %v3326, %v3455
      %v3478 = vadd.f32 %v3327, %v3460
      %v3479 = vadd.f32 %v3328, %v3465
      %v3480 = vadd.f32 %v3329, %v3470
      %v3481 = vld [vmem:[%s3179 + $0x1] sm:$0xff]
      %v3482 = vld [vmem:[%s3179 + $0x11] sm:$0xff]
      %v3483 = vld [vmem:[%s3179 + $0x21] sm:$0xff]
      %v3484 = vld [vmem:[%s3179 + $0x31] sm:$0xff]
      %v3485 = vld [vmem:[%s3179 + $0x41] sm:$0xff]
      %v3486 = vld [vmem:[%s3179 + $0x51] sm:$0xff]
      %v3487 = vld [vmem:[%s3179 + $0x61] sm:$0xff]
      %v3488 = vld [vmem:[%s3179 + $0x71] sm:$0xff]
      %s3489 = scalar_lea.vmem %s1, 88
      %v3490 = vld [vmem:[%s3489] sm:$0xf]
      %v3492 = vsel %vm207, %v3481, 0
      %v3495 = vsel %vm207, %v3482, 0
      %v3498 = vsel %vm207, %v3483, 0
      %v3501 = vsel %vm207, %v3484, 0
      %v3504 = vsel %vm207, %v3485, 0
      %v3507 = vsel %vm207, %v3486, 0
      %v3510 = vsel %vm207, %v3487, 0
      %v3513 = vsel %vm207, %v3488, 0
      %v3516 = vsel %vm232, %v3490, 0
      %3518 = vmatprep.subr.mxu0 0.0
      %3519 = vmatpush1.msra.mxu0 0.0
      %3520 = vmatprep.subr.mxu0 0.0
      %3521 = vmatpush1.msra.mxu0 0.0
      %3522 = vmatprep.subr.mxu0 0.0
      %3523 = vmatpush1.msra.mxu0 0.0
      %3524 = vmatprep.subr.mxu0 0.0
      %3525 = vmatpush1.msra.mxu0 0.0
      %3526 = vmatprep.subr.mxu0 0.0
      %3527 = vmatpush1.msra.mxu0 0.0
      %3528 = vmatprep.subr.mxu0 0.0
      %3529 = vmatpush1.msra.mxu0 0.0
      %3530 = vmatprep.subr.mxu0 0.0
      %3531 = vmatpush1.msra.mxu0 0.0
      %3532 = vmatprep.subr.mxu0 0.0
      %3533 = vmatpush1.msra.mxu0 0.0
      %3534 = vmatprep.subr.mxu0 0.0
      %3535 = vmatpush1.msra.mxu0 0.0
      %3536 = vmatprep.subr.mxu0 0.0
      %3537 = vmatpush1.msra.mxu0 0.0
      %3538 = vmatprep.subr.mxu0 0.0
      %3539 = vmatpush1.msra.mxu0 0.0
      %3540 = vmatprep.subr.mxu0 0.0
      %3541 = vmatpush1.msra.mxu0 0.0
      %3542 = vmatprep.subr.mxu0 0.0
      %3543 = vmatpush1.msra.mxu0 0.0
      %3544 = vmatprep.subr.mxu0 0.0
      %3545 = vmatpush1.msra.mxu0 0.0
      %3546 = vmatprep.subr.mxu0 0.0
      %3547 = vmatpush1.msra.mxu0 0.0
      %3548 = vmatprep.subr.mxu0 0.0
      %3549 = vmatpush1.msra.mxu0 %v3516
      %3550 = vmatprep.subr.mxu0 0.0
      %3551 = vmatpush2.msra.mxu0 0.0
      %3552 = vmatprep.subr.mxu0 0.0
      %3553 = vmatpush2.msra.mxu0 0.0
      %3554 = vmatprep.subr.mxu0 0.0
      %3555 = vmatpush2.msra.mxu0 0.0
      %3556 = vmatprep.subr.mxu0 0.0
      %3557 = vmatpush2.msra.mxu0 0.0
      %3558 = vmatprep.subr.mxu0 0.0
      %3559 = vmatpush2.msra.mxu0 0.0
      %3560 = vmatprep.subr.mxu0 0.0
      %3561 = vmatpush2.msra.mxu0 0.0
      %3562 = vmatprep.subr.mxu0 0.0
      %3563 = vmatpush2.msra.mxu0 0.0
      %3564 = vmatprep.subr.mxu0 0.0
      %3565 = vmatpush2.msra.mxu0 0.0
      %3566 = vmatprep.subr.mxu0 0.0
      %3567 = vmatpush2.msra.mxu0 0.0
      %3568 = vmatprep.subr.mxu0 0.0
      %3569 = vmatpush2.msra.mxu0 0.0
      %3570 = vmatprep.subr.mxu0 0.0
      %3571 = vmatpush2.msra.mxu0 0.0
      %3572 = vmatprep.subr.mxu0 0.0
      %3573 = vmatpush2.msra.mxu0 0.0
      %3574 = vmatprep.subr.mxu0 0.0
      %3575 = vmatpush2.msra.mxu0 0.0
      %3576 = vmatprep.subr.mxu0 0.0
      %3577 = vmatpush2.msra.mxu0 0.0
      %3578 = vmatprep.subr.mxu0 0.0
      %3579 = vmatpush2.msra.mxu0 0.0
      %3580 = vmatprep.subr.mxu0 0.0
      %3581 = vmatpush2.msra.mxu0 0.0
      %3582 = vmatprep.mubr.f32.mxu0 0.0
      %3583 = vmatmul.mubr.f32.gmra.mxu0 %v3492
      %v3584 = vpop.f32.mrf.mxu0
      %v3585 = vadd.f32 0.0, %v3584
      %v3586 = vpop.f32.mrf.mxu0
      %3587 = vmatprep.mubr.f32.mxu0 0.0
      %3588 = vmatmul.mubr.f32.gmra.mxu0 %v3495
      %v3589 = vpop.f32.mrf.mxu0
      %v3590 = vadd.f32 0.0, %v3589
      %v3591 = vpop.f32.mrf.mxu0
      %3592 = vmatprep.mubr.f32.mxu0 0.0
      %3593 = vmatmul.mubr.f32.gmra.mxu0 %v3498
      %v3594 = vpop.f32.mrf.mxu0
      %v3595 = vadd.f32 0.0, %v3594
      %v3596 = vpop.f32.mrf.mxu0
      %3597 = vmatprep.mubr.f32.mxu0 0.0
      %3598 = vmatmul.mubr.f32.gmra.mxu0 %v3501
      %v3599 = vpop.f32.mrf.mxu0
      %v3600 = vadd.f32 0.0, %v3599
      %v3601 = vpop.f32.mrf.mxu0
      %3602 = vmatprep.mubr.f32.mxu0 0.0
      %3603 = vmatmul.mubr.f32.gmra.mxu0 %v3504
      %v3604 = vpop.f32.mrf.mxu0
      %v3605 = vadd.f32 0.0, %v3604
      %v3606 = vpop.f32.mrf.mxu0
      %3607 = vmatprep.mubr.f32.mxu0 0.0
      %3608 = vmatmul.mubr.f32.gmra.mxu0 %v3507
      %v3609 = vpop.f32.mrf.mxu0
      %v3610 = vadd.f32 0.0, %v3609
      %v3611 = vpop.f32.mrf.mxu0
      %3612 = vmatprep.mubr.f32.mxu0 0.0
      %3613 = vmatmul.mubr.f32.gmra.mxu0 %v3510
      %v3614 = vpop.f32.mrf.mxu0
      %v3615 = vadd.f32 0.0, %v3614
      %v3616 = vpop.f32.mrf.mxu0
      %3617 = vmatprep.mubr.f32.mxu0 0.0
      %3618 = vmatmul.mubr.f32.gmra.mxu0 %v3513
      %v3619 = vpop.f32.mrf.mxu0
      %v3620 = vadd.f32 0.0, %v3619
      %v3621 = vpop.f32.mrf.mxu0
      %3622 = vdwg.mxu0
      %v3623 = vadd.f32 %v3473, %v3585
      %v3624 = vadd.f32 %v3474, %v3590
      %v3625 = vadd.f32 %v3475, %v3595
      %v3626 = vadd.f32 %v3476, %v3600
      %v3627 = vadd.f32 %v3477, %v3605
      %v3628 = vadd.f32 %v3478, %v3610
      %v3629 = vadd.f32 %v3479, %v3615
      %v3630 = vadd.f32 %v3480, %v3620
      %v3631 = vld [vmem:[%s3330 + $0x1] sm:$0xff]
      %v3632 = vld [vmem:[%s3330 + $0x11] sm:$0xff]
      %v3633 = vld [vmem:[%s3330 + $0x21] sm:$0xff]
      %v3634 = vld [vmem:[%s3330 + $0x31] sm:$0xff]
      %v3635 = vld [vmem:[%s3330 + $0x41] sm:$0xff]
      %v3636 = vld [vmem:[%s3330 + $0x51] sm:$0xff]
      %v3637 = vld [vmem:[%s3330 + $0x61] sm:$0xff]
      %v3638 = vld [vmem:[%s3330 + $0x71] sm:$0xff]
      %s3639 = scalar_lea.vmem %s1, 92
      %v3640 = vld [vmem:[%s3639] sm:$0xf]
      %v3642 = vsel %vm207, %v3631, 0
      %v3645 = vsel %vm207, %v3632, 0
      %v3648 = vsel %vm207, %v3633, 0
      %v3651 = vsel %vm207, %v3634, 0
      %v3654 = vsel %vm207, %v3635, 0
      %v3657 = vsel %vm207, %v3636, 0
      %v3660 = vsel %vm207, %v3637, 0
      %v3663 = vsel %vm207, %v3638, 0
      %v3666 = vsel %vm232, %v3640, 0
      %3668 = vmatprep.subr.mxu0 0.0
      %3669 = vmatpush1.msra.mxu0 0.0
      %3670 = vmatprep.subr.mxu0 0.0
      %3671 = vmatpush1.msra.mxu0 0.0
      %3672 = vmatprep.subr.mxu0 0.0
      %3673 = vmatpush1.msra.mxu0 0.0
      %3674 = vmatprep.subr.mxu0 0.0
      %3675 = vmatpush1.msra.mxu0 0.0
      %3676 = vmatprep.subr.mxu0 0.0
      %3677 = vmatpush1.msra.mxu0 0.0
      %3678 = vmatprep.subr.mxu0 0.0
      %3679 = vmatpush1.msra.mxu0 0.0
      %3680 = vmatprep.subr.mxu0 0.0
      %3681 = vmatpush1.msra.mxu0 0.0
      %3682 = vmatprep.subr.mxu0 0.0
      %3683 = vmatpush1.msra.mxu0 0.0
      %3684 = vmatprep.subr.mxu0 0.0
      %3685 = vmatpush1.msra.mxu0 0.0
      %3686 = vmatprep.subr.mxu0 0.0
      %3687 = vmatpush1.msra.mxu0 0.0
      %3688 = vmatprep.subr.mxu0 0.0
      %3689 = vmatpush1.msra.mxu0 0.0
      %3690 = vmatprep.subr.mxu0 0.0
      %3691 = vmatpush1.msra.mxu0 0.0
      %3692 = vmatprep.subr.mxu0 0.0
      %3693 = vmatpush1.msra.mxu0 0.0
      %3694 = vmatprep.subr.mxu0 0.0
      %3695 = vmatpush1.msra.mxu0 0.0
      %3696 = vmatprep.subr.mxu0 0.0
      %3697 = vmatpush1.msra.mxu0 0.0
      %3698 = vmatprep.subr.mxu0 0.0
      %3699 = vmatpush1.msra.mxu0 %v3666
      %3700 = vmatprep.subr.mxu0 0.0
      %3701 = vmatpush2.msra.mxu0 0.0
      %3702 = vmatprep.subr.mxu0 0.0
      %3703 = vmatpush2.msra.mxu0 0.0
      %3704 = vmatprep.subr.mxu0 0.0
      %3705 = vmatpush2.msra.mxu0 0.0
      %3706 = vmatprep.subr.mxu0 0.0
      %3707 = vmatpush2.msra.mxu0 0.0
      %3708 = vmatprep.subr.mxu0 0.0
      %3709 = vmatpush2.msra.mxu0 0.0
      %3710 = vmatprep.subr.mxu0 0.0
      %3711 = vmatpush2.msra.mxu0 0.0
      %3712 = vmatprep.subr.mxu0 0.0
      %3713 = vmatpush2.msra.mxu0 0.0
      %3714 = vmatprep.subr.mxu0 0.0
      %3715 = vmatpush2.msra.mxu0 0.0
      %3716 = vmatprep.subr.mxu0 0.0
      %3717 = vmatpush2.msra.mxu0 0.0
      %3718 = vmatprep.subr.mxu0 0.0
      %3719 = vmatpush2.msra.mxu0 0.0
      %3720 = vmatprep.subr.mxu0 0.0
      %3721 = vmatpush2.msra.mxu0 0.0
      %3722 = vmatprep.subr.mxu0 0.0
      %3723 = vmatpush2.msra.mxu0 0.0
      %3724 = vmatprep.subr.mxu0 0.0
      %3725 = vmatpush2.msra.mxu0 0.0
      %3726 = vmatprep.subr.mxu0 0.0
      %3727 = vmatpush2.msra.mxu0 0.0
      %3728 = vmatprep.subr.mxu0 0.0
      %3729 = vmatpush2.msra.mxu0 0.0
      %3730 = vmatprep.subr.mxu0 0.0
      %3731 = vmatpush2.msra.mxu0 0.0
      %3732 = vmatprep.mubr.f32.mxu0 0.0
      %3733 = vmatmul.mubr.f32.gmra.mxu0 %v3642
      %v3734 = vpop.f32.mrf.mxu0
      %v3735 = vadd.f32 0.0, %v3734
      %v3736 = vpop.f32.mrf.mxu0
      %3737 = vmatprep.mubr.f32.mxu0 0.0
      %3738 = vmatmul.mubr.f32.gmra.mxu0 %v3645
      %v3739 = vpop.f32.mrf.mxu0
      %v3740 = vadd.f32 0.0, %v3739
      %v3741 = vpop.f32.mrf.mxu0
      %3742 = vmatprep.mubr.f32.mxu0 0.0
      %3743 = vmatmul.mubr.f32.gmra.mxu0 %v3648
      %v3744 = vpop.f32.mrf.mxu0
      %v3745 = vadd.f32 0.0, %v3744
      %v3746 = vpop.f32.mrf.mxu0
      %3747 = vmatprep.mubr.f32.mxu0 0.0
      %3748 = vmatmul.mubr.f32.gmra.mxu0 %v3651
      %v3749 = vpop.f32.mrf.mxu0
      %v3750 = vadd.f32 0.0, %v3749
      %v3751 = vpop.f32.mrf.mxu0
      %3752 = vmatprep.mubr.f32.mxu0 0.0
      %3753 = vmatmul.mubr.f32.gmra.mxu0 %v3654
      %v3754 = vpop.f32.mrf.mxu0
      %v3755 = vadd.f32 0.0, %v3754
      %v3756 = vpop.f32.mrf.mxu0
      %3757 = vmatprep.mubr.f32.mxu0 0.0
      %3758 = vmatmul.mubr.f32.gmra.mxu0 %v3657
      %v3759 = vpop.f32.mrf.mxu0
      %v3760 = vadd.f32 0.0, %v3759
      %v3761 = vpop.f32.mrf.mxu0
      %3762 = vmatprep.mubr.f32.mxu0 0.0
      %3763 = vmatmul.mubr.f32.gmra.mxu0 %v3660
      %v3764 = vpop.f32.mrf.mxu0
      %v3765 = vadd.f32 0.0, %v3764
      %v3766 = vpop.f32.mrf.mxu0
      %3767 = vmatprep.mubr.f32.mxu0 0.0
      %3768 = vmatmul.mubr.f32.gmra.mxu0 %v3663
      %v3769 = vpop.f32.mrf.mxu0
      %v3770 = vadd.f32 0.0, %v3769
      %v3771 = vpop.f32.mrf.mxu0
      %3772 = vdwg.mxu0
      %v3773 = vadd.f32 %v3623, %v3735
      %v3774 = vadd.f32 %v3624, %v3740
      %v3775 = vadd.f32 %v3625, %v3745
      %v3776 = vadd.f32 %v3626, %v3750
      %v3777 = vadd.f32 %v3627, %v3755
      %v3778 = vadd.f32 %v3628, %v3760
      %v3779 = vadd.f32 %v3629, %v3765
      %v3780 = vadd.f32 %v3630, %v3770
      %v3781 = vld [vmem:[%s3179 + $0x2] sm:$0xff]
      %v3782 = vld [vmem:[%s3179 + $0x12] sm:$0xff]
      %v3783 = vld [vmem:[%s3179 + $0x22] sm:$0xff]
      %v3784 = vld [vmem:[%s3179 + $0x32] sm:$0xff]
      %v3785 = vld [vmem:[%s3179 + $0x42] sm:$0xff]
      %v3786 = vld [vmem:[%s3179 + $0x52] sm:$0xff]
      %v3787 = vld [vmem:[%s3179 + $0x62] sm:$0xff]
      %v3788 = vld [vmem:[%s3179 + $0x72] sm:$0xff]
      %s3789 = scalar_lea.vmem %s1, 96
      %v3790 = vld [vmem:[%s3789] sm:$0xf]
      %v3792 = vsel %vm207, %v3781, 0
      %v3795 = vsel %vm207, %v3782, 0
      %v3798 = vsel %vm207, %v3783, 0
      %v3801 = vsel %vm207, %v3784, 0
      %v3804 = vsel %vm207, %v3785, 0
      %v3807 = vsel %vm207, %v3786, 0
      %v3810 = vsel %vm207, %v3787, 0
      %v3813 = vsel %vm207, %v3788, 0
      %v3816 = vsel %vm232, %v3790, 0
      %3818 = vmatprep.subr.mxu0 0.0
      %3819 = vmatpush1.msra.mxu0 0.0
      %3820 = vmatprep.subr.mxu0 0.0
      %3821 = vmatpush1.msra.mxu0 0.0
      %3822 = vmatprep.subr.mxu0 0.0
      %3823 = vmatpush1.msra.mxu0 0.0
      %3824 = vmatprep.subr.mxu0 0.0
      %3825 = vmatpush1.msra.mxu0 0.0
      %3826 = vmatprep.subr.mxu0 0.0
      %3827 = vmatpush1.msra.mxu0 0.0
      %3828 = vmatprep.subr.mxu0 0.0
      %3829 = vmatpush1.msra.mxu0 0.0
      %3830 = vmatprep.subr.mxu0 0.0
      %3831 = vmatpush1.msra.mxu0 0.0
      %3832 = vmatprep.subr.mxu0 0.0
      %3833 = vmatpush1.msra.mxu0 0.0
      %3834 = vmatprep.subr.mxu0 0.0
      %3835 = vmatpush1.msra.mxu0 0.0
      %3836 = vmatprep.subr.mxu0 0.0
      %3837 = vmatpush1.msra.mxu0 0.0
      %3838 = vmatprep.subr.mxu0 0.0
      %3839 = vmatpush1.msra.mxu0 0.0
      %3840 = vmatprep.subr.mxu0 0.0
      %3841 = vmatpush1.msra.mxu0 0.0
      %3842 = vmatprep.subr.mxu0 0.0
      %3843 = vmatpush1.msra.mxu0 0.0
      %3844 = vmatprep.subr.mxu0 0.0
      %3845 = vmatpush1.msra.mxu0 0.0
      %3846 = vmatprep.subr.mxu0 0.0
      %3847 = vmatpush1.msra.mxu0 0.0
      %3848 = vmatprep.subr.mxu0 0.0
      %3849 = vmatpush1.msra.mxu0 %v3816
      %3850 = vmatprep.subr.mxu0 0.0
      %3851 = vmatpush2.msra.mxu0 0.0
      %3852 = vmatprep.subr.mxu0 0.0
      %3853 = vmatpush2.msra.mxu0 0.0
      %3854 = vmatprep.subr.mxu0 0.0
      %3855 = vmatpush2.msra.mxu0 0.0
      %3856 = vmatprep.subr.mxu0 0.0
      %3857 = vmatpush2.msra.mxu0 0.0
      %3858 = vmatprep.subr.mxu0 0.0
      %3859 = vmatpush2.msra.mxu0 0.0
      %3860 = vmatprep.subr.mxu0 0.0
      %3861 = vmatpush2.msra.mxu0 0.0
      %3862 = vmatprep.subr.mxu0 0.0
      %3863 = vmatpush2.msra.mxu0 0.0
      %3864 = vmatprep.subr.mxu0 0.0
      %3865 = vmatpush2.msra.mxu0 0.0
      %3866 = vmatprep.subr.mxu0 0.0
      %3867 = vmatpush2.msra.mxu0 0.0
      %3868 = vmatprep.subr.mxu0 0.0
      %3869 = vmatpush2.msra.mxu0 0.0
      %3870 = vmatprep.subr.mxu0 0.0
      %3871 = vmatpush2.msra.mxu0 0.0
      %3872 = vmatprep.subr.mxu0 0.0
      %3873 = vmatpush2.msra.mxu0 0.0
      %3874 = vmatprep.subr.mxu0 0.0
      %3875 = vmatpush2.msra.mxu0 0.0
      %3876 = vmatprep.subr.mxu0 0.0
      %3877 = vmatpush2.msra.mxu0 0.0
      %3878 = vmatprep.subr.mxu0 0.0
      %3879 = vmatpush2.msra.mxu0 0.0
      %3880 = vmatprep.subr.mxu0 0.0
      %3881 = vmatpush2.msra.mxu0 0.0
      %3882 = vmatprep.mubr.f32.mxu0 0.0
      %3883 = vmatmul.mubr.f32.gmra.mxu0 %v3792
      %v3884 = vpop.f32.mrf.mxu0
      %v3885 = vadd.f32 0.0, %v3884
      %v3886 = vpop.f32.mrf.mxu0
      %3887 = vmatprep.mubr.f32.mxu0 0.0
      %3888 = vmatmul.mubr.f32.gmra.mxu0 %v3795
      %v3889 = vpop.f32.mrf.mxu0
      %v3890 = vadd.f32 0.0, %v3889
      %v3891 = vpop.f32.mrf.mxu0
      %3892 = vmatprep.mubr.f32.mxu0 0.0
      %3893 = vmatmul.mubr.f32.gmra.mxu0 %v3798
      %v3894 = vpop.f32.mrf.mxu0
      %v3895 = vadd.f32 0.0, %v3894
      %v3896 = vpop.f32.mrf.mxu0
      %3897 = vmatprep.mubr.f32.mxu0 0.0
      %3898 = vmatmul.mubr.f32.gmra.mxu0 %v3801
      %v3899 = vpop.f32.mrf.mxu0
      %v3900 = vadd.f32 0.0, %v3899
      %v3901 = vpop.f32.mrf.mxu0
      %3902 = vmatprep.mubr.f32.mxu0 0.0
      %3903 = vmatmul.mubr.f32.gmra.mxu0 %v3804
      %v3904 = vpop.f32.mrf.mxu0
      %v3905 = vadd.f32 0.0, %v3904
      %v3906 = vpop.f32.mrf.mxu0
      %3907 = vmatprep.mubr.f32.mxu0 0.0
      %3908 = vmatmul.mubr.f32.gmra.mxu0 %v3807
      %v3909 = vpop.f32.mrf.mxu0
      %v3910 = vadd.f32 0.0, %v3909
      %v3911 = vpop.f32.mrf.mxu0
      %3912 = vmatprep.mubr.f32.mxu0 0.0
      %3913 = vmatmul.mubr.f32.gmra.mxu0 %v3810
      %v3914 = vpop.f32.mrf.mxu0
      %v3915 = vadd.f32 0.0, %v3914
      %v3916 = vpop.f32.mrf.mxu0
      %3917 = vmatprep.mubr.f32.mxu0 0.0
      %3918 = vmatmul.mubr.f32.gmra.mxu0 %v3813
      %v3919 = vpop.f32.mrf.mxu0
      %v3920 = vadd.f32 0.0, %v3919
      %v3921 = vpop.f32.mrf.mxu0
      %3922 = vdwg.mxu0
      %v3923 = vadd.f32 %v3773, %v3885
      %v3924 = vadd.f32 %v3774, %v3890
      %v3925 = vadd.f32 %v3775, %v3895
      %v3926 = vadd.f32 %v3776, %v3900
      %v3927 = vadd.f32 %v3777, %v3905
      %v3928 = vadd.f32 %v3778, %v3910
      %v3929 = vadd.f32 %v3779, %v3915
      %v3930 = vadd.f32 %v3780, %v3920
      %3931 = vst [vmem:[%s182] sm:$0xff] %v3923
      %3932 = vst [vmem:[%s182 + $0x8] sm:$0xff] %v3924
      %3933 = vst [vmem:[%s182 + $0x10] sm:$0xff] %v3925
      %3934 = vst [vmem:[%s182 + $0x18] sm:$0xff] %v3926
      %3935 = vst [vmem:[%s182 + $0x20] sm:$0xff] %v3927
      %3936 = vst [vmem:[%s182 + $0x28] sm:$0xff] %v3928
      %3937 = vst [vmem:[%s182 + $0x30] sm:$0xff] %v3929
      %3938 = vst [vmem:[%s182 + $0x38] sm:$0xff] %v3930
      %v3939 = vadd.f32 %v3923, %v3924
      %v3940 = vadd.f32 %v3939, %v3925
      %v3941 = vadd.f32 %v3940, %v3926
      %v3942 = vadd.f32 %v3941, %v3927
      %v3943 = vadd.f32 %v3942, %v3928
      %v3944 = vadd.f32 %v3943, %v3929
      %v3945 = vadd.f32 %v3944, %v3930
      %v3946 = vrot.slane %v3945, 4
      %v3947 = vadd.f32 %v3945, %v3946
      %v3948 = vrot.slane %v3947, 2
      %v3949 = vadd.f32 %v3947, %v3948
      %v3950 = vrot.slane %v3949, 1
      %v3951 = vadd.f32 %v3949, %v3950
      %3952 = vst [vmem:[%s186] sm:$0x1] %v3951
      %v3953 = vmul.f32 %v3923, %v3923
      %v3954 = vmul.f32 %v3924, %v3924
      %v3955 = vmul.f32 %v3925, %v3925
      %v3956 = vmul.f32 %v3926, %v3926
      %v3957 = vmul.f32 %v3927, %v3927
      %v3958 = vmul.f32 %v3928, %v3928
      %v3959 = vmul.f32 %v3929, %v3929
      %v3960 = vmul.f32 %v3930, %v3930
      %v3961 = vadd.f32 %v3953, %v3954
      %v3962 = vadd.f32 %v3961, %v3955
      %v3963 = vadd.f32 %v3962, %v3956
      %v3964 = vadd.f32 %v3963, %v3957
      %v3965 = vadd.f32 %v3964, %v3958
      %v3966 = vadd.f32 %v3965, %v3959
      %v3967 = vadd.f32 %v3966, %v3960
      %v3968 = vrot.slane %v3967, 4
      %v3969 = vadd.f32 %v3967, %v3968
      %v3970 = vrot.slane %v3969, 2
      %v3971 = vadd.f32 %v3969, %v3970
      %v3972 = vrot.slane %v3971, 1
      %v3973 = vadd.f32 %v3971, %v3972
      %3974 = vst [vmem:[%s186 + $0x1] sm:$0x1] %v3973
      %p3975 = scmp.lt.s32.totalorder %s15, 1
      %s3976 = scalar_select %p3975, %s15, 1
      %s3977 = smul.addr %s3976, 8
      %s3978 = smul.addr %s3977, 8
      %s3979 = scalar_lea.vmem %s2, %s3978
      %p3980 = scmp.lt.s32.totalorder %s15, 1
      %s3981 = scalar_select %p3980, %s15, 1
      %s3982 = smul.addr %s3981, 2
      %s3983 = scalar_lea.vmem %s3, %s3982
      // Predicated region
      $region29: #{conv2d_block.2} parent=27 // pred_check
        %p3984 = pneg %p80
      $region30: #{conv2d_block.2} parent=27 // pred_check_branch
        %3986 = sbr.rel (%p3984) target = $region32
      $region31: #{conv2d_block.2} parent=27 // pred_region
        _
      $region32: #{conv2d_block.2} parent=27 // pred_fallthru
        _
      // Predicated region
      $region33: #{conv2d_block.2} parent=27 // pred_check
        %p3987 = pneg %p106
      $region34: #{conv2d_block.2} parent=27 // pred_check_branch
        %3989 = sbr.rel (%p3987) target = $region36
      $region35: #{conv2d_block.2} parent=27 // pred_region
        _
      $region36: #{conv2d_block.2} parent=27 // pred_fallthru
        _
    $region28: #{conv2d_block.2} parent=5 // pred_fallthru
      _
    %p3990 = scmp.le.s32.totalorder 2, %s10
    // Predicated region
    $region37: #{conv2d_block.2} parent=5 // pred_check
      %p3991 = pneg %p3990
    $region38: #{conv2d_block.2} parent=5 // pred_check_branch
      %3993 = sbr.rel (%p3991) target = $region40
    $region39: #{conv2d_block.2} parent=5 // pred_region
      %s3994 = ssub.s32 %s10, 2
      // Predicated region
      $region41: #{conv2d_block.2} parent=39 // pred_check
        %p3995 = pneg %p86
      $region42: #{conv2d_block.2} parent=39 // pred_check_branch
        %3997 = sbr.rel (%p3995) target = $region44
      $region43: #{conv2d_block.2} parent=39 // pred_region
        %p3998 = scmp.lt.s32.totalorder %s16, 1
        %s3999 = scalar_select %p3998, %s16, 1
        %s4000 = smul.addr %s3999, 8
        %s4001 = smul.addr %s4000, 8
        %s4002 = scalar_lea.vmem %s2, %s4001
      $region44: #{conv2d_block.2} parent=39 // pred_fallthru
        _
      // Predicated region
      $region45: #{conv2d_block.2} parent=39 // pred_check
        %p4003 = pneg %p112
      $region46: #{conv2d_block.2} parent=39 // pred_check_branch
        %4005 = sbr.rel (%p4003) target = $region48
      $region47: #{conv2d_block.2} parent=39 // pred_region
        %p4006 = scmp.lt.s32.totalorder %s16, 1
        %s4007 = scalar_select %p4006, %s16, 1
        %s4008 = smul.addr %s4007, 2
        %s4009 = scalar_lea.vmem %s3, %s4008
      $region48: #{conv2d_block.2} parent=39 // pred_fallthru
        _
    $region40: #{conv2d_block.2} parent=5 // pred_fallthru
      _
  $region6: #{conv2d_block.2} parent=0 // loop_footer
    %s14 = sadd.s32 1, %s10
  $region7: #{conv2d_block.2} parent=0 // loop_footer_branch
    %9 = sbr.rel target = $region3
  $region8: #{conv2d_block.2} parent=0 // loop_exit
    _

</llo_original>
